<compile_context>
chip_gen: v7x
topology: tpu7x:2x2x1
jax: 0.10.0
libtpu: 0.0.40
codegen_flags: <defaults>
</compile_context>

<pallas_src>
import math
import functools

import jax
import jax.numpy as jnp
from jax.experimental import pallas as pl
from jax.experimental.pallas import tpu as pltpu

# ---- model hyper-parameters (small, consistent with the module) ----
D_MODEL = 32
NHEAD = 4
HEAD_DIM = D_MODEL // NHEAD
DIM_FF = 64
NUM_LAYERS = 2
SEQ = 8
BATCH = 2
EPS = 1e-5

# ---- packed-slab geometry ----
W64_WIDTH = max(2 * D_MODEL, DIM_FF)            # 64
W64_ROWS_PER_LAYER = 2 * D_MODEL                # wqk (E rows) + w1 (E rows)
W32_ROWS_PER_LAYER = 2 * D_MODEL + DIM_FF       # wv, wo (E rows each) + w2 (FF rows)
VEC_WIDTH = max(2 * D_MODEL, DIM_FF)            # 64
VEC_ROWS_PER_LAYER = 16                         # 9 used rows, padded to 16 (sublane aligned)


def _layer_norm(x, gamma, beta):
    mu = jnp.mean(x, axis=-1, keepdims=True)
    var = jnp.mean((x - mu) ** 2, axis=-1, keepdims=True)
    return (x - mu) * jax.lax.rsqrt(var + EPS) * gamma + beta


def _batch_mask_bias(tokens, batch):
    """Additive (tokens, tokens) bias: 0 where two tokens belong to the same
    batch element, -1e30 otherwise.  Token r of the row-major flatten of a
    (S, B, E) array has batch index r % B, so no transposes are needed."""
    row = jax.lax.broadcasted_iota(jnp.int32, (tokens, tokens), 0)
    col = jax.lax.broadcasted_iota(jnp.int32, (tokens, tokens), 1)
    if (batch & (batch - 1)) == 0:                  # power of two: exact bitwise mod
        same = (row & (batch - 1)) == (col & (batch - 1))
    else:                                           # float mod (exact for small ints)
        def mod(i):
            f = i.astype(jnp.float32)
            return f - jnp.floor(f * (1.0 / batch)) * batch
        same = mod(row) == mod(col)
    return jnp.where(same, 0.0, -1e30).astype(jnp.float32)


def fused_encoder_kernel(x_ref, pos_ref, w64_ref, w32_ref, vec_ref, out_ref, *,
                         num_layers, batch, d_model, nhead, dim_ff):
    """All encoder layers, all batch elements, one grid-less invocation.

    x_ref/pos_ref: (S*B, E) tokens in natural row-major (s, b) order.
    w64_ref:       (L*2E, W64_WIDTH)  per layer: [Wq*scale | Wk] then W1
    w32_ref:       (L*(2E+FF), E)     per layer: Wv, Wo, W2
    vec_ref:       (L*16, VEC_WIDTH)  per layer: bqk, b1, bv, bo, b2, g1, be1, g2, be2
    """
    head_dim = d_model // nhead
    tokens = x_ref.shape[0]
    a_stride = 2 * d_model
    b_stride = 2 * d_model + dim_ff

    x = x_ref[...]                     # (S*B, E)
    pos = pos_ref[...]

    # Block-diagonal softmax bias keeps batch elements independent even though
    # all tokens share one score matrix (built once, reused for every head/layer).
    bias = _batch_mask_bias(tokens, batch) if batch > 1 else None

    for l in range(num_layers):        # static unroll: all layers fused
        a0 = l * a_stride
        b0 = l * b_stride
        c0 = l * VEC_ROWS_PER_LAYER
        wo_base = b0 + d_model         # rows of Wo inside the 32-wide slab

        # ---- biases / LN params: small static ref slices ----
        bqk = vec_ref[c0 + 0:c0 + 1, :2 * d_model]   # (1, 2E), bq pre-scaled
        b1 = vec_ref[c0 + 1:c0 + 2, :dim_ff]
        bv = vec_ref[c0 + 2:c0 + 3, :d_model]
        bo = vec_ref[c0 + 3:c0 + 4, :d_model]
        b2 = vec_ref[c0 + 4:c0 + 5, :d_model]
        g1 = vec_ref[c0 + 5:c0 + 6, :d_model]
        be1 = vec_ref[c0 + 6:c0 + 7, :d_model]
        g2 = vec_ref[c0 + 7:c0 + 8, :d_model]
        be2 = vec_ref[c0 + 8:c0 + 9, :d_model]

        # ---- fused Q|K projection (1/sqrt(hd) folded into the Q half) ----
        qk_in = x + pos                               # q = k = with_pos_embed(src, pos)
        wqk = w64_ref[a0:a0 + d_model, :2 * d_model]  # (E, 2E), loaded where used
        qk = jnp.dot(qk_in, wqk, preferred_element_type=jnp.float32) + bqk
        q = qk[:, :d_model]                           # (S*B, E), already scaled
        k = qk[:, d_model:2 * d_model]

        wv = w32_ref[b0:b0 + d_model, :]              # (E, E)
        v = jnp.dot(x, wv, preferred_element_type=jnp.float32) + bv

        kt = k.T                                      # (E, S*B): ONE transpose per layer

        # ---- multi-head self attention (heads statically unrolled) ----
        attn = None
        for h in range(nhead):
            lo = h * head_dim
            hi = lo + head_dim
            s = jnp.dot(q[:, lo:hi], kt[lo:hi, :],    # (S*B, S*B)
                        preferred_element_type=jnp.float32)
            if bias is not None:
                s = s + bias                          # mask cross-batch pairs
            s = s - jnp.max(s, axis=-1, keepdims=True)
            p = jnp.exp(s)
            p = p / jnp.sum(p, axis=-1, keepdims=True)   # exact divide (matches torch)
            ctx = jnp.dot(p, v[:, lo:hi],                # (S*B, head_dim)
                          preferred_element_type=jnp.float32)
            # project with this head's Wo rows (== concat(heads) @ Wo, no lane concat)
            woh = w32_ref[wo_base + lo:wo_base + hi, :]  # (head_dim, E)
            proj = jnp.dot(ctx, woh, preferred_element_type=jnp.float32)
            attn = (proj + bo) if attn is None else (attn + proj)

        # ---- residual + norm1 (dropout == identity in eval mode) ----
        x = _layer_norm(x + attn, g1, be1)

        # ---- feed-forward: relu(x @ W1 + b1) @ W2 + b2 ----
        w1 = w64_ref[a0 + d_model:a0 + 2 * d_model, :dim_ff]          # (E, FF)
        w2 = w32_ref[b0 + 2 * d_model:b0 + 2 * d_model + dim_ff, :]   # (FF, E)
        h1 = jnp.maximum(jnp.dot(x, w1, preferred_element_type=jnp.float32) + b1, 0.0)
        h2 = jnp.dot(h1, w2, preferred_element_type=jnp.float32) + b2

        # ---- residual + norm2 ----
        x = _layer_norm(x + h2, g2, be2)

    out_ref[...] = x.astype(out_ref.dtype)


def pack_layer_params(layer_params):
    """Pack per-layer parameters into 3 dense, aligned slabs.

    Wq|Wk and bq|bk are fused so Q and K come out of one matmul; the attention
    scale 1/sqrt(head_dim) is folded into the Wq / bq halves."""
    scale = 1.0 / math.sqrt(HEAD_DIM)

    def pad_row(v, width):
        v = jnp.reshape(v, (-1,)).astype(jnp.float32)
        return jnp.pad(v, (0, width - v.shape[0]))

    def pad_cols(m, width):
        m = m.astype(jnp.float32)
        return jnp.pad(m, ((0, 0), (0, width - m.shape[1])))

    w64_blocks, w32_blocks, vec_rows = [], [], []
    for p in layer_params:
        wqk = jnp.concatenate([p["wq"] * scale, p["wk"]], axis=1)     # (E, 2E)
        w64_blocks += [pad_cols(wqk, W64_WIDTH), pad_cols(p["w1"], W64_WIDTH)]
        w32_blocks += [p["wv"], p["wo"], p["w2"]]
        rows = [
            pad_row(jnp.concatenate([p["bq"] * scale, p["bk"]]), VEC_WIDTH),
            pad_row(p["b1"], VEC_WIDTH),
            pad_row(p["bv"], VEC_WIDTH), pad_row(p["bo"], VEC_WIDTH),
            pad_row(p["b2"], VEC_WIDTH), pad_row(p["g1"], VEC_WIDTH),
            pad_row(p["be1"], VEC_WIDTH), pad_row(p["g2"], VEC_WIDTH),
            pad_row(p["be2"], VEC_WIDTH),
        ]
        rows += [jnp.zeros((VEC_WIDTH,), jnp.float32)] * (VEC_ROWS_PER_LAYER - len(rows))
        vec_rows += rows

    w64 = jnp.concatenate(w64_blocks, axis=0).astype(jnp.float32)   # (L*2E, 64)
    w32 = jnp.concatenate(w32_blocks, axis=0).astype(jnp.float32)   # (L*(2E+FF), 32)
    vec = jnp.stack(vec_rows, axis=0)                               # (L*16, 64)
    return w64, w32, vec


def transformer_encoder(src_sbe, pos_sbe, packed,
                        mask=None, src_key_padding_mask=None):
    """PyTorch-convention entry point: src/pos are (S, B, E) sequence-first."""
    # TODO(synk): attn_mask / src_key_padding_mask are not supported (None only).
    assert mask is None and src_key_padding_mask is None
    S, B, E = src_sbe.shape
    w64, w32, vec = packed
    tokens = S * B

    # Row-major flatten only (free bitcast reshape under jit) — no transpose;
    # batch independence is handled in-kernel via the block-diagonal mask.
    x2d = src_sbe.reshape(tokens, E)
    pos2d = pos_sbe.reshape(tokens, E)

    kernel = functools.partial(
        fused_encoder_kernel,
        num_layers=NUM_LAYERS, batch=B, d_model=E, nhead=NHEAD, dim_ff=DIM_FF)

    vmem = pl.BlockSpec(memory_space=pltpu.MemorySpace.VMEM)
    out2d = pl.pallas_call(
        kernel,
        out_shape=jax.ShapeDtypeStruct((tokens, E), jnp.float32),
        in_specs=[vmem] * 5,
        out_specs=vmem,
    )(x2d, pos2d, w64, w32, vec)

    # self.norm is None (DETR post-norm default) -> no final LayerNorm.
    return out2d.reshape(S, B, E)      # free bitcast back to (S, B, E)


def reference_encoder(src, pos, layer_params):
    """Pure-JAX reference with PyTorch TransformerEncoder(Layer) semantics."""
    x = src                                        # (S, B, E)
    S, B, E = x.shape
    scale = 1.0 / math.sqrt(HEAD_DIM)
    for p in layer_params:
        qk_in = x + pos
        q = qk_in @ p["wq"] + p["bq"]
        k = qk_in @ p["wk"] + p["bk"]
        v = x @ p["wv"] + p["bv"]
        qh = q.reshape(S, B, NHEAD, HEAD_DIM)
        kh = k.reshape(S, B, NHEAD, HEAD_DIM)
        vh = v.reshape(S, B, NHEAD, HEAD_DIM)
        s = jnp.einsum('qbhd,kbhd->bhqk', qh, kh) * scale
        pr = jax.nn.softmax(s, axis=-1)
        ctx = jnp.einsum('bhqk,kbhd->qbhd', pr, vh).reshape(S, B, E)
        attn = ctx @ p["wo"] + p["bo"]
        x = _layer_norm(x + attn, p["g1"], p["be1"])
        h1 = jax.nn.relu(x @ p["w1"] + p["b1"])
        x = _layer_norm(x + (h1 @ p["w2"] + p["b2"]), p["g2"], p["be2"])
    return x


def init_layer_params(key):
    ks = jax.random.split(key, 6)
    std = 0.02
    return {
        # attention in/out projections, stored already transposed for x @ W
        "wq": jax.random.normal(ks[0], (D_MODEL, D_MODEL), jnp.float32) * std,
        "bq": jnp.zeros((D_MODEL,), jnp.float32),
        "wk": jax.random.normal(ks[1], (D_MODEL, D_MODEL), jnp.float32) * std,
        "bk": jnp.zeros((D_MODEL,), jnp.float32),
        "wv": jax.random.normal(ks[2], (D_MODEL, D_MODEL), jnp.float32) * std,
        "bv": jnp.zeros((D_MODEL,), jnp.float32),
        "wo": jax.random.normal(ks[3], (D_MODEL, D_MODEL), jnp.float32) * std,
        "bo": jnp.zeros((D_MODEL,), jnp.float32),
        # FFN
        "w1": jax.random.normal(ks[4], (D_MODEL, DIM_FF), jnp.float32) * std,
        "b1": jnp.zeros((DIM_FF,), jnp.float32),
        "w2": jax.random.normal(ks[5], (DIM_FF, D_MODEL), jnp.float32) * std,
        "b2": jnp.zeros((D_MODEL,), jnp.float32),
        # layer norms
        "g1": jnp.ones((D_MODEL,), jnp.float32),
        "be1": jnp.zeros((D_MODEL,), jnp.float32),
        "g2": jnp.ones((D_MODEL,), jnp.float32),
        "be2": jnp.zeros((D_MODEL,), jnp.float32),
    }


if __name__ == "__main__":
    root = jax.random.PRNGKey(0)
    k_src, k_pos, k_par = jax.random.split(root, 3)

    # PyTorch MultiheadAttention convention: (seq, batch, embed)
    src = jax.random.normal(k_src, (SEQ, BATCH, D_MODEL), jnp.float32)
    pos = jax.random.normal(k_pos, (SEQ, BATCH, D_MODEL), jnp.float32)

    layer_keys = jax.random.split(k_par, NUM_LAYERS)
    layer_params = [init_layer_params(k) for k in layer_keys]
    packed = pack_layer_params(layer_params)

    fwd = jax.jit(transformer_encoder)   # reshapes fold to bitcasts around the kernel
    out = jax.block_until_ready(fwd(src, pos, packed))

    assert out.shape == (SEQ, BATCH, D_MODEL)
    assert bool(jnp.all(jnp.isfinite(out)))

    # pure-JAX reference check (loose tolerance: MXU vs XLA f32 matmul rounding)
    ref = reference_encoder(src, pos, layer_params)
    max_diff = float(jnp.max(jnp.abs(out - ref)))
    assert max_diff < 2e-2, f"kernel/reference mismatch: {max_diff}"

    print("KERNEL_OK")
</pallas_src>

<mosaic_0001>
module attributes {stable_mosaic.version = 11 : i64} {
  func.func @fused_encoder_kernel(%arg0: memref<16x32xf32, #tpu.memory_space<vmem>>, %arg1: memref<16x32xf32, #tpu.memory_space<vmem>>, %arg2: memref<128x64xf32, #tpu.memory_space<vmem>>, %arg3: memref<256x32xf32, #tpu.memory_space<vmem>>, %arg4: memref<32x64xf32, #tpu.memory_space<vmem>>, %arg5: memref<16x32xf32, #tpu.memory_space<vmem>>) attributes {dimension_semantics = [], scalar_prefetch = 0 : i64, scratch_operands = 0 : i64, tpu.core_type = #tpu.core_type<tc>} {
    %c0 = arith.constant 0 : index
    %c0_0 = arith.constant 0 : index
    %0 = vector.load %arg0[%c0, %c0_0] : memref<16x32xf32, #tpu.memory_space<vmem>>, vector<16x32xf32>
    %c0_1 = arith.constant 0 : index
    %c0_2 = arith.constant 0 : index
    %1 = vector.load %arg1[%c0_1, %c0_2] : memref<16x32xf32, #tpu.memory_space<vmem>>, vector<16x32xf32>
    %2 = tpu.iota {dimensions = array<i32: 0>} : vector<16x16xi32>
    %3 = tpu.iota {dimensions = array<i32: 1>} : vector<16x16xi32>
    %c1_i32 = arith.constant 1 : i32
    %4 = vector.broadcast %c1_i32 : i32 to vector<16x16xi32>
    %5 = arith.andi %2, %4 : vector<16x16xi32>
    %c1_i32_3 = arith.constant 1 : i32
    %6 = vector.broadcast %c1_i32_3 : i32 to vector<16x16xi32>
    %7 = arith.andi %3, %6 : vector<16x16xi32>
    %8 = arith.cmpi eq, %5, %7 : vector<16x16xi32>
    %cst = arith.constant 0.000000e+00 : f32
    %cst_4 = arith.constant -1.000000e+30 : f32
    %9 = vector.broadcast %cst : f32 to vector<16x16xf32>
    %10 = vector.broadcast %cst_4 : f32 to vector<16x16xf32>
    %11 = arith.select %8, %9, %10 : vector<16x16xi1>, vector<16x16xf32>
    %c0_5 = arith.constant 0 : index
    %c0_6 = arith.constant 0 : index
    %12 = vector.load %arg4[%c0_5, %c0_6] : memref<32x64xf32, #tpu.memory_space<vmem>>, vector<1x64xf32>
    %c1 = arith.constant 1 : index
    %c0_7 = arith.constant 0 : index
    %13 = vector.load %arg4[%c1, %c0_7] : memref<32x64xf32, #tpu.memory_space<vmem>>, vector<1x64xf32>
    %c2 = arith.constant 2 : index
    %c0_8 = arith.constant 0 : index
    %14 = vector.load %arg4[%c2, %c0_8] : memref<32x64xf32, #tpu.memory_space<vmem>>, vector<1x32xf32>
    %c3 = arith.constant 3 : index
    %c0_9 = arith.constant 0 : index
    %15 = vector.load %arg4[%c3, %c0_9] : memref<32x64xf32, #tpu.memory_space<vmem>>, vector<1x32xf32>
    %c4 = arith.constant 4 : index
    %c0_10 = arith.constant 0 : index
    %16 = vector.load %arg4[%c4, %c0_10] : memref<32x64xf32, #tpu.memory_space<vmem>>, vector<1x32xf32>
    %c5 = arith.constant 5 : index
    %c0_11 = arith.constant 0 : index
    %17 = vector.load %arg4[%c5, %c0_11] : memref<32x64xf32, #tpu.memory_space<vmem>>, vector<1x32xf32>
    %c6 = arith.constant 6 : index
    %c0_12 = arith.constant 0 : index
    %18 = vector.load %arg4[%c6, %c0_12] : memref<32x64xf32, #tpu.memory_space<vmem>>, vector<1x32xf32>
    %c7 = arith.constant 7 : index
    %c0_13 = arith.constant 0 : index
    %19 = vector.load %arg4[%c7, %c0_13] : memref<32x64xf32, #tpu.memory_space<vmem>>, vector<1x32xf32>
    %c8 = arith.constant 8 : index
    %c0_14 = arith.constant 0 : index
    %20 = vector.load %arg4[%c8, %c0_14] : memref<32x64xf32, #tpu.memory_space<vmem>>, vector<1x32xf32>
    %21 = arith.addf %0, %1 : vector<16x32xf32>
    %c0_15 = arith.constant 0 : index
    %c0_16 = arith.constant 0 : index
    %22 = vector.load %arg2[%c0_15, %c0_16] : memref<128x64xf32, #tpu.memory_space<vmem>>, vector<32x64xf32>
    %cst_17 = arith.constant dense<0.000000e+00> : vector<16x64xf32>
    %23 = tpu.matmul %21, %22, %cst_17 {dimension_numbers = #tpu.dot_dimension_numbers<[1], [0], [0], [1], [0, 0, 1, 1], [], []>} : vector<16x32xf32>, vector<32x64xf32>, vector<16x64xf32> -> vector<16x64xf32>
    %24 = vector.broadcast %12 : vector<1x64xf32> to vector<16x64xf32>
    %25 = arith.addf %23, %24 : vector<16x64xf32>
    %26 = vector.extract_strided_slice %25 {offsets = [0, 0], sizes = [16, 32], strides = [1, 1]} : vector<16x64xf32> to vector<16x32xf32>
    %27 = vector.extract_strided_slice %25 {offsets = [0, 32], sizes = [16, 32], strides = [1, 1]} : vector<16x64xf32> to vector<16x32xf32>
    %c0_18 = arith.constant 0 : index
    %c0_19 = arith.constant 0 : index
    %28 = vector.load %arg3[%c0_18, %c0_19] : memref<256x32xf32, #tpu.memory_space<vmem>>, vector<32x32xf32>
    %cst_20 = arith.constant dense<0.000000e+00> : vector<16x32xf32>
    %29 = tpu.matmul %0, %28, %cst_20 {dimension_numbers = #tpu.dot_dimension_numbers<[1], [0], [0], [1], [0, 0, 1, 1], [], []>} : vector<16x32xf32>, vector<32x32xf32>, vector<16x32xf32> -> vector<16x32xf32>
    %30 = vector.broadcast %14 : vector<1x32xf32> to vector<16x32xf32>
    %31 = arith.addf %29, %30 : vector<16x32xf32>
    %32 = tpu.transpose %27, [1, 0] : vector<16x32xf32> -> vector<32x16xf32>
    %33 = vector.extract_strided_slice %26 {offsets = [0, 0], sizes = [16, 8], strides = [1, 1]} : vector<16x32xf32> to vector<16x8xf32>
    %34 = vector.extract_strided_slice %32 {offsets = [0, 0], sizes = [8, 16], strides = [1, 1]} : vector<32x16xf32> to vector<8x16xf32>
    %cst_21 = arith.constant dense<0.000000e+00> : vector<16x16xf32>
    %35 = tpu.matmul %33, %34, %cst_21 {dimension_numbers = #tpu.dot_dimension_numbers<[1], [0], [0], [1], [0, 0, 1, 1], [], []>} : vector<16x8xf32>, vector<8x16xf32>, vector<16x16xf32> -> vector<16x16xf32>
    %36 = arith.addf %35, %11 : vector<16x16xf32>
    %cst_22 = arith.constant dense<0xFF800000> : vector<16xf32>
    %37 = vector.multi_reduction <maximumf>, %36, %cst_22 [1] : vector<16x16xf32> to vector<16xf32>
    %38 = vector.shape_cast %37 : vector<16xf32> to vector<16x1xf32>
    %39 = vector.broadcast %38 : vector<16x1xf32> to vector<16x16xf32>
    %40 = arith.subf %36, %39 : vector<16x16xf32>
    %41 = math.exp %40 : vector<16x16xf32>
    %cst_23 = arith.constant dense<0.000000e+00> : vector<16xf32>
    %42 = vector.multi_reduction <add>, %41, %cst_23 [1] : vector<16x16xf32> to vector<16xf32>
    %43 = vector.shape_cast %42 : vector<16xf32> to vector<16x1xf32>
    %44 = vector.broadcast %43 : vector<16x1xf32> to vector<16x16xf32>
    %45 = arith.divf %41, %44 : vector<16x16xf32>
    %46 = vector.extract_strided_slice %31 {offsets = [0, 0], sizes = [16, 8], strides = [1, 1]} : vector<16x32xf32> to vector<16x8xf32>
    %cst_24 = arith.constant dense<0.000000e+00> : vector<16x8xf32>
    %47 = tpu.matmul %45, %46, %cst_24 {dimension_numbers = #tpu.dot_dimension_numbers<[1], [0], [0], [1], [0, 0, 1, 1], [], []>} : vector<16x16xf32>, vector<16x8xf32>, vector<16x8xf32> -> vector<16x8xf32>
    %c32 = arith.constant 32 : index
    %c0_25 = arith.constant 0 : index
    %48 = vector.load %arg3[%c32, %c0_25] : memref<256x32xf32, #tpu.memory_space<vmem>>, vector<8x32xf32>
    %cst_26 = arith.constant dense<0.000000e+00> : vector<16x32xf32>
    %49 = tpu.matmul %47, %48, %cst_26 {dimension_numbers = #tpu.dot_dimension_numbers<[1], [0], [0], [1], [0, 0, 1, 1], [], []>} : vector<16x8xf32>, vector<8x32xf32>, vector<16x32xf32> -> vector<16x32xf32>
    %50 = vector.broadcast %15 : vector<1x32xf32> to vector<16x32xf32>
    %51 = arith.addf %49, %50 : vector<16x32xf32>
    %52 = vector.extract_strided_slice %26 {offsets = [0, 8], sizes = [16, 8], strides = [1, 1]} : vector<16x32xf32> to vector<16x8xf32>
    %53 = vector.extract_strided_slice %32 {offsets = [8, 0], sizes = [8, 16], strides = [1, 1]} : vector<32x16xf32> to vector<8x16xf32>
    %cst_27 = arith.constant dense<0.000000e+00> : vector<16x16xf32>
    %54 = tpu.matmul %52, %53, %cst_27 {dimension_numbers = #tpu.dot_dimension_numbers<[1], [0], [0], [1], [0, 0, 1, 1], [], []>} : vector<16x8xf32>, vector<8x16xf32>, vector<16x16xf32> -> vector<16x16xf32>
    %55 = arith.addf %54, %11 : vector<16x16xf32>
    %cst_28 = arith.constant dense<0xFF800000> : vector<16xf32>
    %56 = vector.multi_reduction <maximumf>, %55, %cst_28 [1] : vector<16x16xf32> to vector<16xf32>
    %57 = vector.shape_cast %56 : vector<16xf32> to vector<16x1xf32>
    %58 = vector.broadcast %57 : vector<16x1xf32> to vector<16x16xf32>
    %59 = arith.subf %55, %58 : vector<16x16xf32>
    %60 = math.exp %59 : vector<16x16xf32>
    %cst_29 = arith.constant dense<0.000000e+00> : vector<16xf32>
    %61 = vector.multi_reduction <add>, %60, %cst_29 [1] : vector<16x16xf32> to vector<16xf32>
    %62 = vector.shape_cast %61 : vector<16xf32> to vector<16x1xf32>
    %63 = vector.broadcast %62 : vector<16x1xf32> to vector<16x16xf32>
    %64 = arith.divf %60, %63 : vector<16x16xf32>
    %65 = vector.extract_strided_slice %31 {offsets = [0, 8], sizes = [16, 8], strides = [1, 1]} : vector<16x32xf32> to vector<16x8xf32>
    %cst_30 = arith.constant dense<0.000000e+00> : vector<16x8xf32>
    %66 = tpu.matmul %64, %65, %cst_30 {dimension_numbers = #tpu.dot_dimension_numbers<[1], [0], [0], [1], [0, 0, 1, 1], [], []>} : vector<16x16xf32>, vector<16x8xf32>, vector<16x8xf32> -> vector<16x8xf32>
    %c40 = arith.constant 40 : index
    %c0_31 = arith.constant 0 : index
    %67 = vector.load %arg3[%c40, %c0_31] : memref<256x32xf32, #tpu.memory_space<vmem>>, vector<8x32xf32>
    %cst_32 = arith.constant dense<0.000000e+00> : vector<16x32xf32>
    %68 = tpu.matmul %66, %67, %cst_32 {dimension_numbers = #tpu.dot_dimension_numbers<[1], [0], [0], [1], [0, 0, 1, 1], [], []>} : vector<16x8xf32>, vector<8x32xf32>, vector<16x32xf32> -> vector<16x32xf32>
    %69 = arith.addf %51, %68 : vector<16x32xf32>
    %70 = vector.extract_strided_slice %26 {offsets = [0, 16], sizes = [16, 8], strides = [1, 1]} : vector<16x32xf32> to vector<16x8xf32>
    %71 = vector.extract_strided_slice %32 {offsets = [16, 0], sizes = [8, 16], strides = [1, 1]} : vector<32x16xf32> to vector<8x16xf32>
    %cst_33 = arith.constant dense<0.000000e+00> : vector<16x16xf32>
    %72 = tpu.matmul %70, %71, %cst_33 {dimension_numbers = #tpu.dot_dimension_numbers<[1], [0], [0], [1], [0, 0, 1, 1], [], []>} : vector<16x8xf32>, vector<8x16xf32>, vector<16x16xf32> -> vector<16x16xf32>
    %73 = arith.addf %72, %11 : vector<16x16xf32>
    %cst_34 = arith.constant dense<0xFF800000> : vector<16xf32>
    %74 = vector.multi_reduction <maximumf>, %73, %cst_34 [1] : vector<16x16xf32> to vector<16xf32>
    %75 = vector.shape_cast %74 : vector<16xf32> to vector<16x1xf32>
    %76 = vector.broadcast %75 : vector<16x1xf32> to vector<16x16xf32>
    %77 = arith.subf %73, %76 : vector<16x16xf32>
    %78 = math.exp %77 : vector<16x16xf32>
    %cst_35 = arith.constant dense<0.000000e+00> : vector<16xf32>
    %79 = vector.multi_reduction <add>, %78, %cst_35 [1] : vector<16x16xf32> to vector<16xf32>
    %80 = vector.shape_cast %79 : vector<16xf32> to vector<16x1xf32>
    %81 = vector.broadcast %80 : vector<16x1xf32> to vector<16x16xf32>
    %82 = arith.divf %78, %81 : vector<16x16xf32>
    %83 = vector.extract_strided_slice %31 {offsets = [0, 16], sizes = [16, 8], strides = [1, 1]} : vector<16x32xf32> to vector<16x8xf32>
    %cst_36 = arith.constant dense<0.000000e+00> : vector<16x8xf32>
    %84 = tpu.matmul %82, %83, %cst_36 {dimension_numbers = #tpu.dot_dimension_numbers<[1], [0], [0], [1], [0, 0, 1, 1], [], []>} : vector<16x16xf32>, vector<16x8xf32>, vector<16x8xf32> -> vector<16x8xf32>
    %c48 = arith.constant 48 : index
    %c0_37 = arith.constant 0 : index
    %85 = vector.load %arg3[%c48, %c0_37] : memref<256x32xf32, #tpu.memory_space<vmem>>, vector<8x32xf32>
    %cst_38 = arith.constant dense<0.000000e+00> : vector<16x32xf32>
    %86 = tpu.matmul %84, %85, %cst_38 {dimension_numbers = #tpu.dot_dimension_numbers<[1], [0], [0], [1], [0, 0, 1, 1], [], []>} : vector<16x8xf32>, vector<8x32xf32>, vector<16x32xf32> -> vector<16x32xf32>
    %87 = arith.addf %69, %86 : vector<16x32xf32>
    %88 = vector.extract_strided_slice %26 {offsets = [0, 24], sizes = [16, 8], strides = [1, 1]} : vector<16x32xf32> to vector<16x8xf32>
    %89 = vector.extract_strided_slice %32 {offsets = [24, 0], sizes = [8, 16], strides = [1, 1]} : vector<32x16xf32> to vector<8x16xf32>
    %cst_39 = arith.constant dense<0.000000e+00> : vector<16x16xf32>
    %90 = tpu.matmul %88, %89, %cst_39 {dimension_numbers = #tpu.dot_dimension_numbers<[1], [0], [0], [1], [0, 0, 1, 1], [], []>} : vector<16x8xf32>, vector<8x16xf32>, vector<16x16xf32> -> vector<16x16xf32>
    %91 = arith.addf %90, %11 : vector<16x16xf32>
    %cst_40 = arith.constant dense<0xFF800000> : vector<16xf32>
    %92 = vector.multi_reduction <maximumf>, %91, %cst_40 [1] : vector<16x16xf32> to vector<16xf32>
    %93 = vector.shape_cast %92 : vector<16xf32> to vector<16x1xf32>
    %94 = vector.broadcast %93 : vector<16x1xf32> to vector<16x16xf32>
    %95 = arith.subf %91, %94 : vector<16x16xf32>
    %96 = math.exp %95 : vector<16x16xf32>
    %cst_41 = arith.constant dense<0.000000e+00> : vector<16xf32>
    %97 = vector.multi_reduction <add>, %96, %cst_41 [1] : vector<16x16xf32> to vector<16xf32>
    %98 = vector.shape_cast %97 : vector<16xf32> to vector<16x1xf32>
    %99 = vector.broadcast %98 : vector<16x1xf32> to vector<16x16xf32>
    %100 = arith.divf %96, %99 : vector<16x16xf32>
    %101 = vector.extract_strided_slice %31 {offsets = [0, 24], sizes = [16, 8], strides = [1, 1]} : vector<16x32xf32> to vector<16x8xf32>
    %cst_42 = arith.constant dense<0.000000e+00> : vector<16x8xf32>
    %102 = tpu.matmul %100, %101, %cst_42 {dimension_numbers = #tpu.dot_dimension_numbers<[1], [0], [0], [1], [0, 0, 1, 1], [], []>} : vector<16x16xf32>, vector<16x8xf32>, vector<16x8xf32> -> vector<16x8xf32>
    %c56 = arith.constant 56 : index
    %c0_43 = arith.constant 0 : index
    %103 = vector.load %arg3[%c56, %c0_43] : memref<256x32xf32, #tpu.memory_space<vmem>>, vector<8x32xf32>
    %cst_44 = arith.constant dense<0.000000e+00> : vector<16x32xf32>
    %104 = tpu.matmul %102, %103, %cst_44 {dimension_numbers = #tpu.dot_dimension_numbers<[1], [0], [0], [1], [0, 0, 1, 1], [], []>} : vector<16x8xf32>, vector<8x32xf32>, vector<16x32xf32> -> vector<16x32xf32>
    %105 = arith.addf %87, %104 : vector<16x32xf32>
    %106 = arith.addf %0, %105 : vector<16x32xf32>
    %cst_45 = arith.constant dense<0.000000e+00> : vector<16xf32>
    %107 = vector.multi_reduction <add>, %106, %cst_45 [1] : vector<16x32xf32> to vector<16xf32>
    %108 = vector.shape_cast %107 : vector<16xf32> to vector<16x1xf32>
    %cst_46 = arith.constant 3.200000e+01 : f32
    %109 = vector.broadcast %cst_46 : f32 to vector<16x1xf32>
    %110 = arith.divf %108, %109 : vector<16x1xf32>
    %111 = vector.broadcast %110 : vector<16x1xf32> to vector<16x32xf32>
    %112 = arith.subf %106, %111 : vector<16x32xf32>
    %113 = arith.mulf %112, %112 : vector<16x32xf32>
    %cst_47 = arith.constant dense<0.000000e+00> : vector<16xf32>
    %114 = vector.multi_reduction <add>, %113, %cst_47 [1] : vector<16x32xf32> to vector<16xf32>
    %115 = vector.shape_cast %114 : vector<16xf32> to vector<16x1xf32>
    %cst_48 = arith.constant 3.200000e+01 : f32
    %116 = vector.broadcast %cst_48 : f32 to vector<16x1xf32>
    %117 = arith.divf %115, %116 : vector<16x1xf32>
    %118 = vector.broadcast %110 : vector<16x1xf32> to vector<16x32xf32>
    %119 = arith.subf %106, %118 : vector<16x32xf32>
    %cst_49 = arith.constant 9.99999974E-6 : f32
    %120 = vector.broadcast %cst_49 : f32 to vector<16x1xf32>
    %121 = arith.addf %117, %120 : vector<16x1xf32>
    %122 = math.rsqrt %121 : vector<16x1xf32>
    %123 = vector.broadcast %122 : vector<16x1xf32> to vector<16x32xf32>
    %124 = arith.mulf %119, %123 : vector<16x32xf32>
    %125 = vector.broadcast %17 : vector<1x32xf32> to vector<16x32xf32>
    %126 = arith.mulf %124, %125 : vector<16x32xf32>
    %127 = vector.broadcast %18 : vector<1x32xf32> to vector<16x32xf32>
    %128 = arith.addf %126, %127 : vector<16x32xf32>
    %c32_50 = arith.constant 32 : index
    %c0_51 = arith.constant 0 : index
    %129 = vector.load %arg2[%c32_50, %c0_51] : memref<128x64xf32, #tpu.memory_space<vmem>>, vector<32x64xf32>
    %c64 = arith.constant 64 : index
    %c0_52 = arith.constant 0 : index
    %130 = vector.load %arg3[%c64, %c0_52] : memref<256x32xf32, #tpu.memory_space<vmem>>, vector<64x32xf32>
    %cst_53 = arith.constant dense<0.000000e+00> : vector<16x64xf32>
    %131 = tpu.matmul %128, %129, %cst_53 {dimension_numbers = #tpu.dot_dimension_numbers<[1], [0], [0], [1], [0, 0, 1, 1], [], []>} : vector<16x32xf32>, vector<32x64xf32>, vector<16x64xf32> -> vector<16x64xf32>
    %132 = vector.broadcast %13 : vector<1x64xf32> to vector<16x64xf32>
    %133 = arith.addf %131, %132 : vector<16x64xf32>
    %cst_54 = arith.constant 0.000000e+00 : f32
    %134 = vector.broadcast %cst_54 : f32 to vector<16x64xf32>
    %135 = arith.maximumf %133, %134 : vector<16x64xf32>
    %cst_55 = arith.constant dense<0.000000e+00> : vector<16x32xf32>
    %136 = tpu.matmul %135, %130, %cst_55 {dimension_numbers = #tpu.dot_dimension_numbers<[1], [0], [0], [1], [0, 0, 1, 1], [], []>} : vector<16x64xf32>, vector<64x32xf32>, vector<16x32xf32> -> vector<16x32xf32>
    %137 = vector.broadcast %16 : vector<1x32xf32> to vector<16x32xf32>
    %138 = arith.addf %136, %137 : vector<16x32xf32>
    %139 = arith.addf %128, %138 : vector<16x32xf32>
    %cst_56 = arith.constant dense<0.000000e+00> : vector<16xf32>
    %140 = vector.multi_reduction <add>, %139, %cst_56 [1] : vector<16x32xf32> to vector<16xf32>
    %141 = vector.shape_cast %140 : vector<16xf32> to vector<16x1xf32>
    %cst_57 = arith.constant 3.200000e+01 : f32
    %142 = vector.broadcast %cst_57 : f32 to vector<16x1xf32>
    %143 = arith.divf %141, %142 : vector<16x1xf32>
    %144 = vector.broadcast %143 : vector<16x1xf32> to vector<16x32xf32>
    %145 = arith.subf %139, %144 : vector<16x32xf32>
    %146 = arith.mulf %145, %145 : vector<16x32xf32>
    %cst_58 = arith.constant dense<0.000000e+00> : vector<16xf32>
    %147 = vector.multi_reduction <add>, %146, %cst_58 [1] : vector<16x32xf32> to vector<16xf32>
    %148 = vector.shape_cast %147 : vector<16xf32> to vector<16x1xf32>
    %cst_59 = arith.constant 3.200000e+01 : f32
    %149 = vector.broadcast %cst_59 : f32 to vector<16x1xf32>
    %150 = arith.divf %148, %149 : vector<16x1xf32>
    %151 = vector.broadcast %143 : vector<16x1xf32> to vector<16x32xf32>
    %152 = arith.subf %139, %151 : vector<16x32xf32>
    %cst_60 = arith.constant 9.99999974E-6 : f32
    %153 = vector.broadcast %cst_60 : f32 to vector<16x1xf32>
    %154 = arith.addf %150, %153 : vector<16x1xf32>
    %155 = math.rsqrt %154 : vector<16x1xf32>
    %156 = vector.broadcast %155 : vector<16x1xf32> to vector<16x32xf32>
    %157 = arith.mulf %152, %156 : vector<16x32xf32>
    %158 = vector.broadcast %19 : vector<1x32xf32> to vector<16x32xf32>
    %159 = arith.mulf %157, %158 : vector<16x32xf32>
    %160 = vector.broadcast %20 : vector<1x32xf32> to vector<16x32xf32>
    %161 = arith.addf %159, %160 : vector<16x32xf32>
    %c16 = arith.constant 16 : index
    %c0_61 = arith.constant 0 : index
    %162 = vector.load %arg4[%c16, %c0_61] : memref<32x64xf32, #tpu.memory_space<vmem>>, vector<1x64xf32>
    %c17 = arith.constant 17 : index
    %c0_62 = arith.constant 0 : index
    %163 = vector.load %arg4[%c17, %c0_62] : memref<32x64xf32, #tpu.memory_space<vmem>>, vector<1x64xf32>
    %c18 = arith.constant 18 : index
    %c0_63 = arith.constant 0 : index
    %164 = vector.load %arg4[%c18, %c0_63] : memref<32x64xf32, #tpu.memory_space<vmem>>, vector<1x32xf32>
    %c19 = arith.constant 19 : index
    %c0_64 = arith.constant 0 : index
    %165 = vector.load %arg4[%c19, %c0_64] : memref<32x64xf32, #tpu.memory_space<vmem>>, vector<1x32xf32>
    %c20 = arith.constant 20 : index
    %c0_65 = arith.constant 0 : index
    %166 = vector.load %arg4[%c20, %c0_65] : memref<32x64xf32, #tpu.memory_space<vmem>>, vector<1x32xf32>
    %c21 = arith.constant 21 : index
    %c0_66 = arith.constant 0 : index
    %167 = vector.load %arg4[%c21, %c0_66] : memref<32x64xf32, #tpu.memory_space<vmem>>, vector<1x32xf32>
    %c22 = arith.constant 22 : index
    %c0_67 = arith.constant 0 : index
    %168 = vector.load %arg4[%c22, %c0_67] : memref<32x64xf32, #tpu.memory_space<vmem>>, vector<1x32xf32>
    %c23 = arith.constant 23 : index
    %c0_68 = arith.constant 0 : index
    %169 = vector.load %arg4[%c23, %c0_68] : memref<32x64xf32, #tpu.memory_space<vmem>>, vector<1x32xf32>
    %c24 = arith.constant 24 : index
    %c0_69 = arith.constant 0 : index
    %170 = vector.load %arg4[%c24, %c0_69] : memref<32x64xf32, #tpu.memory_space<vmem>>, vector<1x32xf32>
    %171 = arith.addf %161, %1 : vector<16x32xf32>
    %c64_70 = arith.constant 64 : index
    %c0_71 = arith.constant 0 : index
    %172 = vector.load %arg2[%c64_70, %c0_71] : memref<128x64xf32, #tpu.memory_space<vmem>>, vector<32x64xf32>
    %cst_72 = arith.constant dense<0.000000e+00> : vector<16x64xf32>
    %173 = tpu.matmul %171, %172, %cst_72 {dimension_numbers = #tpu.dot_dimension_numbers<[1], [0], [0], [1], [0, 0, 1, 1], [], []>} : vector<16x32xf32>, vector<32x64xf32>, vector<16x64xf32> -> vector<16x64xf32>
    %174 = vector.broadcast %162 : vector<1x64xf32> to vector<16x64xf32>
    %175 = arith.addf %173, %174 : vector<16x64xf32>
    %176 = vector.extract_strided_slice %175 {offsets = [0, 0], sizes = [16, 32], strides = [1, 1]} : vector<16x64xf32> to vector<16x32xf32>
    %177 = vector.extract_strided_slice %175 {offsets = [0, 32], sizes = [16, 32], strides = [1, 1]} : vector<16x64xf32> to vector<16x32xf32>
    %c128 = arith.constant 128 : index
    %c0_73 = arith.constant 0 : index
    %178 = vector.load %arg3[%c128, %c0_73] : memref<256x32xf32, #tpu.memory_space<vmem>>, vector<32x32xf32>
    %cst_74 = arith.constant dense<0.000000e+00> : vector<16x32xf32>
    %179 = tpu.matmul %161, %178, %cst_74 {dimension_numbers = #tpu.dot_dimension_numbers<[1], [0], [0], [1], [0, 0, 1, 1], [], []>} : vector<16x32xf32>, vector<32x32xf32>, vector<16x32xf32> -> vector<16x32xf32>
    %180 = vector.broadcast %164 : vector<1x32xf32> to vector<16x32xf32>
    %181 = arith.addf %179, %180 : vector<16x32xf32>
    %182 = tpu.transpose %177, [1, 0] : vector<16x32xf32> -> vector<32x16xf32>
    %183 = vector.extract_strided_slice %176 {offsets = [0, 0], sizes = [16, 8], strides = [1, 1]} : vector<16x32xf32> to vector<16x8xf32>
    %184 = vector.extract_strided_slice %182 {offsets = [0, 0], sizes = [8, 16], strides = [1, 1]} : vector<32x16xf32> to vector<8x16xf32>
    %cst_75 = arith.constant dense<0.000000e+00> : vector<16x16xf32>
    %185 = tpu.matmul %183, %184, %cst_75 {dimension_numbers = #tpu.dot_dimension_numbers<[1], [0], [0], [1], [0, 0, 1, 1], [], []>} : vector<16x8xf32>, vector<8x16xf32>, vector<16x16xf32> -> vector<16x16xf32>
    %186 = arith.addf %185, %11 : vector<16x16xf32>
    %cst_76 = arith.constant dense<0xFF800000> : vector<16xf32>
    %187 = vector.multi_reduction <maximumf>, %186, %cst_76 [1] : vector<16x16xf32> to vector<16xf32>
    %188 = vector.shape_cast %187 : vector<16xf32> to vector<16x1xf32>
    %189 = vector.broadcast %188 : vector<16x1xf32> to vector<16x16xf32>
    %190 = arith.subf %186, %189 : vector<16x16xf32>
    %191 = math.exp %190 : vector<16x16xf32>
    %cst_77 = arith.constant dense<0.000000e+00> : vector<16xf32>
    %192 = vector.multi_reduction <add>, %191, %cst_77 [1] : vector<16x16xf32> to vector<16xf32>
    %193 = vector.shape_cast %192 : vector<16xf32> to vector<16x1xf32>
    %194 = vector.broadcast %193 : vector<16x1xf32> to vector<16x16xf32>
    %195 = arith.divf %191, %194 : vector<16x16xf32>
    %196 = vector.extract_strided_slice %181 {offsets = [0, 0], sizes = [16, 8], strides = [1, 1]} : vector<16x32xf32> to vector<16x8xf32>
    %cst_78 = arith.constant dense<0.000000e+00> : vector<16x8xf32>
    %197 = tpu.matmul %195, %196, %cst_78 {dimension_numbers = #tpu.dot_dimension_numbers<[1], [0], [0], [1], [0, 0, 1, 1], [], []>} : vector<16x16xf32>, vector<16x8xf32>, vector<16x8xf32> -> vector<16x8xf32>
    %c160 = arith.constant 160 : index
    %c0_79 = arith.constant 0 : index
    %198 = vector.load %arg3[%c160, %c0_79] : memref<256x32xf32, #tpu.memory_space<vmem>>, vector<8x32xf32>
    %cst_80 = arith.constant dense<0.000000e+00> : vector<16x32xf32>
    %199 = tpu.matmul %197, %198, %cst_80 {dimension_numbers = #tpu.dot_dimension_numbers<[1], [0], [0], [1], [0, 0, 1, 1], [], []>} : vector<16x8xf32>, vector<8x32xf32>, vector<16x32xf32> -> vector<16x32xf32>
    %200 = vector.broadcast %165 : vector<1x32xf32> to vector<16x32xf32>
    %201 = arith.addf %199, %200 : vector<16x32xf32>
    %202 = vector.extract_strided_slice %176 {offsets = [0, 8], sizes = [16, 8], strides = [1, 1]} : vector<16x32xf32> to vector<16x8xf32>
    %203 = vector.extract_strided_slice %182 {offsets = [8, 0], sizes = [8, 16], strides = [1, 1]} : vector<32x16xf32> to vector<8x16xf32>
    %cst_81 = arith.constant dense<0.000000e+00> : vector<16x16xf32>
    %204 = tpu.matmul %202, %203, %cst_81 {dimension_numbers = #tpu.dot_dimension_numbers<[1], [0], [0], [1], [0, 0, 1, 1], [], []>} : vector<16x8xf32>, vector<8x16xf32>, vector<16x16xf32> -> vector<16x16xf32>
    %205 = arith.addf %204, %11 : vector<16x16xf32>
    %cst_82 = arith.constant dense<0xFF800000> : vector<16xf32>
    %206 = vector.multi_reduction <maximumf>, %205, %cst_82 [1] : vector<16x16xf32> to vector<16xf32>
    %207 = vector.shape_cast %206 : vector<16xf32> to vector<16x1xf32>
    %208 = vector.broadcast %207 : vector<16x1xf32> to vector<16x16xf32>
    %209 = arith.subf %205, %208 : vector<16x16xf32>
    %210 = math.exp %209 : vector<16x16xf32>
    %cst_83 = arith.constant dense<0.000000e+00> : vector<16xf32>
    %211 = vector.multi_reduction <add>, %210, %cst_83 [1] : vector<16x16xf32> to vector<16xf32>
    %212 = vector.shape_cast %211 : vector<16xf32> to vector<16x1xf32>
    %213 = vector.broadcast %212 : vector<16x1xf32> to vector<16x16xf32>
    %214 = arith.divf %210, %213 : vector<16x16xf32>
    %215 = vector.extract_strided_slice %181 {offsets = [0, 8], sizes = [16, 8], strides = [1, 1]} : vector<16x32xf32> to vector<16x8xf32>
    %cst_84 = arith.constant dense<0.000000e+00> : vector<16x8xf32>
    %216 = tpu.matmul %214, %215, %cst_84 {dimension_numbers = #tpu.dot_dimension_numbers<[1], [0], [0], [1], [0, 0, 1, 1], [], []>} : vector<16x16xf32>, vector<16x8xf32>, vector<16x8xf32> -> vector<16x8xf32>
    %c168 = arith.constant 168 : index
    %c0_85 = arith.constant 0 : index
    %217 = vector.load %arg3[%c168, %c0_85] : memref<256x32xf32, #tpu.memory_space<vmem>>, vector<8x32xf32>
    %cst_86 = arith.constant dense<0.000000e+00> : vector<16x32xf32>
    %218 = tpu.matmul %216, %217, %cst_86 {dimension_numbers = #tpu.dot_dimension_numbers<[1], [0], [0], [1], [0, 0, 1, 1], [], []>} : vector<16x8xf32>, vector<8x32xf32>, vector<16x32xf32> -> vector<16x32xf32>
    %219 = arith.addf %201, %218 : vector<16x32xf32>
    %220 = vector.extract_strided_slice %176 {offsets = [0, 16], sizes = [16, 8], strides = [1, 1]} : vector<16x32xf32> to vector<16x8xf32>
    %221 = vector.extract_strided_slice %182 {offsets = [16, 0], sizes = [8, 16], strides = [1, 1]} : vector<32x16xf32> to vector<8x16xf32>
    %cst_87 = arith.constant dense<0.000000e+00> : vector<16x16xf32>
    %222 = tpu.matmul %220, %221, %cst_87 {dimension_numbers = #tpu.dot_dimension_numbers<[1], [0], [0], [1], [0, 0, 1, 1], [], []>} : vector<16x8xf32>, vector<8x16xf32>, vector<16x16xf32> -> vector<16x16xf32>
    %223 = arith.addf %222, %11 : vector<16x16xf32>
    %cst_88 = arith.constant dense<0xFF800000> : vector<16xf32>
    %224 = vector.multi_reduction <maximumf>, %223, %cst_88 [1] : vector<16x16xf32> to vector<16xf32>
    %225 = vector.shape_cast %224 : vector<16xf32> to vector<16x1xf32>
    %226 = vector.broadcast %225 : vector<16x1xf32> to vector<16x16xf32>
    %227 = arith.subf %223, %226 : vector<16x16xf32>
    %228 = math.exp %227 : vector<16x16xf32>
    %cst_89 = arith.constant dense<0.000000e+00> : vector<16xf32>
    %229 = vector.multi_reduction <add>, %228, %cst_89 [1] : vector<16x16xf32> to vector<16xf32>
    %230 = vector.shape_cast %229 : vector<16xf32> to vector<16x1xf32>
    %231 = vector.broadcast %230 : vector<16x1xf32> to vector<16x16xf32>
    %232 = arith.divf %228, %231 : vector<16x16xf32>
    %233 = vector.extract_strided_slice %181 {offsets = [0, 16], sizes = [16, 8], strides = [1, 1]} : vector<16x32xf32> to vector<16x8xf32>
    %cst_90 = arith.constant dense<0.000000e+00> : vector<16x8xf32>
    %234 = tpu.matmul %232, %233, %cst_90 {dimension_numbers = #tpu.dot_dimension_numbers<[1], [0], [0], [1], [0, 0, 1, 1], [], []>} : vector<16x16xf32>, vector<16x8xf32>, vector<16x8xf32> -> vector<16x8xf32>
    %c176 = arith.constant 176 : index
    %c0_91 = arith.constant 0 : index
    %235 = vector.load %arg3[%c176, %c0_91] : memref<256x32xf32, #tpu.memory_space<vmem>>, vector<8x32xf32>
    %cst_92 = arith.constant dense<0.000000e+00> : vector<16x32xf32>
    %236 = tpu.matmul %234, %235, %cst_92 {dimension_numbers = #tpu.dot_dimension_numbers<[1], [0], [0], [1], [0, 0, 1, 1], [], []>} : vector<16x8xf32>, vector<8x32xf32>, vector<16x32xf32> -> vector<16x32xf32>
    %237 = arith.addf %219, %236 : vector<16x32xf32>
    %238 = vector.extract_strided_slice %176 {offsets = [0, 24], sizes = [16, 8], strides = [1, 1]} : vector<16x32xf32> to vector<16x8xf32>
    %239 = vector.extract_strided_slice %182 {offsets = [24, 0], sizes = [8, 16], strides = [1, 1]} : vector<32x16xf32> to vector<8x16xf32>
    %cst_93 = arith.constant dense<0.000000e+00> : vector<16x16xf32>
    %240 = tpu.matmul %238, %239, %cst_93 {dimension_numbers = #tpu.dot_dimension_numbers<[1], [0], [0], [1], [0, 0, 1, 1], [], []>} : vector<16x8xf32>, vector<8x16xf32>, vector<16x16xf32> -> vector<16x16xf32>
    %241 = arith.addf %240, %11 : vector<16x16xf32>
    %cst_94 = arith.constant dense<0xFF800000> : vector<16xf32>
    %242 = vector.multi_reduction <maximumf>, %241, %cst_94 [1] : vector<16x16xf32> to vector<16xf32>
    %243 = vector.shape_cast %242 : vector<16xf32> to vector<16x1xf32>
    %244 = vector.broadcast %243 : vector<16x1xf32> to vector<16x16xf32>
    %245 = arith.subf %241, %244 : vector<16x16xf32>
    %246 = math.exp %245 : vector<16x16xf32>
    %cst_95 = arith.constant dense<0.000000e+00> : vector<16xf32>
    %247 = vector.multi_reduction <add>, %246, %cst_95 [1] : vector<16x16xf32> to vector<16xf32>
    %248 = vector.shape_cast %247 : vector<16xf32> to vector<16x1xf32>
    %249 = vector.broadcast %248 : vector<16x1xf32> to vector<16x16xf32>
    %250 = arith.divf %246, %249 : vector<16x16xf32>
    %251 = vector.extract_strided_slice %181 {offsets = [0, 24], sizes = [16, 8], strides = [1, 1]} : vector<16x32xf32> to vector<16x8xf32>
    %cst_96 = arith.constant dense<0.000000e+00> : vector<16x8xf32>
    %252 = tpu.matmul %250, %251, %cst_96 {dimension_numbers = #tpu.dot_dimension_numbers<[1], [0], [0], [1], [0, 0, 1, 1], [], []>} : vector<16x16xf32>, vector<16x8xf32>, vector<16x8xf32> -> vector<16x8xf32>
    %c184 = arith.constant 184 : index
    %c0_97 = arith.constant 0 : index
    %253 = vector.load %arg3[%c184, %c0_97] : memref<256x32xf32, #tpu.memory_space<vmem>>, vector<8x32xf32>
    %cst_98 = arith.constant dense<0.000000e+00> : vector<16x32xf32>
    %254 = tpu.matmul %252, %253, %cst_98 {dimension_numbers = #tpu.dot_dimension_numbers<[1], [0], [0], [1], [0, 0, 1, 1], [], []>} : vector<16x8xf32>, vector<8x32xf32>, vector<16x32xf32> -> vector<16x32xf32>
    %255 = arith.addf %237, %254 : vector<16x32xf32>
    %256 = arith.addf %161, %255 : vector<16x32xf32>
    %cst_99 = arith.constant dense<0.000000e+00> : vector<16xf32>
    %257 = vector.multi_reduction <add>, %256, %cst_99 [1] : vector<16x32xf32> to vector<16xf32>
    %258 = vector.shape_cast %257 : vector<16xf32> to vector<16x1xf32>
    %cst_100 = arith.constant 3.200000e+01 : f32
    %259 = vector.broadcast %cst_100 : f32 to vector<16x1xf32>
    %260 = arith.divf %258, %259 : vector<16x1xf32>
    %261 = vector.broadcast %260 : vector<16x1xf32> to vector<16x32xf32>
    %262 = arith.subf %256, %261 : vector<16x32xf32>
    %263 = arith.mulf %262, %262 : vector<16x32xf32>
    %cst_101 = arith.constant dense<0.000000e+00> : vector<16xf32>
    %264 = vector.multi_reduction <add>, %263, %cst_101 [1] : vector<16x32xf32> to vector<16xf32>
    %265 = vector.shape_cast %264 : vector<16xf32> to vector<16x1xf32>
    %cst_102 = arith.constant 3.200000e+01 : f32
    %266 = vector.broadcast %cst_102 : f32 to vector<16x1xf32>
    %267 = arith.divf %265, %266 : vector<16x1xf32>
    %268 = vector.broadcast %260 : vector<16x1xf32> to vector<16x32xf32>
    %269 = arith.subf %256, %268 : vector<16x32xf32>
    %cst_103 = arith.constant 9.99999974E-6 : f32
    %270 = vector.broadcast %cst_103 : f32 to vector<16x1xf32>
    %271 = arith.addf %267, %270 : vector<16x1xf32>
    %272 = math.rsqrt %271 : vector<16x1xf32>
    %273 = vector.broadcast %272 : vector<16x1xf32> to vector<16x32xf32>
    %274 = arith.mulf %269, %273 : vector<16x32xf32>
    %275 = vector.broadcast %167 : vector<1x32xf32> to vector<16x32xf32>
    %276 = arith.mulf %274, %275 : vector<16x32xf32>
    %277 = vector.broadcast %168 : vector<1x32xf32> to vector<16x32xf32>
    %278 = arith.addf %276, %277 : vector<16x32xf32>
    %c96 = arith.constant 96 : index
    %c0_104 = arith.constant 0 : index
    %279 = vector.load %arg2[%c96, %c0_104] : memref<128x64xf32, #tpu.memory_space<vmem>>, vector<32x64xf32>
    %c192 = arith.constant 192 : index
    %c0_105 = arith.constant 0 : index
    %280 = vector.load %arg3[%c192, %c0_105] : memref<256x32xf32, #tpu.memory_space<vmem>>, vector<64x32xf32>
    %cst_106 = arith.constant dense<0.000000e+00> : vector<16x64xf32>
    %281 = tpu.matmul %278, %279, %cst_106 {dimension_numbers = #tpu.dot_dimension_numbers<[1], [0], [0], [1], [0, 0, 1, 1], [], []>} : vector<16x32xf32>, vector<32x64xf32>, vector<16x64xf32> -> vector<16x64xf32>
    %282 = vector.broadcast %163 : vector<1x64xf32> to vector<16x64xf32>
    %283 = arith.addf %281, %282 : vector<16x64xf32>
    %cst_107 = arith.constant 0.000000e+00 : f32
    %284 = vector.broadcast %cst_107 : f32 to vector<16x64xf32>
    %285 = arith.maximumf %283, %284 : vector<16x64xf32>
    %cst_108 = arith.constant dense<0.000000e+00> : vector<16x32xf32>
    %286 = tpu.matmul %285, %280, %cst_108 {dimension_numbers = #tpu.dot_dimension_numbers<[1], [0], [0], [1], [0, 0, 1, 1], [], []>} : vector<16x64xf32>, vector<64x32xf32>, vector<16x32xf32> -> vector<16x32xf32>
    %287 = vector.broadcast %166 : vector<1x32xf32> to vector<16x32xf32>
    %288 = arith.addf %286, %287 : vector<16x32xf32>
    %289 = arith.addf %278, %288 : vector<16x32xf32>
    %cst_109 = arith.constant dense<0.000000e+00> : vector<16xf32>
    %290 = vector.multi_reduction <add>, %289, %cst_109 [1] : vector<16x32xf32> to vector<16xf32>
    %291 = vector.shape_cast %290 : vector<16xf32> to vector<16x1xf32>
    %cst_110 = arith.constant 3.200000e+01 : f32
    %292 = vector.broadcast %cst_110 : f32 to vector<16x1xf32>
    %293 = arith.divf %291, %292 : vector<16x1xf32>
    %294 = vector.broadcast %293 : vector<16x1xf32> to vector<16x32xf32>
    %295 = arith.subf %289, %294 : vector<16x32xf32>
    %296 = arith.mulf %295, %295 : vector<16x32xf32>
    %cst_111 = arith.constant dense<0.000000e+00> : vector<16xf32>
    %297 = vector.multi_reduction <add>, %296, %cst_111 [1] : vector<16x32xf32> to vector<16xf32>
    %298 = vector.shape_cast %297 : vector<16xf32> to vector<16x1xf32>
    %cst_112 = arith.constant 3.200000e+01 : f32
    %299 = vector.broadcast %cst_112 : f32 to vector<16x1xf32>
    %300 = arith.divf %298, %299 : vector<16x1xf32>
    %301 = vector.broadcast %293 : vector<16x1xf32> to vector<16x32xf32>
    %302 = arith.subf %289, %301 : vector<16x32xf32>
    %cst_113 = arith.constant 9.99999974E-6 : f32
    %303 = vector.broadcast %cst_113 : f32 to vector<16x1xf32>
    %304 = arith.addf %300, %303 : vector<16x1xf32>
    %305 = math.rsqrt %304 : vector<16x1xf32>
    %306 = vector.broadcast %305 : vector<16x1xf32> to vector<16x32xf32>
    %307 = arith.mulf %302, %306 : vector<16x32xf32>
    %308 = vector.broadcast %169 : vector<1x32xf32> to vector<16x32xf32>
    %309 = arith.mulf %307, %308 : vector<16x32xf32>
    %310 = vector.broadcast %170 : vector<1x32xf32> to vector<16x32xf32>
    %311 = arith.addf %309, %310 : vector<16x32xf32>
    %c0_114 = arith.constant 0 : index
    %c0_115 = arith.constant 0 : index
    %312 = vector.load %arg5[%c0_114, %c0_115] : memref<16x32xf32, #tpu.memory_space<vmem>>, vector<16x32xf32>
    tpu.vector_store %arg5[%c0_114, %c0_115], %311 {strides = array<i32>} : memref<16x32xf32, #tpu.memory_space<vmem>>, vector<16x32xf32>,
    return
  }
}

</mosaic_0001>

<llo_original>
// kernel: transformer_encoder.1
$region0: #{transformer_encoder.1}
  #allocation0 [shape = 'u32[]', space=smem, size = 0x4, offset = 0x4, fixed_abs, tag = 'smem constant byte address 0x4 - core index']
  #allocation1 [shape = 'u32[144,128]{1,0:T(1,128)}', space=vmem, size = 0x12000, scoped, tag = 'internal scratch']
  %s0 = inlined_call_operand.vmem [shape: f32[16,32], index: 0, kind: input, shape index: {}]
  %s1 = inlined_call_operand.vmem [shape: f32[16,32], index: 1, kind: input, shape index: {}]
  %s2 = inlined_call_operand.vmem [shape: f32[128,64], index: 2, kind: input, shape index: {}]
  %s3 = inlined_call_operand.vmem [shape: f32[256,32], index: 3, kind: input, shape index: {}]
  %s4 = inlined_call_operand.vmem [shape: f32[32,64], index: 4, kind: input, shape index: {}]
  %s5 = inlined_call_operand.hbm [shape: f32[16,32], index: 5, kind: output, shape index: {}]
  %s6 = sld [smem:[#allocation0]]
  $region30: #{transformer_encoder.1} parent=0
    _
  %s8 = ssub.s32 1, %s6
  %s9 = scalar_select 0, %s8, %s6
  $region1: #{transformer_encoder.1} parent=0
    #allocation2 [shape = 'u8[8192]{0}', space=vmem, size = 0x2000, scoped, tag = 'output window, operand 0, single buffered']
    #allocation3 [shape = 's32[1]{0}', space=sflag, size = 0x4, scoped, tag = 'scoped memory for transformer_encoder.1']
    %10 = vsyncpa [#allocation3], 0
    // Predicated region
    $region2: #{transformer_encoder.1} parent=1 // pred_check
      _
    $region3: #{transformer_encoder.1} parent=1 // pred_check_branch
      %12 = sbr.rel (0) target = $region5
    $region4: #{transformer_encoder.1} parent=1 // pred_region
      _
    $region5: #{transformer_encoder.1} parent=1 // pred_fallthru
      _
    // Predicated region
    $region6: #{transformer_encoder.1} parent=1 // pred_check
      _
    $region7: #{transformer_encoder.1} parent=1 // pred_check_branch
      %14 = sbr.rel (0) target = $region9
    $region8: #{transformer_encoder.1} parent=1 // pred_region
      _
    $region9: #{transformer_encoder.1} parent=1 // pred_fallthru
      _
    // Predicated region
    $region10: #{transformer_encoder.1} parent=1 // pred_check
      _
    $region11: #{transformer_encoder.1} parent=1 // pred_check_branch
      %16 = sbr.rel (0) target = $region13
    $region12: #{transformer_encoder.1} parent=1 // pred_region
      _
    $region13: #{transformer_encoder.1} parent=1 // pred_fallthru
      _
    // Predicated region
    $region14: #{transformer_encoder.1} parent=1 // pred_check
      _
    $region15: #{transformer_encoder.1} parent=1 // pred_check_branch
      %18 = sbr.rel (0) target = $region17
    $region16: #{transformer_encoder.1} parent=1 // pred_region
      _
    $region17: #{transformer_encoder.1} parent=1 // pred_fallthru
      _
    // Predicated region
    $region18: #{transformer_encoder.1} parent=1 // pred_check
      _
    $region19: #{transformer_encoder.1} parent=1 // pred_check_branch
      %20 = sbr.rel (0) target = $region21
    $region20: #{transformer_encoder.1} parent=1 // pred_region
      _
    $region21: #{transformer_encoder.1} parent=1 // pred_fallthru
      _
    %v21 = vld [vmem:[%s0] sm:$0xff]
    %v22 = vld [vmem:[%s0 + $0x8] sm:$0xff]
    %v23 = vld [vmem:[%s1] sm:$0xff]
    %v24 = vld [vmem:[%s1 + $0x8] sm:$0xff]
    %v25 = vlaneseq
    %v26 = vshrl.u32 %v25, 7
    %v27 = vadd.s32 %v26, 8
    %v28 = vlaneseq
    %v29 = vand.u32 %v28, 127
    %v30 = vand.u32 %v26, 1
    %v31 = vand.u32 %v27, 1
    %v32 = vand.u32 %v29, 1
    %vm33 = vcmp.eq.s32.totalorder %v30, %v32
    %vm34 = vcmp.eq.s32.totalorder %v31, %v32
    %v35 = vsel %vm33, 0.0, -1e+30
    %v36 = vsel %vm34, 0.0, -1e+30
    %v37 = vld [vmem:[%s4] sm:$0x1]
    %v38 = vld [vmem:[%s4 + $0x1] sm:$0x1]
    %v39 = vld [vmem:[%s4 + $0x2] sm:$0x1]
    %v40 = vld [vmem:[%s4 + $0x3] sm:$0x1]
    %v41 = vld [vmem:[%s4 + $0x4] sm:$0x1]
    %v42 = vld [vmem:[%s4 + $0x5] sm:$0x1]
    %v43 = vld [vmem:[%s4 + $0x6] sm:$0x1]
    %v44 = vld [vmem:[%s4 + $0x7] sm:$0x1]
    %v45 = vld [vmem:[%s4 + $0x8] sm:$0x1]
    %v46 = vadd.f32 %v21, %v23
    %v47 = vadd.f32 %v22, %v24
    %v48 = vld [vmem:[%s2] sm:$0xff]
    %v49 = vld [vmem:[%s2 + $0x8] sm:$0xff]
    %v50 = vld [vmem:[%s2 + $0x10] sm:$0xff]
    %v51 = vld [vmem:[%s2 + $0x18] sm:$0xff]
    %v52 = vlaneseq
    %v53 = vshrl.u32 %v52, 7
    %v54 = vsub.s32 0, %v53
    %v55 = vrot.slane %v37, %v54
    %vm56 = vcmask 261120
    %v58 = vsel %vm56, %v46, 0
    %v61 = vsel %vm56, %v47, 0
    %63 = vmatprep.subr.mxu0 0.0
    %64 = vmatpush1.msra.mxu0 %v48
    %65 = vmatprep.subr.mxu0 0.0
    %66 = vmatpush1.msra.mxu0 %v49
    %67 = vmatprep.subr.mxu0 0.0
    %68 = vmatpush1.msra.mxu0 %v50
    %69 = vmatprep.subr.mxu0 0.0
    %70 = vmatpush1.msra.mxu0 %v51
    %71 = vmatprep.subr.mxu0 0.0
    %72 = vmatpush1.msra.mxu0 0.0
    %73 = vmatprep.subr.mxu0 0.0
    %74 = vmatpush1.msra.mxu0 0.0
    %75 = vmatprep.subr.mxu0 0.0
    %76 = vmatpush1.msra.mxu0 0.0
    %77 = vmatprep.subr.mxu0 0.0
    %78 = vmatpush1.msra.mxu0 0.0
    %79 = vmatprep.subr.mxu0 0.0
    %80 = vmatpush1.msra.mxu0 0.0
    %81 = vmatprep.subr.mxu0 0.0
    %82 = vmatpush1.msra.mxu0 0.0
    %83 = vmatprep.subr.mxu0 0.0
    %84 = vmatpush1.msra.mxu0 0.0
    %85 = vmatprep.subr.mxu0 0.0
    %86 = vmatpush1.msra.mxu0 0.0
    %87 = vmatprep.subr.mxu0 0.0
    %88 = vmatpush1.msra.mxu0 0.0
    %89 = vmatprep.subr.mxu0 0.0
    %90 = vmatpush1.msra.mxu0 0.0
    %91 = vmatprep.subr.mxu0 0.0
    %92 = vmatpush1.msra.mxu0 0.0
    %93 = vmatprep.subr.mxu0 0.0
    %94 = vmatpush1.msra.mxu0 0.0
    %95 = vmatprep.subr.mxu0 0.0
    %96 = vmatpush1.msra.mxu0 0.0
    %97 = vmatprep.subr.mxu0 0.0
    %98 = vmatpush1.msra.mxu0 0.0
    %99 = vmatprep.subr.mxu0 0.0
    %100 = vmatpush1.msra.mxu0 0.0
    %101 = vmatprep.subr.mxu0 0.0
    %102 = vmatpush1.msra.mxu0 0.0
    %103 = vmatprep.subr.mxu0 0.0
    %104 = vmatpush1.msra.mxu0 0.0
    %105 = vmatprep.subr.mxu0 0.0
    %106 = vmatpush1.msra.mxu0 0.0
    %107 = vmatprep.subr.mxu0 0.0
    %108 = vmatpush1.msra.mxu0 0.0
    %109 = vmatprep.subr.mxu0 0.0
    %110 = vmatpush1.msra.mxu0 0.0
    %111 = vmatprep.subr.mxu0 0.0
    %112 = vmatpush1.msra.mxu0 0.0
    %113 = vmatprep.subr.mxu0 0.0
    %114 = vmatpush1.msra.mxu0 0.0
    %115 = vmatprep.subr.mxu0 0.0
    %116 = vmatpush1.msra.mxu0 0.0
    %117 = vmatprep.subr.mxu0 0.0
    %118 = vmatpush1.msra.mxu0 0.0
    %119 = vmatprep.subr.mxu0 0.0
    %120 = vmatpush1.msra.mxu0 0.0
    %121 = vmatprep.subr.mxu0 0.0
    %122 = vmatpush1.msra.mxu0 0.0
    %123 = vmatprep.subr.mxu0 0.0
    %124 = vmatpush1.msra.mxu0 0.0
    %125 = vmatprep.subr.mxu0 0.0
    %126 = vmatpush1.msra.mxu0 0.0
    %127 = vmatprep.mubr.f32.mxu0 0.0
    %128 = vmatmul.mubr.f32.gmra.mrb[0].mxu0 %v58
    %v129 = vpop.f32.mrb[0].mxu0
    %v130 = vadd.f32 %v55, %v129
    %v131 = vpop.f32.mrb[0].mxu0
    %132 = vmatprep.mubr.f32.mxu0 0.0
    %133 = vmatmul.mubr.f32.gmra.mrb[0].mxu0 %v61
    %v134 = vpop.f32.mrb[0].mxu0
    %v135 = vadd.f32 %v55, %v134
    %v136 = vpop.f32.mrb[0].mxu0
    %137 = vdwg.mxu0
    %v138 = vld [vmem:[%s3] sm:$0xff]
    %v139 = vld [vmem:[%s3 + $0x8] sm:$0xff]
    %v140 = vld [vmem:[%s3 + $0x10] sm:$0xff]
    %v141 = vld [vmem:[%s3 + $0x18] sm:$0xff]
    %v142 = vlaneseq
    %v143 = vshrl.u32 %v142, 7
    %v144 = vsub.s32 0, %v143
    %v145 = vrot.slane %v39, %v144
    %v147 = vsel %vm56, %v21, 0
    %v150 = vsel %vm56, %v22, 0
    %152 = vmatprep.subr.mxu0 0.0
    %153 = vmatpush1.msra.mxu0 %v138
    %154 = vmatprep.subr.mxu0 0.0
    %155 = vmatpush1.msra.mxu0 %v139
    %156 = vmatprep.subr.mxu0 0.0
    %157 = vmatpush1.msra.mxu0 %v140
    %158 = vmatprep.subr.mxu0 0.0
    %159 = vmatpush1.msra.mxu0 %v141
    %160 = vmatprep.subr.mxu0 0.0
    %161 = vmatpush1.msra.mxu0 0.0
    %162 = vmatprep.subr.mxu0 0.0
    %163 = vmatpush1.msra.mxu0 0.0
    %164 = vmatprep.subr.mxu0 0.0
    %165 = vmatpush1.msra.mxu0 0.0
    %166 = vmatprep.subr.mxu0 0.0
    %167 = vmatpush1.msra.mxu0 0.0
    %168 = vmatprep.subr.mxu0 0.0
    %169 = vmatpush1.msra.mxu0 0.0
    %170 = vmatprep.subr.mxu0 0.0
    %171 = vmatpush1.msra.mxu0 0.0
    %172 = vmatprep.subr.mxu0 0.0
    %173 = vmatpush1.msra.mxu0 0.0
    %174 = vmatprep.subr.mxu0 0.0
    %175 = vmatpush1.msra.mxu0 0.0
    %176 = vmatprep.subr.mxu0 0.0
    %177 = vmatpush1.msra.mxu0 0.0
    %178 = vmatprep.subr.mxu0 0.0
    %179 = vmatpush1.msra.mxu0 0.0
    %180 = vmatprep.subr.mxu0 0.0
    %181 = vmatpush1.msra.mxu0 0.0
    %182 = vmatprep.subr.mxu0 0.0
    %183 = vmatpush1.msra.mxu0 0.0
    %184 = vmatprep.subr.mxu0 0.0
    %185 = vmatpush1.msra.mxu0 0.0
    %186 = vmatprep.subr.mxu0 0.0
    %187 = vmatpush1.msra.mxu0 0.0
    %188 = vmatprep.subr.mxu0 0.0
    %189 = vmatpush1.msra.mxu0 0.0
    %190 = vmatprep.subr.mxu0 0.0
    %191 = vmatpush1.msra.mxu0 0.0
    %192 = vmatprep.subr.mxu0 0.0
    %193 = vmatpush1.msra.mxu0 0.0
    %194 = vmatprep.subr.mxu0 0.0
    %195 = vmatpush1.msra.mxu0 0.0
    %196 = vmatprep.subr.mxu0 0.0
    %197 = vmatpush1.msra.mxu0 0.0
    %198 = vmatprep.subr.mxu0 0.0
    %199 = vmatpush1.msra.mxu0 0.0
    %200 = vmatprep.subr.mxu0 0.0
    %201 = vmatpush1.msra.mxu0 0.0
    %202 = vmatprep.subr.mxu0 0.0
    %203 = vmatpush1.msra.mxu0 0.0
    %204 = vmatprep.subr.mxu0 0.0
    %205 = vmatpush1.msra.mxu0 0.0
    %206 = vmatprep.subr.mxu0 0.0
    %207 = vmatpush1.msra.mxu0 0.0
    %208 = vmatprep.subr.mxu0 0.0
    %209 = vmatpush1.msra.mxu0 0.0
    %210 = vmatprep.subr.mxu0 0.0
    %211 = vmatpush1.msra.mxu0 0.0
    %212 = vmatprep.subr.mxu0 0.0
    %213 = vmatpush1.msra.mxu0 0.0
    %214 = vmatprep.subr.mxu0 0.0
    %215 = vmatpush1.msra.mxu0 0.0
    %216 = vmatprep.mubr.f32.mxu0 0.0
    %217 = vmatmul.mubr.f32.gmra.mrb[0].mxu0 %v147
    %v218 = vpop.f32.mrb[0].mxu0
    %v219 = vadd.f32 %v145, %v218
    %v220 = vpop.f32.mrb[0].mxu0
    %221 = vmatprep.mubr.f32.mxu0 0.0
    %222 = vmatmul.mubr.f32.gmra.mrb[0].mxu0 %v150
    %v223 = vpop.f32.mrb[0].mxu0
    %v224 = vadd.f32 %v145, %v223
    %v225 = vpop.f32.mrb[0].mxu0
    %226 = vdwg.mxu0
    %229 = vrot.lane.b32.xlu0 %v130, 96
    %v230 = vpop.permute.xlu0 %229
    %231 = vrot.lane.b32.xlu0 %v135, 96
    %v232 = vpop.permute.xlu0 %231
    %vm233 = vcmask 64512
    %v234 = vsel %vm233, %v130, 0
    %v236 = vsel %vm233, %v135, 0
    %v238 = vsel %vm233, %v230, 0
    %v240 = vsel %vm233, %v232, 0
    %242 = vmatprep.subr.mxu0 0.0
    %243 = vmatpush1.xpose.msra.mxu0 %v238
    %244 = vmatprep.subr.mxu0 0.0
    %245 = vmatpush1.xpose.msra.mxu0 %v240
    %246 = vmatprep.subr.mxu0 0.0
    %247 = vmatpush1.xpose.msra.mxu0 0.0
    %248 = vmatprep.subr.mxu0 0.0
    %249 = vmatpush1.xpose.msra.mxu0 0.0
    %250 = vmatprep.subr.mxu0 0.0
    %251 = vmatpush1.xpose.msra.mxu0 0.0
    %252 = vmatprep.subr.mxu0 0.0
    %253 = vmatpush1.xpose.msra.mxu0 0.0
    %254 = vmatprep.subr.mxu0 0.0
    %255 = vmatpush1.xpose.msra.mxu0 0.0
    %256 = vmatprep.subr.mxu0 0.0
    %257 = vmatpush1.xpose.msra.mxu0 0.0
    %258 = vmatprep.subr.mxu0 0.0
    %259 = vmatpush1.xpose.msra.mxu0 0.0
    %260 = vmatprep.subr.mxu0 0.0
    %261 = vmatpush1.xpose.msra.mxu0 0.0
    %262 = vmatprep.subr.mxu0 0.0
    %263 = vmatpush1.xpose.msra.mxu0 0.0
    %264 = vmatprep.subr.mxu0 0.0
    %265 = vmatpush1.xpose.msra.mxu0 0.0
    %266 = vmatprep.subr.mxu0 0.0
    %267 = vmatpush1.xpose.msra.mxu0 0.0
    %268 = vmatprep.subr.mxu0 0.0
    %269 = vmatpush1.xpose.msra.mxu0 0.0
    %270 = vmatprep.subr.mxu0 0.0
    %271 = vmatpush1.xpose.msra.mxu0 0.0
    %272 = vmatprep.subr.mxu0 0.0
    %273 = vmatpush1.xpose.msra.mxu0 0.0
    %274 = vmatprep.subr.mxu0 0.0
    %275 = vmatpush1.xpose.msra.mxu0 0.0
    %276 = vmatprep.subr.mxu0 0.0
    %277 = vmatpush1.xpose.msra.mxu0 0.0
    %278 = vmatprep.subr.mxu0 0.0
    %279 = vmatpush1.xpose.msra.mxu0 0.0
    %280 = vmatprep.subr.mxu0 0.0
    %281 = vmatpush1.xpose.msra.mxu0 0.0
    %282 = vmatprep.subr.mxu0 0.0
    %283 = vmatpush1.xpose.msra.mxu0 0.0
    %284 = vmatprep.subr.mxu0 0.0
    %285 = vmatpush1.xpose.msra.mxu0 0.0
    %286 = vmatprep.subr.mxu0 0.0
    %287 = vmatpush1.xpose.msra.mxu0 0.0
    %288 = vmatprep.subr.mxu0 0.0
    %289 = vmatpush1.xpose.msra.mxu0 0.0
    %290 = vmatprep.subr.mxu0 0.0
    %291 = vmatpush1.xpose.msra.mxu0 0.0
    %292 = vmatprep.subr.mxu0 0.0
    %293 = vmatpush1.xpose.msra.mxu0 0.0
    %294 = vmatprep.subr.mxu0 0.0
    %295 = vmatpush1.xpose.msra.mxu0 0.0
    %296 = vmatprep.subr.mxu0 0.0
    %297 = vmatpush1.xpose.msra.mxu0 0.0
    %298 = vmatprep.subr.mxu0 0.0
    %299 = vmatpush1.xpose.msra.mxu0 0.0
    %300 = vmatprep.subr.mxu0 0.0
    %301 = vmatpush1.xpose.msra.mxu0 0.0
    %302 = vmatprep.subr.mxu0 0.0
    %303 = vmatpush1.xpose.msra.mxu0 0.0
    %304 = vmatprep.subr.mxu0 0.0
    %305 = vmatpush1.xpose.msra.mxu0 0.0
    %306 = vmatprep.mubr.f32.mxu0 0.0
    %307 = vmatmul.mubr.f32.gmra.mrb[0].mxu0 %v234
    %v308 = vpop.f32.mrb[0].mxu0
    %v309 = vadd.f32 %v35, %v308
    %v310 = vpop.f32.mrb[0].mxu0
    %311 = vmatprep.mubr.f32.mxu0 0.0
    %312 = vmatmul.mubr.f32.gmra.mrb[0].mxu0 %v236
    %v313 = vpop.f32.mrb[0].mxu0
    %v314 = vadd.f32 %v36, %v313
    %v315 = vpop.f32.mrb[0].mxu0
    %316 = vdwg.mxu0
    %vm317 = vcmask 130048
    %v318 = vsel %vm317, %v309, -inf
    %319 = vmax.xlane.f32.xlu0 %v318
    %v320 = vpop.xlane.xlu0 %319
    %v321 = vsel %vm317, %v314, -inf
    %322 = vmax.xlane.f32.xlu0 %v321
    %v323 = vpop.xlane.xlu0 %322
    %v324 = vsub.f32 %v309, %v320
    %v325 = vsub.f32 %v314, %v323
    %v326 = vmul.f32 %v324, 1.442695
    %v327 = vpow.pop %v326
    %v328 = vmul.f32 %v325, 1.442695
    %v329 = vpow.pop %v328
    %v330 = vsel %vm317, %v327, 0.0
    %331 = vadd.xlane.f32.xlu0 %v330
    %v332 = vpop.xlane.xlu0 %331
    %v333 = vsel %vm317, %v329, 0.0
    %334 = vadd.xlane.f32.xlu0 %v333
    %v335 = vpop.xlane.xlu0 %334
    %v336 = vrcp.pop %v332
    %v337 = vmul.f32 %v327, %v336
    %v338 = vrcp.pop %v335
    %v339 = vmul.f32 %v329, %v338
    %v341 = vsel %vm317, %v337, 0
    %v344 = vsel %vm317, %v339, 0
    %346 = vmatprep.subr.mxu0 0.0
    %347 = vmatpush1.msra.mxu0 %v219
    %348 = vmatprep.subr.mxu0 0.0
    %349 = vmatpush1.msra.mxu0 %v224
    %350 = vmatprep.subr.mxu0 0.0
    %351 = vmatpush1.msra.mxu0 0.0
    %352 = vmatprep.subr.mxu0 0.0
    %353 = vmatpush1.msra.mxu0 0.0
    %354 = vmatprep.subr.mxu0 0.0
    %355 = vmatpush1.msra.mxu0 0.0
    %356 = vmatprep.subr.mxu0 0.0
    %357 = vmatpush1.msra.mxu0 0.0
    %358 = vmatprep.subr.mxu0 0.0
    %359 = vmatpush1.msra.mxu0 0.0
    %360 = vmatprep.subr.mxu0 0.0
    %361 = vmatpush1.msra.mxu0 0.0
    %362 = vmatprep.subr.mxu0 0.0
    %363 = vmatpush1.msra.mxu0 0.0
    %364 = vmatprep.subr.mxu0 0.0
    %365 = vmatpush1.msra.mxu0 0.0
    %366 = vmatprep.subr.mxu0 0.0
    %367 = vmatpush1.msra.mxu0 0.0
    %368 = vmatprep.subr.mxu0 0.0
    %369 = vmatpush1.msra.mxu0 0.0
    %370 = vmatprep.subr.mxu0 0.0
    %371 = vmatpush1.msra.mxu0 0.0
    %372 = vmatprep.subr.mxu0 0.0
    %373 = vmatpush1.msra.mxu0 0.0
    %374 = vmatprep.subr.mxu0 0.0
    %375 = vmatpush1.msra.mxu0 0.0
    %376 = vmatprep.subr.mxu0 0.0
    %377 = vmatpush1.msra.mxu0 0.0
    %378 = vmatprep.subr.mxu0 0.0
    %379 = vmatpush1.msra.mxu0 0.0
    %380 = vmatprep.subr.mxu0 0.0
    %381 = vmatpush1.msra.mxu0 0.0
    %382 = vmatprep.subr.mxu0 0.0
    %383 = vmatpush1.msra.mxu0 0.0
    %384 = vmatprep.subr.mxu0 0.0
    %385 = vmatpush1.msra.mxu0 0.0
    %386 = vmatprep.subr.mxu0 0.0
    %387 = vmatpush1.msra.mxu0 0.0
    %388 = vmatprep.subr.mxu0 0.0
    %389 = vmatpush1.msra.mxu0 0.0
    %390 = vmatprep.subr.mxu0 0.0
    %391 = vmatpush1.msra.mxu0 0.0
    %392 = vmatprep.subr.mxu0 0.0
    %393 = vmatpush1.msra.mxu0 0.0
    %394 = vmatprep.subr.mxu0 0.0
    %395 = vmatpush1.msra.mxu0 0.0
    %396 = vmatprep.subr.mxu0 0.0
    %397 = vmatpush1.msra.mxu0 0.0
    %398 = vmatprep.subr.mxu0 0.0
    %399 = vmatpush1.msra.mxu0 0.0
    %400 = vmatprep.subr.mxu0 0.0
    %401 = vmatpush1.msra.mxu0 0.0
    %402 = vmatprep.subr.mxu0 0.0
    %403 = vmatpush1.msra.mxu0 0.0
    %404 = vmatprep.subr.mxu0 0.0
    %405 = vmatpush1.msra.mxu0 0.0
    %406 = vmatprep.subr.mxu0 0.0
    %407 = vmatpush1.msra.mxu0 0.0
    %408 = vmatprep.subr.mxu0 0.0
    %409 = vmatpush1.msra.mxu0 0.0
    %410 = vmatprep.mubr.f32.mxu0 0.0
    %411 = vmatmul.mubr.f32.gmra.mrb[0].mxu0 %v341
    %v412 = vpop.f32.mrb[0].mxu0
    %v413 = vadd.f32 0.0, %v412
    %v414 = vpop.f32.mrb[0].mxu0
    %415 = vmatprep.mubr.f32.mxu0 0.0
    %416 = vmatmul.mubr.f32.gmra.mrb[0].mxu0 %v344
    %v417 = vpop.f32.mrb[0].mxu0
    %v418 = vadd.f32 0.0, %v417
    %v419 = vpop.f32.mrb[0].mxu0
    %420 = vdwg.mxu0
    %v421 = vld [vmem:[%s3 + $0x20] sm:$0xff]
    %v422 = vlaneseq
    %v423 = vshrl.u32 %v422, 7
    %v424 = vsub.s32 0, %v423
    %v425 = vrot.slane %v40, %v424
    %v427 = vsel %vm233, %v413, 0
    %v430 = vsel %vm233, %v418, 0
    %432 = vmatprep.subr.mxu0 0.0
    %433 = vmatpush1.msra.mxu0 %v421
    %434 = vmatprep.subr.mxu0 0.0
    %435 = vmatpush1.msra.mxu0 0.0
    %436 = vmatprep.subr.mxu0 0.0
    %437 = vmatpush1.msra.mxu0 0.0
    %438 = vmatprep.subr.mxu0 0.0
    %439 = vmatpush1.msra.mxu0 0.0
    %440 = vmatprep.subr.mxu0 0.0
    %441 = vmatpush1.msra.mxu0 0.0
    %442 = vmatprep.subr.mxu0 0.0
    %443 = vmatpush1.msra.mxu0 0.0
    %444 = vmatprep.subr.mxu0 0.0
    %445 = vmatpush1.msra.mxu0 0.0
    %446 = vmatprep.subr.mxu0 0.0
    %447 = vmatpush1.msra.mxu0 0.0
    %448 = vmatprep.subr.mxu0 0.0
    %449 = vmatpush1.msra.mxu0 0.0
    %450 = vmatprep.subr.mxu0 0.0
    %451 = vmatpush1.msra.mxu0 0.0
    %452 = vmatprep.subr.mxu0 0.0
    %453 = vmatpush1.msra.mxu0 0.0
    %454 = vmatprep.subr.mxu0 0.0
    %455 = vmatpush1.msra.mxu0 0.0
    %456 = vmatprep.subr.mxu0 0.0
    %457 = vmatpush1.msra.mxu0 0.0
    %458 = vmatprep.subr.mxu0 0.0
    %459 = vmatpush1.msra.mxu0 0.0
    %460 = vmatprep.subr.mxu0 0.0
    %461 = vmatpush1.msra.mxu0 0.0
    %462 = vmatprep.subr.mxu0 0.0
    %463 = vmatpush1.msra.mxu0 0.0
    %464 = vmatprep.subr.mxu0 0.0
    %465 = vmatpush1.msra.mxu0 0.0
    %466 = vmatprep.subr.mxu0 0.0
    %467 = vmatpush1.msra.mxu0 0.0
    %468 = vmatprep.subr.mxu0 0.0
    %469 = vmatpush1.msra.mxu0 0.0
    %470 = vmatprep.subr.mxu0 0.0
    %471 = vmatpush1.msra.mxu0 0.0
    %472 = vmatprep.subr.mxu0 0.0
    %473 = vmatpush1.msra.mxu0 0.0
    %474 = vmatprep.subr.mxu0 0.0
    %475 = vmatpush1.msra.mxu0 0.0
    %476 = vmatprep.subr.mxu0 0.0
    %477 = vmatpush1.msra.mxu0 0.0
    %478 = vmatprep.subr.mxu0 0.0
    %479 = vmatpush1.msra.mxu0 0.0
    %480 = vmatprep.subr.mxu0 0.0
    %481 = vmatpush1.msra.mxu0 0.0
    %482 = vmatprep.subr.mxu0 0.0
    %483 = vmatpush1.msra.mxu0 0.0
    %484 = vmatprep.subr.mxu0 0.0
    %485 = vmatpush1.msra.mxu0 0.0
    %486 = vmatprep.subr.mxu0 0.0
    %487 = vmatpush1.msra.mxu0 0.0
    %488 = vmatprep.subr.mxu0 0.0
    %489 = vmatpush1.msra.mxu0 0.0
    %490 = vmatprep.subr.mxu0 0.0
    %491 = vmatpush1.msra.mxu0 0.0
    %492 = vmatprep.subr.mxu0 0.0
    %493 = vmatpush1.msra.mxu0 0.0
    %494 = vmatprep.subr.mxu0 0.0
    %495 = vmatpush1.msra.mxu0 0.0
    %496 = vmatprep.mubr.f32.mxu0 0.0
    %497 = vmatmul.mubr.f32.gmra.mrb[0].mxu0 %v427
    %v498 = vpop.f32.mrb[0].mxu0
    %v499 = vadd.f32 %v425, %v498
    %v500 = vpop.f32.mrb[0].mxu0
    %501 = vmatprep.mubr.f32.mxu0 0.0
    %502 = vmatmul.mubr.f32.gmra.mrb[0].mxu0 %v430
    %v503 = vpop.f32.mrb[0].mxu0
    %v504 = vadd.f32 %v425, %v503
    %v505 = vpop.f32.mrb[0].mxu0
    %506 = vdwg.mxu0
    %507 = vrot.lane.b32.xlu0 %v130, 120
    %v508 = vpop.permute.xlu0 %507
    %509 = vrot.lane.b32.xlu0 %v135, 120
    %v510 = vpop.permute.xlu0 %509
    %511 = vrot.lane.b32.xlu0 %v130, 88
    %v512 = vpop.permute.xlu0 %511
    %513 = vrot.lane.b32.xlu0 %v135, 88
    %v514 = vpop.permute.xlu0 %513
    %v515 = vsel %vm233, %v508, 0
    %v517 = vsel %vm233, %v510, 0
    %v519 = vsel %vm233, %v512, 0
    %v521 = vsel %vm233, %v514, 0
    %523 = vmatprep.subr.mxu0 0.0
    %524 = vmatpush1.xpose.msra.mxu0 %v519
    %525 = vmatprep.subr.mxu0 0.0
    %526 = vmatpush1.xpose.msra.mxu0 %v521
    %527 = vmatprep.subr.mxu0 0.0
    %528 = vmatpush1.xpose.msra.mxu0 0.0
    %529 = vmatprep.subr.mxu0 0.0
    %530 = vmatpush1.xpose.msra.mxu0 0.0
    %531 = vmatprep.subr.mxu0 0.0
    %532 = vmatpush1.xpose.msra.mxu0 0.0
    %533 = vmatprep.subr.mxu0 0.0
    %534 = vmatpush1.xpose.msra.mxu0 0.0
    %535 = vmatprep.subr.mxu0 0.0
    %536 = vmatpush1.xpose.msra.mxu0 0.0
    %537 = vmatprep.subr.mxu0 0.0
    %538 = vmatpush1.xpose.msra.mxu0 0.0
    %539 = vmatprep.subr.mxu0 0.0
    %540 = vmatpush1.xpose.msra.mxu0 0.0
    %541 = vmatprep.subr.mxu0 0.0
    %542 = vmatpush1.xpose.msra.mxu0 0.0
    %543 = vmatprep.subr.mxu0 0.0
    %544 = vmatpush1.xpose.msra.mxu0 0.0
    %545 = vmatprep.subr.mxu0 0.0
    %546 = vmatpush1.xpose.msra.mxu0 0.0
    %547 = vmatprep.subr.mxu0 0.0
    %548 = vmatpush1.xpose.msra.mxu0 0.0
    %549 = vmatprep.subr.mxu0 0.0
    %550 = vmatpush1.xpose.msra.mxu0 0.0
    %551 = vmatprep.subr.mxu0 0.0
    %552 = vmatpush1.xpose.msra.mxu0 0.0
    %553 = vmatprep.subr.mxu0 0.0
    %554 = vmatpush1.xpose.msra.mxu0 0.0
    %555 = vmatprep.subr.mxu0 0.0
    %556 = vmatpush1.xpose.msra.mxu0 0.0
    %557 = vmatprep.subr.mxu0 0.0
    %558 = vmatpush1.xpose.msra.mxu0 0.0
    %559 = vmatprep.subr.mxu0 0.0
    %560 = vmatpush1.xpose.msra.mxu0 0.0
    %561 = vmatprep.subr.mxu0 0.0
    %562 = vmatpush1.xpose.msra.mxu0 0.0
    %563 = vmatprep.subr.mxu0 0.0
    %564 = vmatpush1.xpose.msra.mxu0 0.0
    %565 = vmatprep.subr.mxu0 0.0
    %566 = vmatpush1.xpose.msra.mxu0 0.0
    %567 = vmatprep.subr.mxu0 0.0
    %568 = vmatpush1.xpose.msra.mxu0 0.0
    %569 = vmatprep.subr.mxu0 0.0
    %570 = vmatpush1.xpose.msra.mxu0 0.0
    %571 = vmatprep.subr.mxu0 0.0
    %572 = vmatpush1.xpose.msra.mxu0 0.0
    %573 = vmatprep.subr.mxu0 0.0
    %574 = vmatpush1.xpose.msra.mxu0 0.0
    %575 = vmatprep.subr.mxu0 0.0
    %576 = vmatpush1.xpose.msra.mxu0 0.0
    %577 = vmatprep.subr.mxu0 0.0
    %578 = vmatpush1.xpose.msra.mxu0 0.0
    %579 = vmatprep.subr.mxu0 0.0
    %580 = vmatpush1.xpose.msra.mxu0 0.0
    %581 = vmatprep.subr.mxu0 0.0
    %582 = vmatpush1.xpose.msra.mxu0 0.0
    %583 = vmatprep.subr.mxu0 0.0
    %584 = vmatpush1.xpose.msra.mxu0 0.0
    %585 = vmatprep.subr.mxu0 0.0
    %586 = vmatpush1.xpose.msra.mxu0 0.0
    %587 = vmatprep.mubr.f32.mxu0 0.0
    %588 = vmatmul.mubr.f32.gmra.mrb[0].mxu0 %v515
    %v589 = vpop.f32.mrb[0].mxu0
    %v590 = vadd.f32 %v35, %v589
    %v591 = vpop.f32.mrb[0].mxu0
    %592 = vmatprep.mubr.f32.mxu0 0.0
    %593 = vmatmul.mubr.f32.gmra.mrb[0].mxu0 %v517
    %v594 = vpop.f32.mrb[0].mxu0
    %v595 = vadd.f32 %v36, %v594
    %v596 = vpop.f32.mrb[0].mxu0
    %597 = vdwg.mxu0
    %v598 = vsel %vm317, %v590, -inf
    %599 = vmax.xlane.f32.xlu0 %v598
    %v600 = vpop.xlane.xlu0 %599
    %v601 = vsel %vm317, %v595, -inf
    %602 = vmax.xlane.f32.xlu0 %v601
    %v603 = vpop.xlane.xlu0 %602
    %v604 = vsub.f32 %v590, %v600
    %v605 = vsub.f32 %v595, %v603
    %v606 = vmul.f32 %v604, 1.442695
    %v607 = vpow.pop %v606
    %v608 = vmul.f32 %v605, 1.442695
    %v609 = vpow.pop %v608
    %v610 = vsel %vm317, %v607, 0.0
    %611 = vadd.xlane.f32.xlu0 %v610
    %v612 = vpop.xlane.xlu0 %611
    %v613 = vsel %vm317, %v609, 0.0
    %614 = vadd.xlane.f32.xlu0 %v613
    %v615 = vpop.xlane.xlu0 %614
    %v616 = vrcp.pop %v612
    %v617 = vmul.f32 %v607, %v616
    %v618 = vrcp.pop %v615
    %v619 = vmul.f32 %v609, %v618
    %622 = vrot.lane.b32.xlu0 %v219, 120
    %v623 = vpop.permute.xlu0 %622
    %624 = vrot.lane.b32.xlu0 %v224, 120
    %v625 = vpop.permute.xlu0 %624
    %v629 = vsel %vm317, %v617, 0
    %v632 = vsel %vm317, %v619, 0
    %634 = vmatprep.subr.mxu0 0.0
    %635 = vmatpush1.msra.mxu0 %v623
    %636 = vmatprep.subr.mxu0 0.0
    %637 = vmatpush1.msra.mxu0 %v625
    %638 = vmatprep.subr.mxu0 0.0
    %639 = vmatpush1.msra.mxu0 0.0
    %640 = vmatprep.subr.mxu0 0.0
    %641 = vmatpush1.msra.mxu0 0.0
    %642 = vmatprep.subr.mxu0 0.0
    %643 = vmatpush1.msra.mxu0 0.0
    %644 = vmatprep.subr.mxu0 0.0
    %645 = vmatpush1.msra.mxu0 0.0
    %646 = vmatprep.subr.mxu0 0.0
    %647 = vmatpush1.msra.mxu0 0.0
    %648 = vmatprep.subr.mxu0 0.0
    %649 = vmatpush1.msra.mxu0 0.0
    %650 = vmatprep.subr.mxu0 0.0
    %651 = vmatpush1.msra.mxu0 0.0
    %652 = vmatprep.subr.mxu0 0.0
    %653 = vmatpush1.msra.mxu0 0.0
    %654 = vmatprep.subr.mxu0 0.0
    %655 = vmatpush1.msra.mxu0 0.0
    %656 = vmatprep.subr.mxu0 0.0
    %657 = vmatpush1.msra.mxu0 0.0
    %658 = vmatprep.subr.mxu0 0.0
    %659 = vmatpush1.msra.mxu0 0.0
    %660 = vmatprep.subr.mxu0 0.0
    %661 = vmatpush1.msra.mxu0 0.0
    %662 = vmatprep.subr.mxu0 0.0
    %663 = vmatpush1.msra.mxu0 0.0
    %664 = vmatprep.subr.mxu0 0.0
    %665 = vmatpush1.msra.mxu0 0.0
    %666 = vmatprep.subr.mxu0 0.0
    %667 = vmatpush1.msra.mxu0 0.0
    %668 = vmatprep.subr.mxu0 0.0
    %669 = vmatpush1.msra.mxu0 0.0
    %670 = vmatprep.subr.mxu0 0.0
    %671 = vmatpush1.msra.mxu0 0.0
    %672 = vmatprep.subr.mxu0 0.0
    %673 = vmatpush1.msra.mxu0 0.0
    %674 = vmatprep.subr.mxu0 0.0
    %675 = vmatpush1.msra.mxu0 0.0
    %676 = vmatprep.subr.mxu0 0.0
    %677 = vmatpush1.msra.mxu0 0.0
    %678 = vmatprep.subr.mxu0 0.0
    %679 = vmatpush1.msra.mxu0 0.0
    %680 = vmatprep.subr.mxu0 0.0
    %681 = vmatpush1.msra.mxu0 0.0
    %682 = vmatprep.subr.mxu0 0.0
    %683 = vmatpush1.msra.mxu0 0.0
    %684 = vmatprep.subr.mxu0 0.0
    %685 = vmatpush1.msra.mxu0 0.0
    %686 = vmatprep.subr.mxu0 0.0
    %687 = vmatpush1.msra.mxu0 0.0
    %688 = vmatprep.subr.mxu0 0.0
    %689 = vmatpush1.msra.mxu0 0.0
    %690 = vmatprep.subr.mxu0 0.0
    %691 = vmatpush1.msra.mxu0 0.0
    %692 = vmatprep.subr.mxu0 0.0
    %693 = vmatpush1.msra.mxu0 0.0
    %694 = vmatprep.subr.mxu0 0.0
    %695 = vmatpush1.msra.mxu0 0.0
    %696 = vmatprep.subr.mxu0 0.0
    %697 = vmatpush1.msra.mxu0 0.0
    %698 = vmatprep.mubr.f32.mxu0 0.0
    %699 = vmatmul.mubr.f32.gmra.mrb[0].mxu0 %v629
    %v700 = vpop.f32.mrb[0].mxu0
    %v701 = vadd.f32 0.0, %v700
    %v702 = vpop.f32.mrb[0].mxu0
    %703 = vmatprep.mubr.f32.mxu0 0.0
    %704 = vmatmul.mubr.f32.gmra.mrb[0].mxu0 %v632
    %v705 = vpop.f32.mrb[0].mxu0
    %v706 = vadd.f32 0.0, %v705
    %v707 = vpop.f32.mrb[0].mxu0
    %708 = vdwg.mxu0
    %v709 = vld [vmem:[%s3 + $0x28] sm:$0xff]
    %v711 = vsel %vm233, %v701, 0
    %v714 = vsel %vm233, %v706, 0
    %716 = vmatprep.subr.mxu0 0.0
    %717 = vmatpush1.msra.mxu0 %v709
    %718 = vmatprep.subr.mxu0 0.0
    %719 = vmatpush1.msra.mxu0 0.0
    %720 = vmatprep.subr.mxu0 0.0
    %721 = vmatpush1.msra.mxu0 0.0
    %722 = vmatprep.subr.mxu0 0.0
    %723 = vmatpush1.msra.mxu0 0.0
    %724 = vmatprep.subr.mxu0 0.0
    %725 = vmatpush1.msra.mxu0 0.0
    %726 = vmatprep.subr.mxu0 0.0
    %727 = vmatpush1.msra.mxu0 0.0
    %728 = vmatprep.subr.mxu0 0.0
    %729 = vmatpush1.msra.mxu0 0.0
    %730 = vmatprep.subr.mxu0 0.0
    %731 = vmatpush1.msra.mxu0 0.0
    %732 = vmatprep.subr.mxu0 0.0
    %733 = vmatpush1.msra.mxu0 0.0
    %734 = vmatprep.subr.mxu0 0.0
    %735 = vmatpush1.msra.mxu0 0.0
    %736 = vmatprep.subr.mxu0 0.0
    %737 = vmatpush1.msra.mxu0 0.0
    %738 = vmatprep.subr.mxu0 0.0
    %739 = vmatpush1.msra.mxu0 0.0
    %740 = vmatprep.subr.mxu0 0.0
    %741 = vmatpush1.msra.mxu0 0.0
    %742 = vmatprep.subr.mxu0 0.0
    %743 = vmatpush1.msra.mxu0 0.0
    %744 = vmatprep.subr.mxu0 0.0
    %745 = vmatpush1.msra.mxu0 0.0
    %746 = vmatprep.subr.mxu0 0.0
    %747 = vmatpush1.msra.mxu0 0.0
    %748 = vmatprep.subr.mxu0 0.0
    %749 = vmatpush1.msra.mxu0 0.0
    %750 = vmatprep.subr.mxu0 0.0
    %751 = vmatpush1.msra.mxu0 0.0
    %752 = vmatprep.subr.mxu0 0.0
    %753 = vmatpush1.msra.mxu0 0.0
    %754 = vmatprep.subr.mxu0 0.0
    %755 = vmatpush1.msra.mxu0 0.0
    %756 = vmatprep.subr.mxu0 0.0
    %757 = vmatpush1.msra.mxu0 0.0
    %758 = vmatprep.subr.mxu0 0.0
    %759 = vmatpush1.msra.mxu0 0.0
    %760 = vmatprep.subr.mxu0 0.0
    %761 = vmatpush1.msra.mxu0 0.0
    %762 = vmatprep.subr.mxu0 0.0
    %763 = vmatpush1.msra.mxu0 0.0
    %764 = vmatprep.subr.mxu0 0.0
    %765 = vmatpush1.msra.mxu0 0.0
    %766 = vmatprep.subr.mxu0 0.0
    %767 = vmatpush1.msra.mxu0 0.0
    %768 = vmatprep.subr.mxu0 0.0
    %769 = vmatpush1.msra.mxu0 0.0
    %770 = vmatprep.subr.mxu0 0.0
    %771 = vmatpush1.msra.mxu0 0.0
    %772 = vmatprep.subr.mxu0 0.0
    %773 = vmatpush1.msra.mxu0 0.0
    %774 = vmatprep.subr.mxu0 0.0
    %775 = vmatpush1.msra.mxu0 0.0
    %776 = vmatprep.subr.mxu0 0.0
    %777 = vmatpush1.msra.mxu0 0.0
    %778 = vmatprep.subr.mxu0 0.0
    %779 = vmatpush1.msra.mxu0 0.0
    %780 = vmatprep.mubr.f32.mxu0 0.0
    %781 = vmatmul.mubr.f32.gmra.mrb[0].mxu0 %v711
    %v782 = vpop.f32.mrb[0].mxu0
    %v783 = vadd.f32 0.0, %v782
    %v784 = vpop.f32.mrb[0].mxu0
    %785 = vmatprep.mubr.f32.mxu0 0.0
    %786 = vmatmul.mubr.f32.gmra.mrb[0].mxu0 %v714
    %v787 = vpop.f32.mrb[0].mxu0
    %v788 = vadd.f32 0.0, %v787
    %v789 = vpop.f32.mrb[0].mxu0
    %790 = vdwg.mxu0
    %v791 = vadd.f32 %v499, %v783
    %v792 = vadd.f32 %v504, %v788
    %793 = vrot.lane.b32.xlu0 %v130, 112
    %v794 = vpop.permute.xlu0 %793
    %795 = vrot.lane.b32.xlu0 %v135, 112
    %v796 = vpop.permute.xlu0 %795
    %797 = vrot.lane.b32.xlu0 %v130, 80
    %v798 = vpop.permute.xlu0 %797
    %799 = vrot.lane.b32.xlu0 %v135, 80
    %v800 = vpop.permute.xlu0 %799
    %v801 = vsel %vm233, %v794, 0
    %v803 = vsel %vm233, %v796, 0
    %v805 = vsel %vm233, %v798, 0
    %v807 = vsel %vm233, %v800, 0
    %809 = vmatprep.subr.mxu0 0.0
    %810 = vmatpush1.xpose.msra.mxu0 %v805
    %811 = vmatprep.subr.mxu0 0.0
    %812 = vmatpush1.xpose.msra.mxu0 %v807
    %813 = vmatprep.subr.mxu0 0.0
    %814 = vmatpush1.xpose.msra.mxu0 0.0
    %815 = vmatprep.subr.mxu0 0.0
    %816 = vmatpush1.xpose.msra.mxu0 0.0
    %817 = vmatprep.subr.mxu0 0.0
    %818 = vmatpush1.xpose.msra.mxu0 0.0
    %819 = vmatprep.subr.mxu0 0.0
    %820 = vmatpush1.xpose.msra.mxu0 0.0
    %821 = vmatprep.subr.mxu0 0.0
    %822 = vmatpush1.xpose.msra.mxu0 0.0
    %823 = vmatprep.subr.mxu0 0.0
    %824 = vmatpush1.xpose.msra.mxu0 0.0
    %825 = vmatprep.subr.mxu0 0.0
    %826 = vmatpush1.xpose.msra.mxu0 0.0
    %827 = vmatprep.subr.mxu0 0.0
    %828 = vmatpush1.xpose.msra.mxu0 0.0
    %829 = vmatprep.subr.mxu0 0.0
    %830 = vmatpush1.xpose.msra.mxu0 0.0
    %831 = vmatprep.subr.mxu0 0.0
    %832 = vmatpush1.xpose.msra.mxu0 0.0
    %833 = vmatprep.subr.mxu0 0.0
    %834 = vmatpush1.xpose.msra.mxu0 0.0
    %835 = vmatprep.subr.mxu0 0.0
    %836 = vmatpush1.xpose.msra.mxu0 0.0
    %837 = vmatprep.subr.mxu0 0.0
    %838 = vmatpush1.xpose.msra.mxu0 0.0
    %839 = vmatprep.subr.mxu0 0.0
    %840 = vmatpush1.xpose.msra.mxu0 0.0
    %841 = vmatprep.subr.mxu0 0.0
    %842 = vmatpush1.xpose.msra.mxu0 0.0
    %843 = vmatprep.subr.mxu0 0.0
    %844 = vmatpush1.xpose.msra.mxu0 0.0
    %845 = vmatprep.subr.mxu0 0.0
    %846 = vmatpush1.xpose.msra.mxu0 0.0
    %847 = vmatprep.subr.mxu0 0.0
    %848 = vmatpush1.xpose.msra.mxu0 0.0
    %849 = vmatprep.subr.mxu0 0.0
    %850 = vmatpush1.xpose.msra.mxu0 0.0
    %851 = vmatprep.subr.mxu0 0.0
    %852 = vmatpush1.xpose.msra.mxu0 0.0
    %853 = vmatprep.subr.mxu0 0.0
    %854 = vmatpush1.xpose.msra.mxu0 0.0
    %855 = vmatprep.subr.mxu0 0.0
    %856 = vmatpush1.xpose.msra.mxu0 0.0
    %857 = vmatprep.subr.mxu0 0.0
    %858 = vmatpush1.xpose.msra.mxu0 0.0
    %859 = vmatprep.subr.mxu0 0.0
    %860 = vmatpush1.xpose.msra.mxu0 0.0
    %861 = vmatprep.subr.mxu0 0.0
    %862 = vmatpush1.xpose.msra.mxu0 0.0
    %863 = vmatprep.subr.mxu0 0.0
    %864 = vmatpush1.xpose.msra.mxu0 0.0
    %865 = vmatprep.subr.mxu0 0.0
    %866 = vmatpush1.xpose.msra.mxu0 0.0
    %867 = vmatprep.subr.mxu0 0.0
    %868 = vmatpush1.xpose.msra.mxu0 0.0
    %869 = vmatprep.subr.mxu0 0.0
    %870 = vmatpush1.xpose.msra.mxu0 0.0
    %871 = vmatprep.subr.mxu0 0.0
    %872 = vmatpush1.xpose.msra.mxu0 0.0
    %873 = vmatprep.mubr.f32.mxu0 0.0
    %874 = vmatmul.mubr.f32.gmra.mrb[0].mxu0 %v801
    %v875 = vpop.f32.mrb[0].mxu0
    %v876 = vadd.f32 %v35, %v875
    %v877 = vpop.f32.mrb[0].mxu0
    %878 = vmatprep.mubr.f32.mxu0 0.0
    %879 = vmatmul.mubr.f32.gmra.mrb[0].mxu0 %v803
    %v880 = vpop.f32.mrb[0].mxu0
    %v881 = vadd.f32 %v36, %v880
    %v882 = vpop.f32.mrb[0].mxu0
    %883 = vdwg.mxu0
    %v884 = vsel %vm317, %v876, -inf
    %885 = vmax.xlane.f32.xlu0 %v884
    %v886 = vpop.xlane.xlu0 %885
    %v887 = vsel %vm317, %v881, -inf
    %888 = vmax.xlane.f32.xlu0 %v887
    %v889 = vpop.xlane.xlu0 %888
    %v890 = vsub.f32 %v876, %v886
    %v891 = vsub.f32 %v881, %v889
    %v892 = vmul.f32 %v890, 1.442695
    %v893 = vpow.pop %v892
    %v894 = vmul.f32 %v891, 1.442695
    %v895 = vpow.pop %v894
    %v896 = vsel %vm317, %v893, 0.0
    %897 = vadd.xlane.f32.xlu0 %v896
    %v898 = vpop.xlane.xlu0 %897
    %v899 = vsel %vm317, %v895, 0.0
    %900 = vadd.xlane.f32.xlu0 %v899
    %v901 = vpop.xlane.xlu0 %900
    %v902 = vrcp.pop %v898
    %v903 = vmul.f32 %v893, %v902
    %v904 = vrcp.pop %v901
    %v905 = vmul.f32 %v895, %v904
    %906 = vrot.lane.b32.xlu0 %v219, 112
    %v907 = vpop.permute.xlu0 %906
    %908 = vrot.lane.b32.xlu0 %v224, 112
    %v909 = vpop.permute.xlu0 %908
    %v913 = vsel %vm317, %v903, 0
    %v916 = vsel %vm317, %v905, 0
    %918 = vmatprep.subr.mxu0 0.0
    %919 = vmatpush1.msra.mxu0 %v907
    %920 = vmatprep.subr.mxu0 0.0
    %921 = vmatpush1.msra.mxu0 %v909
    %922 = vmatprep.subr.mxu0 0.0
    %923 = vmatpush1.msra.mxu0 0.0
    %924 = vmatprep.subr.mxu0 0.0
    %925 = vmatpush1.msra.mxu0 0.0
    %926 = vmatprep.subr.mxu0 0.0
    %927 = vmatpush1.msra.mxu0 0.0
    %928 = vmatprep.subr.mxu0 0.0
    %929 = vmatpush1.msra.mxu0 0.0
    %930 = vmatprep.subr.mxu0 0.0
    %931 = vmatpush1.msra.mxu0 0.0
    %932 = vmatprep.subr.mxu0 0.0
    %933 = vmatpush1.msra.mxu0 0.0
    %934 = vmatprep.subr.mxu0 0.0
    %935 = vmatpush1.msra.mxu0 0.0
    %936 = vmatprep.subr.mxu0 0.0
    %937 = vmatpush1.msra.mxu0 0.0
    %938 = vmatprep.subr.mxu0 0.0
    %939 = vmatpush1.msra.mxu0 0.0
    %940 = vmatprep.subr.mxu0 0.0
    %941 = vmatpush1.msra.mxu0 0.0
    %942 = vmatprep.subr.mxu0 0.0
    %943 = vmatpush1.msra.mxu0 0.0
    %944 = vmatprep.subr.mxu0 0.0
    %945 = vmatpush1.msra.mxu0 0.0
    %946 = vmatprep.subr.mxu0 0.0
    %947 = vmatpush1.msra.mxu0 0.0
    %948 = vmatprep.subr.mxu0 0.0
    %949 = vmatpush1.msra.mxu0 0.0
    %950 = vmatprep.subr.mxu0 0.0
    %951 = vmatpush1.msra.mxu0 0.0
    %952 = vmatprep.subr.mxu0 0.0
    %953 = vmatpush1.msra.mxu0 0.0
    %954 = vmatprep.subr.mxu0 0.0
    %955 = vmatpush1.msra.mxu0 0.0
    %956 = vmatprep.subr.mxu0 0.0
    %957 = vmatpush1.msra.mxu0 0.0
    %958 = vmatprep.subr.mxu0 0.0
    %959 = vmatpush1.msra.mxu0 0.0
    %960 = vmatprep.subr.mxu0 0.0
    %961 = vmatpush1.msra.mxu0 0.0
    %962 = vmatprep.subr.mxu0 0.0
    %963 = vmatpush1.msra.mxu0 0.0
    %964 = vmatprep.subr.mxu0 0.0
    %965 = vmatpush1.msra.mxu0 0.0
    %966 = vmatprep.subr.mxu0 0.0
    %967 = vmatpush1.msra.mxu0 0.0
    %968 = vmatprep.subr.mxu0 0.0
    %969 = vmatpush1.msra.mxu0 0.0
    %970 = vmatprep.subr.mxu0 0.0
    %971 = vmatpush1.msra.mxu0 0.0
    %972 = vmatprep.subr.mxu0 0.0
    %973 = vmatpush1.msra.mxu0 0.0
    %974 = vmatprep.subr.mxu0 0.0
    %975 = vmatpush1.msra.mxu0 0.0
    %976 = vmatprep.subr.mxu0 0.0
    %977 = vmatpush1.msra.mxu0 0.0
    %978 = vmatprep.subr.mxu0 0.0
    %979 = vmatpush1.msra.mxu0 0.0
    %980 = vmatprep.subr.mxu0 0.0
    %981 = vmatpush1.msra.mxu0 0.0
    %982 = vmatprep.mubr.f32.mxu0 0.0
    %983 = vmatmul.mubr.f32.gmra.mrb[0].mxu0 %v913
    %v984 = vpop.f32.mrb[0].mxu0
    %v985 = vadd.f32 0.0, %v984
    %v986 = vpop.f32.mrb[0].mxu0
    %987 = vmatprep.mubr.f32.mxu0 0.0
    %988 = vmatmul.mubr.f32.gmra.mrb[0].mxu0 %v916
    %v989 = vpop.f32.mrb[0].mxu0
    %v990 = vadd.f32 0.0, %v989
    %v991 = vpop.f32.mrb[0].mxu0
    %992 = vdwg.mxu0
    %v993 = vld [vmem:[%s3 + $0x30] sm:$0xff]
    %v995 = vsel %vm233, %v985, 0
    %v998 = vsel %vm233, %v990, 0
    %1000 = vmatprep.subr.mxu0 0.0
    %1001 = vmatpush1.msra.mxu0 %v993
    %1002 = vmatprep.subr.mxu0 0.0
    %1003 = vmatpush1.msra.mxu0 0.0
    %1004 = vmatprep.subr.mxu0 0.0
    %1005 = vmatpush1.msra.mxu0 0.0
    %1006 = vmatprep.subr.mxu0 0.0
    %1007 = vmatpush1.msra.mxu0 0.0
    %1008 = vmatprep.subr.mxu0 0.0
    %1009 = vmatpush1.msra.mxu0 0.0
    %1010 = vmatprep.subr.mxu0 0.0
    %1011 = vmatpush1.msra.mxu0 0.0
    %1012 = vmatprep.subr.mxu0 0.0
    %1013 = vmatpush1.msra.mxu0 0.0
    %1014 = vmatprep.subr.mxu0 0.0
    %1015 = vmatpush1.msra.mxu0 0.0
    %1016 = vmatprep.subr.mxu0 0.0
    %1017 = vmatpush1.msra.mxu0 0.0
    %1018 = vmatprep.subr.mxu0 0.0
    %1019 = vmatpush1.msra.mxu0 0.0
    %1020 = vmatprep.subr.mxu0 0.0
    %1021 = vmatpush1.msra.mxu0 0.0
    %1022 = vmatprep.subr.mxu0 0.0
    %1023 = vmatpush1.msra.mxu0 0.0
    %1024 = vmatprep.subr.mxu0 0.0
    %1025 = vmatpush1.msra.mxu0 0.0
    %1026 = vmatprep.subr.mxu0 0.0
    %1027 = vmatpush1.msra.mxu0 0.0
    %1028 = vmatprep.subr.mxu0 0.0
    %1029 = vmatpush1.msra.mxu0 0.0
    %1030 = vmatprep.subr.mxu0 0.0
    %1031 = vmatpush1.msra.mxu0 0.0
    %1032 = vmatprep.subr.mxu0 0.0
    %1033 = vmatpush1.msra.mxu0 0.0
    %1034 = vmatprep.subr.mxu0 0.0
    %1035 = vmatpush1.msra.mxu0 0.0
    %1036 = vmatprep.subr.mxu0 0.0
    %1037 = vmatpush1.msra.mxu0 0.0
    %1038 = vmatprep.subr.mxu0 0.0
    %1039 = vmatpush1.msra.mxu0 0.0
    %1040 = vmatprep.subr.mxu0 0.0
    %1041 = vmatpush1.msra.mxu0 0.0
    %1042 = vmatprep.subr.mxu0 0.0
    %1043 = vmatpush1.msra.mxu0 0.0
    %1044 = vmatprep.subr.mxu0 0.0
    %1045 = vmatpush1.msra.mxu0 0.0
    %1046 = vmatprep.subr.mxu0 0.0
    %1047 = vmatpush1.msra.mxu0 0.0
    %1048 = vmatprep.subr.mxu0 0.0
    %1049 = vmatpush1.msra.mxu0 0.0
    %1050 = vmatprep.subr.mxu0 0.0
    %1051 = vmatpush1.msra.mxu0 0.0
    %1052 = vmatprep.subr.mxu0 0.0
    %1053 = vmatpush1.msra.mxu0 0.0
    %1054 = vmatprep.subr.mxu0 0.0
    %1055 = vmatpush1.msra.mxu0 0.0
    %1056 = vmatprep.subr.mxu0 0.0
    %1057 = vmatpush1.msra.mxu0 0.0
    %1058 = vmatprep.subr.mxu0 0.0
    %1059 = vmatpush1.msra.mxu0 0.0
    %1060 = vmatprep.subr.mxu0 0.0
    %1061 = vmatpush1.msra.mxu0 0.0
    %1062 = vmatprep.subr.mxu0 0.0
    %1063 = vmatpush1.msra.mxu0 0.0
    %1064 = vmatprep.mubr.f32.mxu0 0.0
    %1065 = vmatmul.mubr.f32.gmra.mrb[0].mxu0 %v995
    %v1066 = vpop.f32.mrb[0].mxu0
    %v1067 = vadd.f32 0.0, %v1066
    %v1068 = vpop.f32.mrb[0].mxu0
    %1069 = vmatprep.mubr.f32.mxu0 0.0
    %1070 = vmatmul.mubr.f32.gmra.mrb[0].mxu0 %v998
    %v1071 = vpop.f32.mrb[0].mxu0
    %v1072 = vadd.f32 0.0, %v1071
    %v1073 = vpop.f32.mrb[0].mxu0
    %1074 = vdwg.mxu0
    %v1075 = vadd.f32 %v791, %v1067
    %v1076 = vadd.f32 %v792, %v1072
    %1077 = vrot.lane.b32.xlu0 %v130, 104
    %v1078 = vpop.permute.xlu0 %1077
    %1079 = vrot.lane.b32.xlu0 %v135, 104
    %v1080 = vpop.permute.xlu0 %1079
    %1081 = vrot.lane.b32.xlu0 %v130, 72
    %v1082 = vpop.permute.xlu0 %1081
    %1083 = vrot.lane.b32.xlu0 %v135, 72
    %v1084 = vpop.permute.xlu0 %1083
    %v1085 = vsel %vm233, %v1078, 0
    %v1087 = vsel %vm233, %v1080, 0
    %v1089 = vsel %vm233, %v1082, 0
    %v1091 = vsel %vm233, %v1084, 0
    %1093 = vmatprep.subr.mxu0 0.0
    %1094 = vmatpush1.xpose.msra.mxu0 %v1089
    %1095 = vmatprep.subr.mxu0 0.0
    %1096 = vmatpush1.xpose.msra.mxu0 %v1091
    %1097 = vmatprep.subr.mxu0 0.0
    %1098 = vmatpush1.xpose.msra.mxu0 0.0
    %1099 = vmatprep.subr.mxu0 0.0
    %1100 = vmatpush1.xpose.msra.mxu0 0.0
    %1101 = vmatprep.subr.mxu0 0.0
    %1102 = vmatpush1.xpose.msra.mxu0 0.0
    %1103 = vmatprep.subr.mxu0 0.0
    %1104 = vmatpush1.xpose.msra.mxu0 0.0
    %1105 = vmatprep.subr.mxu0 0.0
    %1106 = vmatpush1.xpose.msra.mxu0 0.0
    %1107 = vmatprep.subr.mxu0 0.0
    %1108 = vmatpush1.xpose.msra.mxu0 0.0
    %1109 = vmatprep.subr.mxu0 0.0
    %1110 = vmatpush1.xpose.msra.mxu0 0.0
    %1111 = vmatprep.subr.mxu0 0.0
    %1112 = vmatpush1.xpose.msra.mxu0 0.0
    %1113 = vmatprep.subr.mxu0 0.0
    %1114 = vmatpush1.xpose.msra.mxu0 0.0
    %1115 = vmatprep.subr.mxu0 0.0
    %1116 = vmatpush1.xpose.msra.mxu0 0.0
    %1117 = vmatprep.subr.mxu0 0.0
    %1118 = vmatpush1.xpose.msra.mxu0 0.0
    %1119 = vmatprep.subr.mxu0 0.0
    %1120 = vmatpush1.xpose.msra.mxu0 0.0
    %1121 = vmatprep.subr.mxu0 0.0
    %1122 = vmatpush1.xpose.msra.mxu0 0.0
    %1123 = vmatprep.subr.mxu0 0.0
    %1124 = vmatpush1.xpose.msra.mxu0 0.0
    %1125 = vmatprep.subr.mxu0 0.0
    %1126 = vmatpush1.xpose.msra.mxu0 0.0
    %1127 = vmatprep.subr.mxu0 0.0
    %1128 = vmatpush1.xpose.msra.mxu0 0.0
    %1129 = vmatprep.subr.mxu0 0.0
    %1130 = vmatpush1.xpose.msra.mxu0 0.0
    %1131 = vmatprep.subr.mxu0 0.0
    %1132 = vmatpush1.xpose.msra.mxu0 0.0
    %1133 = vmatprep.subr.mxu0 0.0
    %1134 = vmatpush1.xpose.msra.mxu0 0.0
    %1135 = vmatprep.subr.mxu0 0.0
    %1136 = vmatpush1.xpose.msra.mxu0 0.0
    %1137 = vmatprep.subr.mxu0 0.0
    %1138 = vmatpush1.xpose.msra.mxu0 0.0
    %1139 = vmatprep.subr.mxu0 0.0
    %1140 = vmatpush1.xpose.msra.mxu0 0.0
    %1141 = vmatprep.subr.mxu0 0.0
    %1142 = vmatpush1.xpose.msra.mxu0 0.0
    %1143 = vmatprep.subr.mxu0 0.0
    %1144 = vmatpush1.xpose.msra.mxu0 0.0
    %1145 = vmatprep.subr.mxu0 0.0
    %1146 = vmatpush1.xpose.msra.mxu0 0.0
    %1147 = vmatprep.subr.mxu0 0.0
    %1148 = vmatpush1.xpose.msra.mxu0 0.0
    %1149 = vmatprep.subr.mxu0 0.0
    %1150 = vmatpush1.xpose.msra.mxu0 0.0
    %1151 = vmatprep.subr.mxu0 0.0
    %1152 = vmatpush1.xpose.msra.mxu0 0.0
    %1153 = vmatprep.subr.mxu0 0.0
    %1154 = vmatpush1.xpose.msra.mxu0 0.0
    %1155 = vmatprep.subr.mxu0 0.0
    %1156 = vmatpush1.xpose.msra.mxu0 0.0
    %1157 = vmatprep.mubr.f32.mxu0 0.0
    %1158 = vmatmul.mubr.f32.gmra.mrb[0].mxu0 %v1085
    %v1159 = vpop.f32.mrb[0].mxu0
    %v1160 = vadd.f32 %v35, %v1159
    %v1161 = vpop.f32.mrb[0].mxu0
    %1162 = vmatprep.mubr.f32.mxu0 0.0
    %1163 = vmatmul.mubr.f32.gmra.mrb[0].mxu0 %v1087
    %v1164 = vpop.f32.mrb[0].mxu0
    %v1165 = vadd.f32 %v36, %v1164
    %v1166 = vpop.f32.mrb[0].mxu0
    %1167 = vdwg.mxu0
    %v1168 = vsel %vm317, %v1160, -inf
    %1169 = vmax.xlane.f32.xlu0 %v1168
    %v1170 = vpop.xlane.xlu0 %1169
    %v1171 = vsel %vm317, %v1165, -inf
    %1172 = vmax.xlane.f32.xlu0 %v1171
    %v1173 = vpop.xlane.xlu0 %1172
    %v1174 = vsub.f32 %v1160, %v1170
    %v1175 = vsub.f32 %v1165, %v1173
    %v1176 = vmul.f32 %v1174, 1.442695
    %v1177 = vpow.pop %v1176
    %v1178 = vmul.f32 %v1175, 1.442695
    %v1179 = vpow.pop %v1178
    %v1180 = vsel %vm317, %v1177, 0.0
    %1181 = vadd.xlane.f32.xlu0 %v1180
    %v1182 = vpop.xlane.xlu0 %1181
    %v1183 = vsel %vm317, %v1179, 0.0
    %1184 = vadd.xlane.f32.xlu0 %v1183
    %v1185 = vpop.xlane.xlu0 %1184
    %v1186 = vrcp.pop %v1182
    %v1187 = vmul.f32 %v1177, %v1186
    %v1188 = vrcp.pop %v1185
    %v1189 = vmul.f32 %v1179, %v1188
    %1190 = vrot.lane.b32.xlu0 %v219, 104
    %v1191 = vpop.permute.xlu0 %1190
    %1192 = vrot.lane.b32.xlu0 %v224, 104
    %v1193 = vpop.permute.xlu0 %1192
    %v1197 = vsel %vm317, %v1187, 0
    %v1200 = vsel %vm317, %v1189, 0
    %1202 = vmatprep.subr.mxu0 0.0
    %1203 = vmatpush1.msra.mxu0 %v1191
    %1204 = vmatprep.subr.mxu0 0.0
    %1205 = vmatpush1.msra.mxu0 %v1193
    %1206 = vmatprep.subr.mxu0 0.0
    %1207 = vmatpush1.msra.mxu0 0.0
    %1208 = vmatprep.subr.mxu0 0.0
    %1209 = vmatpush1.msra.mxu0 0.0
    %1210 = vmatprep.subr.mxu0 0.0
    %1211 = vmatpush1.msra.mxu0 0.0
    %1212 = vmatprep.subr.mxu0 0.0
    %1213 = vmatpush1.msra.mxu0 0.0
    %1214 = vmatprep.subr.mxu0 0.0
    %1215 = vmatpush1.msra.mxu0 0.0
    %1216 = vmatprep.subr.mxu0 0.0
    %1217 = vmatpush1.msra.mxu0 0.0
    %1218 = vmatprep.subr.mxu0 0.0
    %1219 = vmatpush1.msra.mxu0 0.0
    %1220 = vmatprep.subr.mxu0 0.0
    %1221 = vmatpush1.msra.mxu0 0.0
    %1222 = vmatprep.subr.mxu0 0.0
    %1223 = vmatpush1.msra.mxu0 0.0
    %1224 = vmatprep.subr.mxu0 0.0
    %1225 = vmatpush1.msra.mxu0 0.0
    %1226 = vmatprep.subr.mxu0 0.0
    %1227 = vmatpush1.msra.mxu0 0.0
    %1228 = vmatprep.subr.mxu0 0.0
    %1229 = vmatpush1.msra.mxu0 0.0
    %1230 = vmatprep.subr.mxu0 0.0
    %1231 = vmatpush1.msra.mxu0 0.0
    %1232 = vmatprep.subr.mxu0 0.0
    %1233 = vmatpush1.msra.mxu0 0.0
    %1234 = vmatprep.subr.mxu0 0.0
    %1235 = vmatpush1.msra.mxu0 0.0
    %1236 = vmatprep.subr.mxu0 0.0
    %1237 = vmatpush1.msra.mxu0 0.0
    %1238 = vmatprep.subr.mxu0 0.0
    %1239 = vmatpush1.msra.mxu0 0.0
    %1240 = vmatprep.subr.mxu0 0.0
    %1241 = vmatpush1.msra.mxu0 0.0
    %1242 = vmatprep.subr.mxu0 0.0
    %1243 = vmatpush1.msra.mxu0 0.0
    %1244 = vmatprep.subr.mxu0 0.0
    %1245 = vmatpush1.msra.mxu0 0.0
    %1246 = vmatprep.subr.mxu0 0.0
    %1247 = vmatpush1.msra.mxu0 0.0
    %1248 = vmatprep.subr.mxu0 0.0
    %1249 = vmatpush1.msra.mxu0 0.0
    %1250 = vmatprep.subr.mxu0 0.0
    %1251 = vmatpush1.msra.mxu0 0.0
    %1252 = vmatprep.subr.mxu0 0.0
    %1253 = vmatpush1.msra.mxu0 0.0
    %1254 = vmatprep.subr.mxu0 0.0
    %1255 = vmatpush1.msra.mxu0 0.0
    %1256 = vmatprep.subr.mxu0 0.0
    %1257 = vmatpush1.msra.mxu0 0.0
    %1258 = vmatprep.subr.mxu0 0.0
    %1259 = vmatpush1.msra.mxu0 0.0
    %1260 = vmatprep.subr.mxu0 0.0
    %1261 = vmatpush1.msra.mxu0 0.0
    %1262 = vmatprep.subr.mxu0 0.0
    %1263 = vmatpush1.msra.mxu0 0.0
    %1264 = vmatprep.subr.mxu0 0.0
    %1265 = vmatpush1.msra.mxu0 0.0
    %1266 = vmatprep.mubr.f32.mxu0 0.0
    %1267 = vmatmul.mubr.f32.gmra.mrb[0].mxu0 %v1197
    %v1268 = vpop.f32.mrb[0].mxu0
    %v1269 = vadd.f32 0.0, %v1268
    %v1270 = vpop.f32.mrb[0].mxu0
    %1271 = vmatprep.mubr.f32.mxu0 0.0
    %1272 = vmatmul.mubr.f32.gmra.mrb[0].mxu0 %v1200
    %v1273 = vpop.f32.mrb[0].mxu0
    %v1274 = vadd.f32 0.0, %v1273
    %v1275 = vpop.f32.mrb[0].mxu0
    %1276 = vdwg.mxu0
    %v1277 = vld [vmem:[%s3 + $0x38] sm:$0xff]
    %v1279 = vsel %vm233, %v1269, 0
    %v1282 = vsel %vm233, %v1274, 0
    %1284 = vmatprep.subr.mxu0 0.0
    %1285 = vmatpush1.msra.mxu0 %v1277
    %1286 = vmatprep.subr.mxu0 0.0
    %1287 = vmatpush1.msra.mxu0 0.0
    %1288 = vmatprep.subr.mxu0 0.0
    %1289 = vmatpush1.msra.mxu0 0.0
    %1290 = vmatprep.subr.mxu0 0.0
    %1291 = vmatpush1.msra.mxu0 0.0
    %1292 = vmatprep.subr.mxu0 0.0
    %1293 = vmatpush1.msra.mxu0 0.0
    %1294 = vmatprep.subr.mxu0 0.0
    %1295 = vmatpush1.msra.mxu0 0.0
    %1296 = vmatprep.subr.mxu0 0.0
    %1297 = vmatpush1.msra.mxu0 0.0
    %1298 = vmatprep.subr.mxu0 0.0
    %1299 = vmatpush1.msra.mxu0 0.0
    %1300 = vmatprep.subr.mxu0 0.0
    %1301 = vmatpush1.msra.mxu0 0.0
    %1302 = vmatprep.subr.mxu0 0.0
    %1303 = vmatpush1.msra.mxu0 0.0
    %1304 = vmatprep.subr.mxu0 0.0
    %1305 = vmatpush1.msra.mxu0 0.0
    %1306 = vmatprep.subr.mxu0 0.0
    %1307 = vmatpush1.msra.mxu0 0.0
    %1308 = vmatprep.subr.mxu0 0.0
    %1309 = vmatpush1.msra.mxu0 0.0
    %1310 = vmatprep.subr.mxu0 0.0
    %1311 = vmatpush1.msra.mxu0 0.0
    %1312 = vmatprep.subr.mxu0 0.0
    %1313 = vmatpush1.msra.mxu0 0.0
    %1314 = vmatprep.subr.mxu0 0.0
    %1315 = vmatpush1.msra.mxu0 0.0
    %1316 = vmatprep.subr.mxu0 0.0
    %1317 = vmatpush1.msra.mxu0 0.0
    %1318 = vmatprep.subr.mxu0 0.0
    %1319 = vmatpush1.msra.mxu0 0.0
    %1320 = vmatprep.subr.mxu0 0.0
    %1321 = vmatpush1.msra.mxu0 0.0
    %1322 = vmatprep.subr.mxu0 0.0
    %1323 = vmatpush1.msra.mxu0 0.0
    %1324 = vmatprep.subr.mxu0 0.0
    %1325 = vmatpush1.msra.mxu0 0.0
    %1326 = vmatprep.subr.mxu0 0.0
    %1327 = vmatpush1.msra.mxu0 0.0
    %1328 = vmatprep.subr.mxu0 0.0
    %1329 = vmatpush1.msra.mxu0 0.0
    %1330 = vmatprep.subr.mxu0 0.0
    %1331 = vmatpush1.msra.mxu0 0.0
    %1332 = vmatprep.subr.mxu0 0.0
    %1333 = vmatpush1.msra.mxu0 0.0
    %1334 = vmatprep.subr.mxu0 0.0
    %1335 = vmatpush1.msra.mxu0 0.0
    %1336 = vmatprep.subr.mxu0 0.0
    %1337 = vmatpush1.msra.mxu0 0.0
    %1338 = vmatprep.subr.mxu0 0.0
    %1339 = vmatpush1.msra.mxu0 0.0
    %1340 = vmatprep.subr.mxu0 0.0
    %1341 = vmatpush1.msra.mxu0 0.0
    %1342 = vmatprep.subr.mxu0 0.0
    %1343 = vmatpush1.msra.mxu0 0.0
    %1344 = vmatprep.subr.mxu0 0.0
    %1345 = vmatpush1.msra.mxu0 0.0
    %1346 = vmatprep.subr.mxu0 0.0
    %1347 = vmatpush1.msra.mxu0 0.0
    %1348 = vmatprep.mubr.f32.mxu0 0.0
    %1349 = vmatmul.mubr.f32.gmra.mrb[0].mxu0 %v1279
    %v1350 = vpop.f32.mrb[0].mxu0
    %v1351 = vadd.f32 0.0, %v1350
    %v1352 = vpop.f32.mrb[0].mxu0
    %1353 = vmatprep.mubr.f32.mxu0 0.0
    %1354 = vmatmul.mubr.f32.gmra.mrb[0].mxu0 %v1282
    %v1355 = vpop.f32.mrb[0].mxu0
    %v1356 = vadd.f32 0.0, %v1355
    %v1357 = vpop.f32.mrb[0].mxu0
    %1358 = vdwg.mxu0
    %v1359 = vadd.f32 %v1075, %v1351
    %v1360 = vadd.f32 %v1076, %v1356
    %v1361 = vadd.f32 %v21, %v1359
    %v1362 = vadd.f32 %v22, %v1360
    %v1363 = vsel %vm56, %v1361, 0.0
    %1364 = vadd.xlane.f32.xlu0 %v1363
    %v1365 = vpop.xlane.xlu0 %1364
    %v1366 = vsel %vm56, %v1362, 0.0
    %1367 = vadd.xlane.f32.xlu0 %v1366
    %v1368 = vpop.xlane.xlu0 %1367
    %v1369 = vrcp.pop 32.0
    %v1370 = vmul.f32 %v1365, %v1369
    %v1371 = vmul.f32 %v1368, %v1369
    %v1372 = vsub.f32 %v1361, %v1370
    %v1373 = vsub.f32 %v1362, %v1371
    %v1374 = vmul.f32 %v1372, %v1372
    %v1375 = vmul.f32 %v1373, %v1373
    %v1376 = vsel %vm56, %v1374, 0.0
    %1377 = vadd.xlane.f32.xlu0 %v1376
    %v1378 = vpop.xlane.xlu0 %1377
    %v1379 = vsel %vm56, %v1375, 0.0
    %1380 = vadd.xlane.f32.xlu0 %v1379
    %v1381 = vpop.xlane.xlu0 %1380
    %v1382 = vmul.f32 %v1378, %v1369
    %v1383 = vmul.f32 %v1381, %v1369
    %v1384 = vadd.f32 %v1382, 1e-05
    %v1385 = vadd.f32 %v1383, 1e-05
    %v1386 = vrsqrt.pop %v1384
    %v1387 = vrsqrt.pop %v1385
    %v1388 = vmul.f32 %v1372, %v1386
    %v1389 = vmul.f32 %v1373, %v1387
    %v1390 = vlaneseq
    %v1391 = vshrl.u32 %v1390, 7
    %v1392 = vsub.s32 0, %v1391
    %v1393 = vrot.slane %v42, %v1392
    %v1394 = vmul.f32 %v1388, %v1393
    %v1395 = vmul.f32 %v1389, %v1393
    %v1396 = vlaneseq
    %v1397 = vshrl.u32 %v1396, 7
    %v1398 = vsub.s32 0, %v1397
    %v1399 = vrot.slane %v43, %v1398
    %v1400 = vadd.f32 %v1394, %v1399
    %v1401 = vadd.f32 %v1395, %v1399
    %v1402 = vld [vmem:[%s2 + $0x20] sm:$0xff]
    %v1403 = vld [vmem:[%s2 + $0x28] sm:$0xff]
    %v1404 = vld [vmem:[%s2 + $0x30] sm:$0xff]
    %v1405 = vld [vmem:[%s2 + $0x38] sm:$0xff]
    %v1406 = vld [vmem:[%s3 + $0x40] sm:$0xff]
    %v1407 = vld [vmem:[%s3 + $0x48] sm:$0xff]
    %v1408 = vld [vmem:[%s3 + $0x50] sm:$0xff]
    %v1409 = vld [vmem:[%s3 + $0x58] sm:$0xff]
    %v1410 = vld [vmem:[%s3 + $0x60] sm:$0xff]
    %v1411 = vld [vmem:[%s3 + $0x68] sm:$0xff]
    %v1412 = vld [vmem:[%s3 + $0x70] sm:$0xff]
    %v1413 = vld [vmem:[%s3 + $0x78] sm:$0xff]
    %v1414 = vlaneseq
    %v1415 = vshrl.u32 %v1414, 7
    %v1416 = vsub.s32 0, %v1415
    %v1417 = vrot.slane %v38, %v1416
    %v1419 = vsel %vm56, %v1400, 0
    %v1422 = vsel %vm56, %v1401, 0
    %1424 = vmatprep.subr.mxu0 0.0
    %1425 = vmatpush1.msra.mxu0 %v1402
    %1426 = vmatprep.subr.mxu0 0.0
    %1427 = vmatpush1.msra.mxu0 %v1403
    %1428 = vmatprep.subr.mxu0 0.0
    %1429 = vmatpush1.msra.mxu0 %v1404
    %1430 = vmatprep.subr.mxu0 0.0
    %1431 = vmatpush1.msra.mxu0 %v1405
    %1432 = vmatprep.subr.mxu0 0.0
    %1433 = vmatpush1.msra.mxu0 0.0
    %1434 = vmatprep.subr.mxu0 0.0
    %1435 = vmatpush1.msra.mxu0 0.0
    %1436 = vmatprep.subr.mxu0 0.0
    %1437 = vmatpush1.msra.mxu0 0.0
    %1438 = vmatprep.subr.mxu0 0.0
    %1439 = vmatpush1.msra.mxu0 0.0
    %1440 = vmatprep.subr.mxu0 0.0
    %1441 = vmatpush1.msra.mxu0 0.0
    %1442 = vmatprep.subr.mxu0 0.0
    %1443 = vmatpush1.msra.mxu0 0.0
    %1444 = vmatprep.subr.mxu0 0.0
    %1445 = vmatpush1.msra.mxu0 0.0
    %1446 = vmatprep.subr.mxu0 0.0
    %1447 = vmatpush1.msra.mxu0 0.0
    %1448 = vmatprep.subr.mxu0 0.0
    %1449 = vmatpush1.msra.mxu0 0.0
    %1450 = vmatprep.subr.mxu0 0.0
    %1451 = vmatpush1.msra.mxu0 0.0
    %1452 = vmatprep.subr.mxu0 0.0
    %1453 = vmatpush1.msra.mxu0 0.0
    %1454 = vmatprep.subr.mxu0 0.0
    %1455 = vmatpush1.msra.mxu0 0.0
    %1456 = vmatprep.subr.mxu0 0.0
    %1457 = vmatpush1.msra.mxu0 0.0
    %1458 = vmatprep.subr.mxu0 0.0
    %1459 = vmatpush1.msra.mxu0 0.0
    %1460 = vmatprep.subr.mxu0 0.0
    %1461 = vmatpush1.msra.mxu0 0.0
    %1462 = vmatprep.subr.mxu0 0.0
    %1463 = vmatpush1.msra.mxu0 0.0
    %1464 = vmatprep.subr.mxu0 0.0
    %1465 = vmatpush1.msra.mxu0 0.0
    %1466 = vmatprep.subr.mxu0 0.0
    %1467 = vmatpush1.msra.mxu0 0.0
    %1468 = vmatprep.subr.mxu0 0.0
    %1469 = vmatpush1.msra.mxu0 0.0
    %1470 = vmatprep.subr.mxu0 0.0
    %1471 = vmatpush1.msra.mxu0 0.0
    %1472 = vmatprep.subr.mxu0 0.0
    %1473 = vmatpush1.msra.mxu0 0.0
    %1474 = vmatprep.subr.mxu0 0.0
    %1475 = vmatpush1.msra.mxu0 0.0
    %1476 = vmatprep.subr.mxu0 0.0
    %1477 = vmatpush1.msra.mxu0 0.0
    %1478 = vmatprep.subr.mxu0 0.0
    %1479 = vmatpush1.msra.mxu0 0.0
    %1480 = vmatprep.subr.mxu0 0.0
    %1481 = vmatpush1.msra.mxu0 0.0
    %1482 = vmatprep.subr.mxu0 0.0
    %1483 = vmatpush1.msra.mxu0 0.0
    %1484 = vmatprep.subr.mxu0 0.0
    %1485 = vmatpush1.msra.mxu0 0.0
    %1486 = vmatprep.subr.mxu0 0.0
    %1487 = vmatpush1.msra.mxu0 0.0
    %1488 = vmatprep.mubr.f32.mxu0 0.0
    %1489 = vmatmul.mubr.f32.gmra.mrb[0].mxu0 %v1419
    %v1490 = vpop.f32.mrb[0].mxu0
    %v1491 = vadd.f32 %v1417, %v1490
    %v1492 = vpop.f32.mrb[0].mxu0
    %1493 = vmatprep.mubr.f32.mxu0 0.0
    %1494 = vmatmul.mubr.f32.gmra.mrb[0].mxu0 %v1422
    %v1495 = vpop.f32.mrb[0].mxu0
    %v1496 = vadd.f32 %v1417, %v1495
    %v1497 = vpop.f32.mrb[0].mxu0
    %1498 = vdwg.mxu0
    %v1499 = vmax.f32 %v1491, 0.0
    %v1500 = vmax.f32 %v1496, 0.0
    %v1501 = vlaneseq
    %v1502 = vshrl.u32 %v1501, 7
    %v1503 = vsub.s32 0, %v1502
    %v1504 = vrot.slane %v41, %v1503
    %vm1505 = vcmask 523264
    %v1507 = vsel %vm1505, %v1499, 0
    %v1510 = vsel %vm1505, %v1500, 0
    %1512 = vmatprep.subr.mxu0 0.0
    %1513 = vmatpush1.msra.mxu0 %v1406
    %1514 = vmatprep.subr.mxu0 0.0
    %1515 = vmatpush1.msra.mxu0 %v1407
    %1516 = vmatprep.subr.mxu0 0.0
    %1517 = vmatpush1.msra.mxu0 %v1408
    %1518 = vmatprep.subr.mxu0 0.0
    %1519 = vmatpush1.msra.mxu0 %v1409
    %1520 = vmatprep.subr.mxu0 0.0
    %1521 = vmatpush1.msra.mxu0 %v1410
    %1522 = vmatprep.subr.mxu0 0.0
    %1523 = vmatpush1.msra.mxu0 %v1411
    %1524 = vmatprep.subr.mxu0 0.0
    %1525 = vmatpush1.msra.mxu0 %v1412
    %1526 = vmatprep.subr.mxu0 0.0
    %1527 = vmatpush1.msra.mxu0 %v1413
    %1528 = vmatprep.subr.mxu0 0.0
    %1529 = vmatpush1.msra.mxu0 0.0
    %1530 = vmatprep.subr.mxu0 0.0
    %1531 = vmatpush1.msra.mxu0 0.0
    %1532 = vmatprep.subr.mxu0 0.0
    %1533 = vmatpush1.msra.mxu0 0.0
    %1534 = vmatprep.subr.mxu0 0.0
    %1535 = vmatpush1.msra.mxu0 0.0
    %1536 = vmatprep.subr.mxu0 0.0
    %1537 = vmatpush1.msra.mxu0 0.0
    %1538 = vmatprep.subr.mxu0 0.0
    %1539 = vmatpush1.msra.mxu0 0.0
    %1540 = vmatprep.subr.mxu0 0.0
    %1541 = vmatpush1.msra.mxu0 0.0
    %1542 = vmatprep.subr.mxu0 0.0
    %1543 = vmatpush1.msra.mxu0 0.0
    %1544 = vmatprep.subr.mxu0 0.0
    %1545 = vmatpush1.msra.mxu0 0.0
    %1546 = vmatprep.subr.mxu0 0.0
    %1547 = vmatpush1.msra.mxu0 0.0
    %1548 = vmatprep.subr.mxu0 0.0
    %1549 = vmatpush1.msra.mxu0 0.0
    %1550 = vmatprep.subr.mxu0 0.0
    %1551 = vmatpush1.msra.mxu0 0.0
    %1552 = vmatprep.subr.mxu0 0.0
    %1553 = vmatpush1.msra.mxu0 0.0
    %1554 = vmatprep.subr.mxu0 0.0
    %1555 = vmatpush1.msra.mxu0 0.0
    %1556 = vmatprep.subr.mxu0 0.0
    %1557 = vmatpush1.msra.mxu0 0.0
    %1558 = vmatprep.subr.mxu0 0.0
    %1559 = vmatpush1.msra.mxu0 0.0
    %1560 = vmatprep.subr.mxu0 0.0
    %1561 = vmatpush1.msra.mxu0 0.0
    %1562 = vmatprep.subr.mxu0 0.0
    %1563 = vmatpush1.msra.mxu0 0.0
    %1564 = vmatprep.subr.mxu0 0.0
    %1565 = vmatpush1.msra.mxu0 0.0
    %1566 = vmatprep.subr.mxu0 0.0
    %1567 = vmatpush1.msra.mxu0 0.0
    %1568 = vmatprep.subr.mxu0 0.0
    %1569 = vmatpush1.msra.mxu0 0.0
    %1570 = vmatprep.subr.mxu0 0.0
    %1571 = vmatpush1.msra.mxu0 0.0
    %1572 = vmatprep.subr.mxu0 0.0
    %1573 = vmatpush1.msra.mxu0 0.0
    %1574 = vmatprep.subr.mxu0 0.0
    %1575 = vmatpush1.msra.mxu0 0.0
    %1576 = vmatprep.mubr.f32.mxu0 0.0
    %1577 = vmatmul.mubr.f32.gmra.mrb[0].mxu0 %v1507
    %v1578 = vpop.f32.mrb[0].mxu0
    %v1579 = vadd.f32 %v1504, %v1578
    %v1580 = vpop.f32.mrb[0].mxu0
    %1581 = vmatprep.mubr.f32.mxu0 0.0
    %1582 = vmatmul.mubr.f32.gmra.mrb[0].mxu0 %v1510
    %v1583 = vpop.f32.mrb[0].mxu0
    %v1584 = vadd.f32 %v1504, %v1583
    %v1585 = vpop.f32.mrb[0].mxu0
    %1586 = vdwg.mxu0
    %v1587 = vadd.f32 %v1400, %v1579
    %v1588 = vadd.f32 %v1401, %v1584
    %v1589 = vsel %vm56, %v1587, 0.0
    %1590 = vadd.xlane.f32.xlu0 %v1589
    %v1591 = vpop.xlane.xlu0 %1590
    %v1592 = vsel %vm56, %v1588, 0.0
    %1593 = vadd.xlane.f32.xlu0 %v1592
    %v1594 = vpop.xlane.xlu0 %1593
    %v1595 = vmul.f32 %v1591, %v1369
    %v1596 = vmul.f32 %v1594, %v1369
    %v1597 = vsub.f32 %v1587, %v1595
    %v1598 = vsub.f32 %v1588, %v1596
    %v1599 = vmul.f32 %v1597, %v1597
    %v1600 = vmul.f32 %v1598, %v1598
    %v1601 = vsel %vm56, %v1599, 0.0
    %1602 = vadd.xlane.f32.xlu0 %v1601
    %v1603 = vpop.xlane.xlu0 %1602
    %v1604 = vsel %vm56, %v1600, 0.0
    %1605 = vadd.xlane.f32.xlu0 %v1604
    %v1606 = vpop.xlane.xlu0 %1605
    %v1607 = vmul.f32 %v1603, %v1369
    %v1608 = vmul.f32 %v1606, %v1369
    %v1609 = vadd.f32 %v1607, 1e-05
    %v1610 = vadd.f32 %v1608, 1e-05
    %v1611 = vrsqrt.pop %v1609
    %v1612 = vrsqrt.pop %v1610
    %v1613 = vmul.f32 %v1597, %v1611
    %v1614 = vmul.f32 %v1598, %v1612
    %v1615 = vlaneseq
    %v1616 = vshrl.u32 %v1615, 7
    %v1617 = vsub.s32 0, %v1616
    %v1618 = vrot.slane %v44, %v1617
    %v1619 = vmul.f32 %v1613, %v1618
    %v1620 = vmul.f32 %v1614, %v1618
    %v1621 = vlaneseq
    %v1622 = vshrl.u32 %v1621, 7
    %v1623 = vsub.s32 0, %v1622
    %v1624 = vrot.slane %v45, %v1623
    %v1625 = vadd.f32 %v1619, %v1624
    %v1626 = vadd.f32 %v1620, %v1624
    %v1627 = vld [vmem:[%s4 + $0x10] sm:$0x1]
    %v1628 = vld [vmem:[%s4 + $0x11] sm:$0x1]
    %v1629 = vld [vmem:[%s4 + $0x12] sm:$0x1]
    %v1630 = vld [vmem:[%s4 + $0x13] sm:$0x1]
    %v1631 = vld [vmem:[%s4 + $0x14] sm:$0x1]
    %v1632 = vld [vmem:[%s4 + $0x15] sm:$0x1]
    %v1633 = vld [vmem:[%s4 + $0x16] sm:$0x1]
    %v1634 = vld [vmem:[%s4 + $0x17] sm:$0x1]
    %v1635 = vld [vmem:[%s4 + $0x18] sm:$0x1]
    %v1636 = vadd.f32 %v1625, %v23
    %v1637 = vadd.f32 %v1626, %v24
    %v1638 = vld [vmem:[%s2 + $0x40] sm:$0xff]
    %v1639 = vld [vmem:[%s2 + $0x48] sm:$0xff]
    %v1640 = vld [vmem:[%s2 + $0x50] sm:$0xff]
    %v1641 = vld [vmem:[%s2 + $0x58] sm:$0xff]
    %v1642 = vlaneseq
    %v1643 = vshrl.u32 %v1642, 7
    %v1644 = vsub.s32 0, %v1643
    %v1645 = vrot.slane %v1627, %v1644
    %v1647 = vsel %vm56, %v1636, 0
    %v1650 = vsel %vm56, %v1637, 0
    %1652 = vmatprep.subr.mxu0 0.0
    %1653 = vmatpush1.msra.mxu0 %v1638
    %1654 = vmatprep.subr.mxu0 0.0
    %1655 = vmatpush1.msra.mxu0 %v1639
    %1656 = vmatprep.subr.mxu0 0.0
    %1657 = vmatpush1.msra.mxu0 %v1640
    %1658 = vmatprep.subr.mxu0 0.0
    %1659 = vmatpush1.msra.mxu0 %v1641
    %1660 = vmatprep.subr.mxu0 0.0
    %1661 = vmatpush1.msra.mxu0 0.0
    %1662 = vmatprep.subr.mxu0 0.0
    %1663 = vmatpush1.msra.mxu0 0.0
    %1664 = vmatprep.subr.mxu0 0.0
    %1665 = vmatpush1.msra.mxu0 0.0
    %1666 = vmatprep.subr.mxu0 0.0
    %1667 = vmatpush1.msra.mxu0 0.0
    %1668 = vmatprep.subr.mxu0 0.0
    %1669 = vmatpush1.msra.mxu0 0.0
    %1670 = vmatprep.subr.mxu0 0.0
    %1671 = vmatpush1.msra.mxu0 0.0
    %1672 = vmatprep.subr.mxu0 0.0
    %1673 = vmatpush1.msra.mxu0 0.0
    %1674 = vmatprep.subr.mxu0 0.0
    %1675 = vmatpush1.msra.mxu0 0.0
    %1676 = vmatprep.subr.mxu0 0.0
    %1677 = vmatpush1.msra.mxu0 0.0
    %1678 = vmatprep.subr.mxu0 0.0
    %1679 = vmatpush1.msra.mxu0 0.0
    %1680 = vmatprep.subr.mxu0 0.0
    %1681 = vmatpush1.msra.mxu0 0.0
    %1682 = vmatprep.subr.mxu0 0.0
    %1683 = vmatpush1.msra.mxu0 0.0
    %1684 = vmatprep.subr.mxu0 0.0
    %1685 = vmatpush1.msra.mxu0 0.0
    %1686 = vmatprep.subr.mxu0 0.0
    %1687 = vmatpush1.msra.mxu0 0.0
    %1688 = vmatprep.subr.mxu0 0.0
    %1689 = vmatpush1.msra.mxu0 0.0
    %1690 = vmatprep.subr.mxu0 0.0
    %1691 = vmatpush1.msra.mxu0 0.0
    %1692 = vmatprep.subr.mxu0 0.0
    %1693 = vmatpush1.msra.mxu0 0.0
    %1694 = vmatprep.subr.mxu0 0.0
    %1695 = vmatpush1.msra.mxu0 0.0
    %1696 = vmatprep.subr.mxu0 0.0
    %1697 = vmatpush1.msra.mxu0 0.0
    %1698 = vmatprep.subr.mxu0 0.0
    %1699 = vmatpush1.msra.mxu0 0.0
    %1700 = vmatprep.subr.mxu0 0.0
    %1701 = vmatpush1.msra.mxu0 0.0
    %1702 = vmatprep.subr.mxu0 0.0
    %1703 = vmatpush1.msra.mxu0 0.0
    %1704 = vmatprep.subr.mxu0 0.0
    %1705 = vmatpush1.msra.mxu0 0.0
    %1706 = vmatprep.subr.mxu0 0.0
    %1707 = vmatpush1.msra.mxu0 0.0
    %1708 = vmatprep.subr.mxu0 0.0
    %1709 = vmatpush1.msra.mxu0 0.0
    %1710 = vmatprep.subr.mxu0 0.0
    %1711 = vmatpush1.msra.mxu0 0.0
    %1712 = vmatprep.subr.mxu0 0.0
    %1713 = vmatpush1.msra.mxu0 0.0
    %1714 = vmatprep.subr.mxu0 0.0
    %1715 = vmatpush1.msra.mxu0 0.0
    %1716 = vmatprep.mubr.f32.mxu0 0.0
    %1717 = vmatmul.mubr.f32.gmra.mrb[0].mxu0 %v1647
    %v1718 = vpop.f32.mrb[0].mxu0
    %v1719 = vadd.f32 %v1645, %v1718
    %v1720 = vpop.f32.mrb[0].mxu0
    %1721 = vmatprep.mubr.f32.mxu0 0.0
    %1722 = vmatmul.mubr.f32.gmra.mrb[0].mxu0 %v1650
    %v1723 = vpop.f32.mrb[0].mxu0
    %v1724 = vadd.f32 %v1645, %v1723
    %v1725 = vpop.f32.mrb[0].mxu0
    %1726 = vdwg.mxu0
    %v1727 = vld [vmem:[%s3 + $0x80] sm:$0xff]
    %v1728 = vld [vmem:[%s3 + $0x88] sm:$0xff]
    %v1729 = vld [vmem:[%s3 + $0x90] sm:$0xff]
    %v1730 = vld [vmem:[%s3 + $0x98] sm:$0xff]
    %v1731 = vlaneseq
    %v1732 = vshrl.u32 %v1731, 7
    %v1733 = vsub.s32 0, %v1732
    %v1734 = vrot.slane %v1629, %v1733
    %v1736 = vsel %vm56, %v1625, 0
    %v1739 = vsel %vm56, %v1626, 0
    %1741 = vmatprep.subr.mxu0 0.0
    %1742 = vmatpush1.msra.mxu0 %v1727
    %1743 = vmatprep.subr.mxu0 0.0
    %1744 = vmatpush1.msra.mxu0 %v1728
    %1745 = vmatprep.subr.mxu0 0.0
    %1746 = vmatpush1.msra.mxu0 %v1729
    %1747 = vmatprep.subr.mxu0 0.0
    %1748 = vmatpush1.msra.mxu0 %v1730
    %1749 = vmatprep.subr.mxu0 0.0
    %1750 = vmatpush1.msra.mxu0 0.0
    %1751 = vmatprep.subr.mxu0 0.0
    %1752 = vmatpush1.msra.mxu0 0.0
    %1753 = vmatprep.subr.mxu0 0.0
    %1754 = vmatpush1.msra.mxu0 0.0
    %1755 = vmatprep.subr.mxu0 0.0
    %1756 = vmatpush1.msra.mxu0 0.0
    %1757 = vmatprep.subr.mxu0 0.0
    %1758 = vmatpush1.msra.mxu0 0.0
    %1759 = vmatprep.subr.mxu0 0.0
    %1760 = vmatpush1.msra.mxu0 0.0
    %1761 = vmatprep.subr.mxu0 0.0
    %1762 = vmatpush1.msra.mxu0 0.0
    %1763 = vmatprep.subr.mxu0 0.0
    %1764 = vmatpush1.msra.mxu0 0.0
    %1765 = vmatprep.subr.mxu0 0.0
    %1766 = vmatpush1.msra.mxu0 0.0
    %1767 = vmatprep.subr.mxu0 0.0
    %1768 = vmatpush1.msra.mxu0 0.0
    %1769 = vmatprep.subr.mxu0 0.0
    %1770 = vmatpush1.msra.mxu0 0.0
    %1771 = vmatprep.subr.mxu0 0.0
    %1772 = vmatpush1.msra.mxu0 0.0
    %1773 = vmatprep.subr.mxu0 0.0
    %1774 = vmatpush1.msra.mxu0 0.0
    %1775 = vmatprep.subr.mxu0 0.0
    %1776 = vmatpush1.msra.mxu0 0.0
    %1777 = vmatprep.subr.mxu0 0.0
    %1778 = vmatpush1.msra.mxu0 0.0
    %1779 = vmatprep.subr.mxu0 0.0
    %1780 = vmatpush1.msra.mxu0 0.0
    %1781 = vmatprep.subr.mxu0 0.0
    %1782 = vmatpush1.msra.mxu0 0.0
    %1783 = vmatprep.subr.mxu0 0.0
    %1784 = vmatpush1.msra.mxu0 0.0
    %1785 = vmatprep.subr.mxu0 0.0
    %1786 = vmatpush1.msra.mxu0 0.0
    %1787 = vmatprep.subr.mxu0 0.0
    %1788 = vmatpush1.msra.mxu0 0.0
    %1789 = vmatprep.subr.mxu0 0.0
    %1790 = vmatpush1.msra.mxu0 0.0
    %1791 = vmatprep.subr.mxu0 0.0
    %1792 = vmatpush1.msra.mxu0 0.0
    %1793 = vmatprep.subr.mxu0 0.0
    %1794 = vmatpush1.msra.mxu0 0.0
    %1795 = vmatprep.subr.mxu0 0.0
    %1796 = vmatpush1.msra.mxu0 0.0
    %1797 = vmatprep.subr.mxu0 0.0
    %1798 = vmatpush1.msra.mxu0 0.0
    %1799 = vmatprep.subr.mxu0 0.0
    %1800 = vmatpush1.msra.mxu0 0.0
    %1801 = vmatprep.subr.mxu0 0.0
    %1802 = vmatpush1.msra.mxu0 0.0
    %1803 = vmatprep.subr.mxu0 0.0
    %1804 = vmatpush1.msra.mxu0 0.0
    %1805 = vmatprep.mubr.f32.mxu0 0.0
    %1806 = vmatmul.mubr.f32.gmra.mrb[0].mxu0 %v1736
    %v1807 = vpop.f32.mrb[0].mxu0
    %v1808 = vadd.f32 %v1734, %v1807
    %v1809 = vpop.f32.mrb[0].mxu0
    %1810 = vmatprep.mubr.f32.mxu0 0.0
    %1811 = vmatmul.mubr.f32.gmra.mrb[0].mxu0 %v1739
    %v1812 = vpop.f32.mrb[0].mxu0
    %v1813 = vadd.f32 %v1734, %v1812
    %v1814 = vpop.f32.mrb[0].mxu0
    %1815 = vdwg.mxu0
    %1818 = vrot.lane.b32.xlu0 %v1719, 96
    %v1819 = vpop.permute.xlu0 %1818
    %1820 = vrot.lane.b32.xlu0 %v1724, 96
    %v1821 = vpop.permute.xlu0 %1820
    %v1822 = vsel %vm233, %v1719, 0
    %v1824 = vsel %vm233, %v1724, 0
    %v1826 = vsel %vm233, %v1819, 0
    %v1828 = vsel %vm233, %v1821, 0
    %1830 = vmatprep.subr.mxu0 0.0
    %1831 = vmatpush1.xpose.msra.mxu0 %v1826
    %1832 = vmatprep.subr.mxu0 0.0
    %1833 = vmatpush1.xpose.msra.mxu0 %v1828
    %1834 = vmatprep.subr.mxu0 0.0
    %1835 = vmatpush1.xpose.msra.mxu0 0.0
    %1836 = vmatprep.subr.mxu0 0.0
    %1837 = vmatpush1.xpose.msra.mxu0 0.0
    %1838 = vmatprep.subr.mxu0 0.0
    %1839 = vmatpush1.xpose.msra.mxu0 0.0
    %1840 = vmatprep.subr.mxu0 0.0
    %1841 = vmatpush1.xpose.msra.mxu0 0.0
    %1842 = vmatprep.subr.mxu0 0.0
    %1843 = vmatpush1.xpose.msra.mxu0 0.0
    %1844 = vmatprep.subr.mxu0 0.0
    %1845 = vmatpush1.xpose.msra.mxu0 0.0
    %1846 = vmatprep.subr.mxu0 0.0
    %1847 = vmatpush1.xpose.msra.mxu0 0.0
    %1848 = vmatprep.subr.mxu0 0.0
    %1849 = vmatpush1.xpose.msra.mxu0 0.0
    %1850 = vmatprep.subr.mxu0 0.0
    %1851 = vmatpush1.xpose.msra.mxu0 0.0
    %1852 = vmatprep.subr.mxu0 0.0
    %1853 = vmatpush1.xpose.msra.mxu0 0.0
    %1854 = vmatprep.subr.mxu0 0.0
    %1855 = vmatpush1.xpose.msra.mxu0 0.0
    %1856 = vmatprep.subr.mxu0 0.0
    %1857 = vmatpush1.xpose.msra.mxu0 0.0
    %1858 = vmatprep.subr.mxu0 0.0
    %1859 = vmatpush1.xpose.msra.mxu0 0.0
    %1860 = vmatprep.subr.mxu0 0.0
    %1861 = vmatpush1.xpose.msra.mxu0 0.0
    %1862 = vmatprep.subr.mxu0 0.0
    %1863 = vmatpush1.xpose.msra.mxu0 0.0
    %1864 = vmatprep.subr.mxu0 0.0
    %1865 = vmatpush1.xpose.msra.mxu0 0.0
    %1866 = vmatprep.subr.mxu0 0.0
    %1867 = vmatpush1.xpose.msra.mxu0 0.0
    %1868 = vmatprep.subr.mxu0 0.0
    %1869 = vmatpush1.xpose.msra.mxu0 0.0
    %1870 = vmatprep.subr.mxu0 0.0
    %1871 = vmatpush1.xpose.msra.mxu0 0.0
    %1872 = vmatprep.subr.mxu0 0.0
    %1873 = vmatpush1.xpose.msra.mxu0 0.0
    %1874 = vmatprep.subr.mxu0 0.0
    %1875 = vmatpush1.xpose.msra.mxu0 0.0
    %1876 = vmatprep.subr.mxu0 0.0
    %1877 = vmatpush1.xpose.msra.mxu0 0.0
    %1878 = vmatprep.subr.mxu0 0.0
    %1879 = vmatpush1.xpose.msra.mxu0 0.0
    %1880 = vmatprep.subr.mxu0 0.0
    %1881 = vmatpush1.xpose.msra.mxu0 0.0
    %1882 = vmatprep.subr.mxu0 0.0
    %1883 = vmatpush1.xpose.msra.mxu0 0.0
    %1884 = vmatprep.subr.mxu0 0.0
    %1885 = vmatpush1.xpose.msra.mxu0 0.0
    %1886 = vmatprep.subr.mxu0 0.0
    %1887 = vmatpush1.xpose.msra.mxu0 0.0
    %1888 = vmatprep.subr.mxu0 0.0
    %1889 = vmatpush1.xpose.msra.mxu0 0.0
    %1890 = vmatprep.subr.mxu0 0.0
    %1891 = vmatpush1.xpose.msra.mxu0 0.0
    %1892 = vmatprep.subr.mxu0 0.0
    %1893 = vmatpush1.xpose.msra.mxu0 0.0
    %1894 = vmatprep.mubr.f32.mxu0 0.0
    %1895 = vmatmul.mubr.f32.gmra.mrb[0].mxu0 %v1822
    %v1896 = vpop.f32.mrb[0].mxu0
    %v1897 = vadd.f32 %v35, %v1896
    %v1898 = vpop.f32.mrb[0].mxu0
    %1899 = vmatprep.mubr.f32.mxu0 0.0
    %1900 = vmatmul.mubr.f32.gmra.mrb[0].mxu0 %v1824
    %v1901 = vpop.f32.mrb[0].mxu0
    %v1902 = vadd.f32 %v36, %v1901
    %v1903 = vpop.f32.mrb[0].mxu0
    %1904 = vdwg.mxu0
    %v1905 = vsel %vm317, %v1897, -inf
    %1906 = vmax.xlane.f32.xlu0 %v1905
    %v1907 = vpop.xlane.xlu0 %1906
    %v1908 = vsel %vm317, %v1902, -inf
    %1909 = vmax.xlane.f32.xlu0 %v1908
    %v1910 = vpop.xlane.xlu0 %1909
    %v1911 = vsub.f32 %v1897, %v1907
    %v1912 = vsub.f32 %v1902, %v1910
    %v1913 = vmul.f32 %v1911, 1.442695
    %v1914 = vpow.pop %v1913
    %v1915 = vmul.f32 %v1912, 1.442695
    %v1916 = vpow.pop %v1915
    %v1917 = vsel %vm317, %v1914, 0.0
    %1918 = vadd.xlane.f32.xlu0 %v1917
    %v1919 = vpop.xlane.xlu0 %1918
    %v1920 = vsel %vm317, %v1916, 0.0
    %1921 = vadd.xlane.f32.xlu0 %v1920
    %v1922 = vpop.xlane.xlu0 %1921
    %v1923 = vrcp.pop %v1919
    %v1924 = vmul.f32 %v1914, %v1923
    %v1925 = vrcp.pop %v1922
    %v1926 = vmul.f32 %v1916, %v1925
    %v1928 = vsel %vm317, %v1924, 0
    %v1931 = vsel %vm317, %v1926, 0
    %1933 = vmatprep.subr.mxu0 0.0
    %1934 = vmatpush1.msra.mxu0 %v1808
    %1935 = vmatprep.subr.mxu0 0.0
    %1936 = vmatpush1.msra.mxu0 %v1813
    %1937 = vmatprep.subr.mxu0 0.0
    %1938 = vmatpush1.msra.mxu0 0.0
    %1939 = vmatprep.subr.mxu0 0.0
    %1940 = vmatpush1.msra.mxu0 0.0
    %1941 = vmatprep.subr.mxu0 0.0
    %1942 = vmatpush1.msra.mxu0 0.0
    %1943 = vmatprep.subr.mxu0 0.0
    %1944 = vmatpush1.msra.mxu0 0.0
    %1945 = vmatprep.subr.mxu0 0.0
    %1946 = vmatpush1.msra.mxu0 0.0
    %1947 = vmatprep.subr.mxu0 0.0
    %1948 = vmatpush1.msra.mxu0 0.0
    %1949 = vmatprep.subr.mxu0 0.0
    %1950 = vmatpush1.msra.mxu0 0.0
    %1951 = vmatprep.subr.mxu0 0.0
    %1952 = vmatpush1.msra.mxu0 0.0
    %1953 = vmatprep.subr.mxu0 0.0
    %1954 = vmatpush1.msra.mxu0 0.0
    %1955 = vmatprep.subr.mxu0 0.0
    %1956 = vmatpush1.msra.mxu0 0.0
    %1957 = vmatprep.subr.mxu0 0.0
    %1958 = vmatpush1.msra.mxu0 0.0
    %1959 = vmatprep.subr.mxu0 0.0
    %1960 = vmatpush1.msra.mxu0 0.0
    %1961 = vmatprep.subr.mxu0 0.0
    %1962 = vmatpush1.msra.mxu0 0.0
    %1963 = vmatprep.subr.mxu0 0.0
    %1964 = vmatpush1.msra.mxu0 0.0
    %1965 = vmatprep.subr.mxu0 0.0
    %1966 = vmatpush1.msra.mxu0 0.0
    %1967 = vmatprep.subr.mxu0 0.0
    %1968 = vmatpush1.msra.mxu0 0.0
    %1969 = vmatprep.subr.mxu0 0.0
    %1970 = vmatpush1.msra.mxu0 0.0
    %1971 = vmatprep.subr.mxu0 0.0
    %1972 = vmatpush1.msra.mxu0 0.0
    %1973 = vmatprep.subr.mxu0 0.0
    %1974 = vmatpush1.msra.mxu0 0.0
    %1975 = vmatprep.subr.mxu0 0.0
    %1976 = vmatpush1.msra.mxu0 0.0
    %1977 = vmatprep.subr.mxu0 0.0
    %1978 = vmatpush1.msra.mxu0 0.0
    %1979 = vmatprep.subr.mxu0 0.0
    %1980 = vmatpush1.msra.mxu0 0.0
    %1981 = vmatprep.subr.mxu0 0.0
    %1982 = vmatpush1.msra.mxu0 0.0
    %1983 = vmatprep.subr.mxu0 0.0
    %1984 = vmatpush1.msra.mxu0 0.0
    %1985 = vmatprep.subr.mxu0 0.0
    %1986 = vmatpush1.msra.mxu0 0.0
    %1987 = vmatprep.subr.mxu0 0.0
    %1988 = vmatpush1.msra.mxu0 0.0
    %1989 = vmatprep.subr.mxu0 0.0
    %1990 = vmatpush1.msra.mxu0 0.0
    %1991 = vmatprep.subr.mxu0 0.0
    %1992 = vmatpush1.msra.mxu0 0.0
    %1993 = vmatprep.subr.mxu0 0.0
    %1994 = vmatpush1.msra.mxu0 0.0
    %1995 = vmatprep.subr.mxu0 0.0
    %1996 = vmatpush1.msra.mxu0 0.0
    %1997 = vmatprep.mubr.f32.mxu0 0.0
    %1998 = vmatmul.mubr.f32.gmra.mrb[0].mxu0 %v1928
    %v1999 = vpop.f32.mrb[0].mxu0
    %v2000 = vadd.f32 0.0, %v1999
    %v2001 = vpop.f32.mrb[0].mxu0
    %2002 = vmatprep.mubr.f32.mxu0 0.0
    %2003 = vmatmul.mubr.f32.gmra.mrb[0].mxu0 %v1931
    %v2004 = vpop.f32.mrb[0].mxu0
    %v2005 = vadd.f32 0.0, %v2004
    %v2006 = vpop.f32.mrb[0].mxu0
    %2007 = vdwg.mxu0
    %v2008 = vld [vmem:[%s3 + $0xa0] sm:$0xff]
    %v2009 = vlaneseq
    %v2010 = vshrl.u32 %v2009, 7
    %v2011 = vsub.s32 0, %v2010
    %v2012 = vrot.slane %v1630, %v2011
    %v2014 = vsel %vm233, %v2000, 0
    %v2017 = vsel %vm233, %v2005, 0
    %2019 = vmatprep.subr.mxu0 0.0
    %2020 = vmatpush1.msra.mxu0 %v2008
    %2021 = vmatprep.subr.mxu0 0.0
    %2022 = vmatpush1.msra.mxu0 0.0
    %2023 = vmatprep.subr.mxu0 0.0
    %2024 = vmatpush1.msra.mxu0 0.0
    %2025 = vmatprep.subr.mxu0 0.0
    %2026 = vmatpush1.msra.mxu0 0.0
    %2027 = vmatprep.subr.mxu0 0.0
    %2028 = vmatpush1.msra.mxu0 0.0
    %2029 = vmatprep.subr.mxu0 0.0
    %2030 = vmatpush1.msra.mxu0 0.0
    %2031 = vmatprep.subr.mxu0 0.0
    %2032 = vmatpush1.msra.mxu0 0.0
    %2033 = vmatprep.subr.mxu0 0.0
    %2034 = vmatpush1.msra.mxu0 0.0
    %2035 = vmatprep.subr.mxu0 0.0
    %2036 = vmatpush1.msra.mxu0 0.0
    %2037 = vmatprep.subr.mxu0 0.0
    %2038 = vmatpush1.msra.mxu0 0.0
    %2039 = vmatprep.subr.mxu0 0.0
    %2040 = vmatpush1.msra.mxu0 0.0
    %2041 = vmatprep.subr.mxu0 0.0
    %2042 = vmatpush1.msra.mxu0 0.0
    %2043 = vmatprep.subr.mxu0 0.0
    %2044 = vmatpush1.msra.mxu0 0.0
    %2045 = vmatprep.subr.mxu0 0.0
    %2046 = vmatpush1.msra.mxu0 0.0
    %2047 = vmatprep.subr.mxu0 0.0
    %2048 = vmatpush1.msra.mxu0 0.0
    %2049 = vmatprep.subr.mxu0 0.0
    %2050 = vmatpush1.msra.mxu0 0.0
    %2051 = vmatprep.subr.mxu0 0.0
    %2052 = vmatpush1.msra.mxu0 0.0
    %2053 = vmatprep.subr.mxu0 0.0
    %2054 = vmatpush1.msra.mxu0 0.0
    %2055 = vmatprep.subr.mxu0 0.0
    %2056 = vmatpush1.msra.mxu0 0.0
    %2057 = vmatprep.subr.mxu0 0.0
    %2058 = vmatpush1.msra.mxu0 0.0
    %2059 = vmatprep.subr.mxu0 0.0
    %2060 = vmatpush1.msra.mxu0 0.0
    %2061 = vmatprep.subr.mxu0 0.0
    %2062 = vmatpush1.msra.mxu0 0.0
    %2063 = vmatprep.subr.mxu0 0.0
    %2064 = vmatpush1.msra.mxu0 0.0
    %2065 = vmatprep.subr.mxu0 0.0
    %2066 = vmatpush1.msra.mxu0 0.0
    %2067 = vmatprep.subr.mxu0 0.0
    %2068 = vmatpush1.msra.mxu0 0.0
    %2069 = vmatprep.subr.mxu0 0.0
    %2070 = vmatpush1.msra.mxu0 0.0
    %2071 = vmatprep.subr.mxu0 0.0
    %2072 = vmatpush1.msra.mxu0 0.0
    %2073 = vmatprep.subr.mxu0 0.0
    %2074 = vmatpush1.msra.mxu0 0.0
    %2075 = vmatprep.subr.mxu0 0.0
    %2076 = vmatpush1.msra.mxu0 0.0
    %2077 = vmatprep.subr.mxu0 0.0
    %2078 = vmatpush1.msra.mxu0 0.0
    %2079 = vmatprep.subr.mxu0 0.0
    %2080 = vmatpush1.msra.mxu0 0.0
    %2081 = vmatprep.subr.mxu0 0.0
    %2082 = vmatpush1.msra.mxu0 0.0
    %2083 = vmatprep.mubr.f32.mxu0 0.0
    %2084 = vmatmul.mubr.f32.gmra.mrb[0].mxu0 %v2014
    %v2085 = vpop.f32.mrb[0].mxu0
    %v2086 = vadd.f32 %v2012, %v2085
    %v2087 = vpop.f32.mrb[0].mxu0
    %2088 = vmatprep.mubr.f32.mxu0 0.0
    %2089 = vmatmul.mubr.f32.gmra.mrb[0].mxu0 %v2017
    %v2090 = vpop.f32.mrb[0].mxu0
    %v2091 = vadd.f32 %v2012, %v2090
    %v2092 = vpop.f32.mrb[0].mxu0
    %2093 = vdwg.mxu0
    %2094 = vrot.lane.b32.xlu0 %v1719, 120
    %v2095 = vpop.permute.xlu0 %2094
    %2096 = vrot.lane.b32.xlu0 %v1724, 120
    %v2097 = vpop.permute.xlu0 %2096
    %2098 = vrot.lane.b32.xlu0 %v1719, 88
    %v2099 = vpop.permute.xlu0 %2098
    %2100 = vrot.lane.b32.xlu0 %v1724, 88
    %v2101 = vpop.permute.xlu0 %2100
    %v2102 = vsel %vm233, %v2095, 0
    %v2104 = vsel %vm233, %v2097, 0
    %v2106 = vsel %vm233, %v2099, 0
    %v2108 = vsel %vm233, %v2101, 0
    %2110 = vmatprep.subr.mxu0 0.0
    %2111 = vmatpush1.xpose.msra.mxu0 %v2106
    %2112 = vmatprep.subr.mxu0 0.0
    %2113 = vmatpush1.xpose.msra.mxu0 %v2108
    %2114 = vmatprep.subr.mxu0 0.0
    %2115 = vmatpush1.xpose.msra.mxu0 0.0
    %2116 = vmatprep.subr.mxu0 0.0
    %2117 = vmatpush1.xpose.msra.mxu0 0.0
    %2118 = vmatprep.subr.mxu0 0.0
    %2119 = vmatpush1.xpose.msra.mxu0 0.0
    %2120 = vmatprep.subr.mxu0 0.0
    %2121 = vmatpush1.xpose.msra.mxu0 0.0
    %2122 = vmatprep.subr.mxu0 0.0
    %2123 = vmatpush1.xpose.msra.mxu0 0.0
    %2124 = vmatprep.subr.mxu0 0.0
    %2125 = vmatpush1.xpose.msra.mxu0 0.0
    %2126 = vmatprep.subr.mxu0 0.0
    %2127 = vmatpush1.xpose.msra.mxu0 0.0
    %2128 = vmatprep.subr.mxu0 0.0
    %2129 = vmatpush1.xpose.msra.mxu0 0.0
    %2130 = vmatprep.subr.mxu0 0.0
    %2131 = vmatpush1.xpose.msra.mxu0 0.0
    %2132 = vmatprep.subr.mxu0 0.0
    %2133 = vmatpush1.xpose.msra.mxu0 0.0
    %2134 = vmatprep.subr.mxu0 0.0
    %2135 = vmatpush1.xpose.msra.mxu0 0.0
    %2136 = vmatprep.subr.mxu0 0.0
    %2137 = vmatpush1.xpose.msra.mxu0 0.0
    %2138 = vmatprep.subr.mxu0 0.0
    %2139 = vmatpush1.xpose.msra.mxu0 0.0
    %2140 = vmatprep.subr.mxu0 0.0
    %2141 = vmatpush1.xpose.msra.mxu0 0.0
    %2142 = vmatprep.subr.mxu0 0.0
    %2143 = vmatpush1.xpose.msra.mxu0 0.0
    %2144 = vmatprep.subr.mxu0 0.0
    %2145 = vmatpush1.xpose.msra.mxu0 0.0
    %2146 = vmatprep.subr.mxu0 0.0
    %2147 = vmatpush1.xpose.msra.mxu0 0.0
    %2148 = vmatprep.subr.mxu0 0.0
    %2149 = vmatpush1.xpose.msra.mxu0 0.0
    %2150 = vmatprep.subr.mxu0 0.0
    %2151 = vmatpush1.xpose.msra.mxu0 0.0
    %2152 = vmatprep.subr.mxu0 0.0
    %2153 = vmatpush1.xpose.msra.mxu0 0.0
    %2154 = vmatprep.subr.mxu0 0.0
    %2155 = vmatpush1.xpose.msra.mxu0 0.0
    %2156 = vmatprep.subr.mxu0 0.0
    %2157 = vmatpush1.xpose.msra.mxu0 0.0
    %2158 = vmatprep.subr.mxu0 0.0
    %2159 = vmatpush1.xpose.msra.mxu0 0.0
    %2160 = vmatprep.subr.mxu0 0.0
    %2161 = vmatpush1.xpose.msra.mxu0 0.0
    %2162 = vmatprep.subr.mxu0 0.0
    %2163 = vmatpush1.xpose.msra.mxu0 0.0
    %2164 = vmatprep.subr.mxu0 0.0
    %2165 = vmatpush1.xpose.msra.mxu0 0.0
    %2166 = vmatprep.subr.mxu0 0.0
    %2167 = vmatpush1.xpose.msra.mxu0 0.0
    %2168 = vmatprep.subr.mxu0 0.0
    %2169 = vmatpush1.xpose.msra.mxu0 0.0
    %2170 = vmatprep.subr.mxu0 0.0
    %2171 = vmatpush1.xpose.msra.mxu0 0.0
    %2172 = vmatprep.subr.mxu0 0.0
    %2173 = vmatpush1.xpose.msra.mxu0 0.0
    %2174 = vmatprep.mubr.f32.mxu0 0.0
    %2175 = vmatmul.mubr.f32.gmra.mrb[0].mxu0 %v2102
    %v2176 = vpop.f32.mrb[0].mxu0
    %v2177 = vadd.f32 %v35, %v2176
    %v2178 = vpop.f32.mrb[0].mxu0
    %2179 = vmatprep.mubr.f32.mxu0 0.0
    %2180 = vmatmul.mubr.f32.gmra.mrb[0].mxu0 %v2104
    %v2181 = vpop.f32.mrb[0].mxu0
    %v2182 = vadd.f32 %v36, %v2181
    %v2183 = vpop.f32.mrb[0].mxu0
    %2184 = vdwg.mxu0
    %v2185 = vsel %vm317, %v2177, -inf
    %2186 = vmax.xlane.f32.xlu0 %v2185
    %v2187 = vpop.xlane.xlu0 %2186
    %v2188 = vsel %vm317, %v2182, -inf
    %2189 = vmax.xlane.f32.xlu0 %v2188
    %v2190 = vpop.xlane.xlu0 %2189
    %v2191 = vsub.f32 %v2177, %v2187
    %v2192 = vsub.f32 %v2182, %v2190
    %v2193 = vmul.f32 %v2191, 1.442695
    %v2194 = vpow.pop %v2193
    %v2195 = vmul.f32 %v2192, 1.442695
    %v2196 = vpow.pop %v2195
    %v2197 = vsel %vm317, %v2194, 0.0
    %2198 = vadd.xlane.f32.xlu0 %v2197
    %v2199 = vpop.xlane.xlu0 %2198
    %v2200 = vsel %vm317, %v2196, 0.0
    %2201 = vadd.xlane.f32.xlu0 %v2200
    %v2202 = vpop.xlane.xlu0 %2201
    %v2203 = vrcp.pop %v2199
    %v2204 = vmul.f32 %v2194, %v2203
    %v2205 = vrcp.pop %v2202
    %v2206 = vmul.f32 %v2196, %v2205
    %2209 = vrot.lane.b32.xlu0 %v1808, 120
    %v2210 = vpop.permute.xlu0 %2209
    %2211 = vrot.lane.b32.xlu0 %v1813, 120
    %v2212 = vpop.permute.xlu0 %2211
    %v2216 = vsel %vm317, %v2204, 0
    %v2219 = vsel %vm317, %v2206, 0
    %2221 = vmatprep.subr.mxu0 0.0
    %2222 = vmatpush1.msra.mxu0 %v2210
    %2223 = vmatprep.subr.mxu0 0.0
    %2224 = vmatpush1.msra.mxu0 %v2212
    %2225 = vmatprep.subr.mxu0 0.0
    %2226 = vmatpush1.msra.mxu0 0.0
    %2227 = vmatprep.subr.mxu0 0.0
    %2228 = vmatpush1.msra.mxu0 0.0
    %2229 = vmatprep.subr.mxu0 0.0
    %2230 = vmatpush1.msra.mxu0 0.0
    %2231 = vmatprep.subr.mxu0 0.0
    %2232 = vmatpush1.msra.mxu0 0.0
    %2233 = vmatprep.subr.mxu0 0.0
    %2234 = vmatpush1.msra.mxu0 0.0
    %2235 = vmatprep.subr.mxu0 0.0
    %2236 = vmatpush1.msra.mxu0 0.0
    %2237 = vmatprep.subr.mxu0 0.0
    %2238 = vmatpush1.msra.mxu0 0.0
    %2239 = vmatprep.subr.mxu0 0.0
    %2240 = vmatpush1.msra.mxu0 0.0
    %2241 = vmatprep.subr.mxu0 0.0
    %2242 = vmatpush1.msra.mxu0 0.0
    %2243 = vmatprep.subr.mxu0 0.0
    %2244 = vmatpush1.msra.mxu0 0.0
    %2245 = vmatprep.subr.mxu0 0.0
    %2246 = vmatpush1.msra.mxu0 0.0
    %2247 = vmatprep.subr.mxu0 0.0
    %2248 = vmatpush1.msra.mxu0 0.0
    %2249 = vmatprep.subr.mxu0 0.0
    %2250 = vmatpush1.msra.mxu0 0.0
    %2251 = vmatprep.subr.mxu0 0.0
    %2252 = vmatpush1.msra.mxu0 0.0
    %2253 = vmatprep.subr.mxu0 0.0
    %2254 = vmatpush1.msra.mxu0 0.0
    %2255 = vmatprep.subr.mxu0 0.0
    %2256 = vmatpush1.msra.mxu0 0.0
    %2257 = vmatprep.subr.mxu0 0.0
    %2258 = vmatpush1.msra.mxu0 0.0
    %2259 = vmatprep.subr.mxu0 0.0
    %2260 = vmatpush1.msra.mxu0 0.0
    %2261 = vmatprep.subr.mxu0 0.0
    %2262 = vmatpush1.msra.mxu0 0.0
    %2263 = vmatprep.subr.mxu0 0.0
    %2264 = vmatpush1.msra.mxu0 0.0
    %2265 = vmatprep.subr.mxu0 0.0
    %2266 = vmatpush1.msra.mxu0 0.0
    %2267 = vmatprep.subr.mxu0 0.0
    %2268 = vmatpush1.msra.mxu0 0.0
    %2269 = vmatprep.subr.mxu0 0.0
    %2270 = vmatpush1.msra.mxu0 0.0
    %2271 = vmatprep.subr.mxu0 0.0
    %2272 = vmatpush1.msra.mxu0 0.0
    %2273 = vmatprep.subr.mxu0 0.0
    %2274 = vmatpush1.msra.mxu0 0.0
    %2275 = vmatprep.subr.mxu0 0.0
    %2276 = vmatpush1.msra.mxu0 0.0
    %2277 = vmatprep.subr.mxu0 0.0
    %2278 = vmatpush1.msra.mxu0 0.0
    %2279 = vmatprep.subr.mxu0 0.0
    %2280 = vmatpush1.msra.mxu0 0.0
    %2281 = vmatprep.subr.mxu0 0.0
    %2282 = vmatpush1.msra.mxu0 0.0
    %2283 = vmatprep.subr.mxu0 0.0
    %2284 = vmatpush1.msra.mxu0 0.0
    %2285 = vmatprep.mubr.f32.mxu0 0.0
    %2286 = vmatmul.mubr.f32.gmra.mrb[0].mxu0 %v2216
    %v2287 = vpop.f32.mrb[0].mxu0
    %v2288 = vadd.f32 0.0, %v2287
    %v2289 = vpop.f32.mrb[0].mxu0
    %2290 = vmatprep.mubr.f32.mxu0 0.0
    %2291 = vmatmul.mubr.f32.gmra.mrb[0].mxu0 %v2219
    %v2292 = vpop.f32.mrb[0].mxu0
    %v2293 = vadd.f32 0.0, %v2292
    %v2294 = vpop.f32.mrb[0].mxu0
    %2295 = vdwg.mxu0
    %v2296 = vld [vmem:[%s3 + $0xa8] sm:$0xff]
    %v2298 = vsel %vm233, %v2288, 0
    %v2301 = vsel %vm233, %v2293, 0
    %2303 = vmatprep.subr.mxu0 0.0
    %2304 = vmatpush1.msra.mxu0 %v2296
    %2305 = vmatprep.subr.mxu0 0.0
    %2306 = vmatpush1.msra.mxu0 0.0
    %2307 = vmatprep.subr.mxu0 0.0
    %2308 = vmatpush1.msra.mxu0 0.0
    %2309 = vmatprep.subr.mxu0 0.0
    %2310 = vmatpush1.msra.mxu0 0.0
    %2311 = vmatprep.subr.mxu0 0.0
    %2312 = vmatpush1.msra.mxu0 0.0
    %2313 = vmatprep.subr.mxu0 0.0
    %2314 = vmatpush1.msra.mxu0 0.0
    %2315 = vmatprep.subr.mxu0 0.0
    %2316 = vmatpush1.msra.mxu0 0.0
    %2317 = vmatprep.subr.mxu0 0.0
    %2318 = vmatpush1.msra.mxu0 0.0
    %2319 = vmatprep.subr.mxu0 0.0
    %2320 = vmatpush1.msra.mxu0 0.0
    %2321 = vmatprep.subr.mxu0 0.0
    %2322 = vmatpush1.msra.mxu0 0.0
    %2323 = vmatprep.subr.mxu0 0.0
    %2324 = vmatpush1.msra.mxu0 0.0
    %2325 = vmatprep.subr.mxu0 0.0
    %2326 = vmatpush1.msra.mxu0 0.0
    %2327 = vmatprep.subr.mxu0 0.0
    %2328 = vmatpush1.msra.mxu0 0.0
    %2329 = vmatprep.subr.mxu0 0.0
    %2330 = vmatpush1.msra.mxu0 0.0
    %2331 = vmatprep.subr.mxu0 0.0
    %2332 = vmatpush1.msra.mxu0 0.0
    %2333 = vmatprep.subr.mxu0 0.0
    %2334 = vmatpush1.msra.mxu0 0.0
    %2335 = vmatprep.subr.mxu0 0.0
    %2336 = vmatpush1.msra.mxu0 0.0
    %2337 = vmatprep.subr.mxu0 0.0
    %2338 = vmatpush1.msra.mxu0 0.0
    %2339 = vmatprep.subr.mxu0 0.0
    %2340 = vmatpush1.msra.mxu0 0.0
    %2341 = vmatprep.subr.mxu0 0.0
    %2342 = vmatpush1.msra.mxu0 0.0
    %2343 = vmatprep.subr.mxu0 0.0
    %2344 = vmatpush1.msra.mxu0 0.0
    %2345 = vmatprep.subr.mxu0 0.0
    %2346 = vmatpush1.msra.mxu0 0.0
    %2347 = vmatprep.subr.mxu0 0.0
    %2348 = vmatpush1.msra.mxu0 0.0
    %2349 = vmatprep.subr.mxu0 0.0
    %2350 = vmatpush1.msra.mxu0 0.0
    %2351 = vmatprep.subr.mxu0 0.0
    %2352 = vmatpush1.msra.mxu0 0.0
    %2353 = vmatprep.subr.mxu0 0.0
    %2354 = vmatpush1.msra.mxu0 0.0
    %2355 = vmatprep.subr.mxu0 0.0
    %2356 = vmatpush1.msra.mxu0 0.0
    %2357 = vmatprep.subr.mxu0 0.0
    %2358 = vmatpush1.msra.mxu0 0.0
    %2359 = vmatprep.subr.mxu0 0.0
    %2360 = vmatpush1.msra.mxu0 0.0
    %2361 = vmatprep.subr.mxu0 0.0
    %2362 = vmatpush1.msra.mxu0 0.0
    %2363 = vmatprep.subr.mxu0 0.0
    %2364 = vmatpush1.msra.mxu0 0.0
    %2365 = vmatprep.subr.mxu0 0.0
    %2366 = vmatpush1.msra.mxu0 0.0
    %2367 = vmatprep.mubr.f32.mxu0 0.0
    %2368 = vmatmul.mubr.f32.gmra.mrb[0].mxu0 %v2298
    %v2369 = vpop.f32.mrb[0].mxu0
    %v2370 = vadd.f32 0.0, %v2369
    %v2371 = vpop.f32.mrb[0].mxu0
    %2372 = vmatprep.mubr.f32.mxu0 0.0
    %2373 = vmatmul.mubr.f32.gmra.mrb[0].mxu0 %v2301
    %v2374 = vpop.f32.mrb[0].mxu0
    %v2375 = vadd.f32 0.0, %v2374
    %v2376 = vpop.f32.mrb[0].mxu0
    %2377 = vdwg.mxu0
    %v2378 = vadd.f32 %v2086, %v2370
    %v2379 = vadd.f32 %v2091, %v2375
    %2380 = vrot.lane.b32.xlu0 %v1719, 112
    %v2381 = vpop.permute.xlu0 %2380
    %2382 = vrot.lane.b32.xlu0 %v1724, 112
    %v2383 = vpop.permute.xlu0 %2382
    %2384 = vrot.lane.b32.xlu0 %v1719, 80
    %v2385 = vpop.permute.xlu0 %2384
    %2386 = vrot.lane.b32.xlu0 %v1724, 80
    %v2387 = vpop.permute.xlu0 %2386
    %v2388 = vsel %vm233, %v2381, 0
    %v2390 = vsel %vm233, %v2383, 0
    %v2392 = vsel %vm233, %v2385, 0
    %v2394 = vsel %vm233, %v2387, 0
    %2396 = vmatprep.subr.mxu0 0.0
    %2397 = vmatpush1.xpose.msra.mxu0 %v2392
    %2398 = vmatprep.subr.mxu0 0.0
    %2399 = vmatpush1.xpose.msra.mxu0 %v2394
    %2400 = vmatprep.subr.mxu0 0.0
    %2401 = vmatpush1.xpose.msra.mxu0 0.0
    %2402 = vmatprep.subr.mxu0 0.0
    %2403 = vmatpush1.xpose.msra.mxu0 0.0
    %2404 = vmatprep.subr.mxu0 0.0
    %2405 = vmatpush1.xpose.msra.mxu0 0.0
    %2406 = vmatprep.subr.mxu0 0.0
    %2407 = vmatpush1.xpose.msra.mxu0 0.0
    %2408 = vmatprep.subr.mxu0 0.0
    %2409 = vmatpush1.xpose.msra.mxu0 0.0
    %2410 = vmatprep.subr.mxu0 0.0
    %2411 = vmatpush1.xpose.msra.mxu0 0.0
    %2412 = vmatprep.subr.mxu0 0.0
    %2413 = vmatpush1.xpose.msra.mxu0 0.0
    %2414 = vmatprep.subr.mxu0 0.0
    %2415 = vmatpush1.xpose.msra.mxu0 0.0
    %2416 = vmatprep.subr.mxu0 0.0
    %2417 = vmatpush1.xpose.msra.mxu0 0.0
    %2418 = vmatprep.subr.mxu0 0.0
    %2419 = vmatpush1.xpose.msra.mxu0 0.0
    %2420 = vmatprep.subr.mxu0 0.0
    %2421 = vmatpush1.xpose.msra.mxu0 0.0
    %2422 = vmatprep.subr.mxu0 0.0
    %2423 = vmatpush1.xpose.msra.mxu0 0.0
    %2424 = vmatprep.subr.mxu0 0.0
    %2425 = vmatpush1.xpose.msra.mxu0 0.0
    %2426 = vmatprep.subr.mxu0 0.0
    %2427 = vmatpush1.xpose.msra.mxu0 0.0
    %2428 = vmatprep.subr.mxu0 0.0
    %2429 = vmatpush1.xpose.msra.mxu0 0.0
    %2430 = vmatprep.subr.mxu0 0.0
    %2431 = vmatpush1.xpose.msra.mxu0 0.0
    %2432 = vmatprep.subr.mxu0 0.0
    %2433 = vmatpush1.xpose.msra.mxu0 0.0
    %2434 = vmatprep.subr.mxu0 0.0
    %2435 = vmatpush1.xpose.msra.mxu0 0.0
    %2436 = vmatprep.subr.mxu0 0.0
    %2437 = vmatpush1.xpose.msra.mxu0 0.0
    %2438 = vmatprep.subr.mxu0 0.0
    %2439 = vmatpush1.xpose.msra.mxu0 0.0
    %2440 = vmatprep.subr.mxu0 0.0
    %2441 = vmatpush1.xpose.msra.mxu0 0.0
    %2442 = vmatprep.subr.mxu0 0.0
    %2443 = vmatpush1.xpose.msra.mxu0 0.0
    %2444 = vmatprep.subr.mxu0 0.0
    %2445 = vmatpush1.xpose.msra.mxu0 0.0
    %2446 = vmatprep.subr.mxu0 0.0
    %2447 = vmatpush1.xpose.msra.mxu0 0.0
    %2448 = vmatprep.subr.mxu0 0.0
    %2449 = vmatpush1.xpose.msra.mxu0 0.0
    %2450 = vmatprep.subr.mxu0 0.0
    %2451 = vmatpush1.xpose.msra.mxu0 0.0
    %2452 = vmatprep.subr.mxu0 0.0
    %2453 = vmatpush1.xpose.msra.mxu0 0.0
    %2454 = vmatprep.subr.mxu0 0.0
    %2455 = vmatpush1.xpose.msra.mxu0 0.0
    %2456 = vmatprep.subr.mxu0 0.0
    %2457 = vmatpush1.xpose.msra.mxu0 0.0
    %2458 = vmatprep.subr.mxu0 0.0
    %2459 = vmatpush1.xpose.msra.mxu0 0.0
    %2460 = vmatprep.mubr.f32.mxu0 0.0
    %2461 = vmatmul.mubr.f32.gmra.mrb[0].mxu0 %v2388
    %v2462 = vpop.f32.mrb[0].mxu0
    %v2463 = vadd.f32 %v35, %v2462
    %v2464 = vpop.f32.mrb[0].mxu0
    %2465 = vmatprep.mubr.f32.mxu0 0.0
    %2466 = vmatmul.mubr.f32.gmra.mrb[0].mxu0 %v2390
    %v2467 = vpop.f32.mrb[0].mxu0
    %v2468 = vadd.f32 %v36, %v2467
    %v2469 = vpop.f32.mrb[0].mxu0
    %2470 = vdwg.mxu0
    %v2471 = vsel %vm317, %v2463, -inf
    %2472 = vmax.xlane.f32.xlu0 %v2471
    %v2473 = vpop.xlane.xlu0 %2472
    %v2474 = vsel %vm317, %v2468, -inf
    %2475 = vmax.xlane.f32.xlu0 %v2474
    %v2476 = vpop.xlane.xlu0 %2475
    %v2477 = vsub.f32 %v2463, %v2473
    %v2478 = vsub.f32 %v2468, %v2476
    %v2479 = vmul.f32 %v2477, 1.442695
    %v2480 = vpow.pop %v2479
    %v2481 = vmul.f32 %v2478, 1.442695
    %v2482 = vpow.pop %v2481
    %v2483 = vsel %vm317, %v2480, 0.0
    %2484 = vadd.xlane.f32.xlu0 %v2483
    %v2485 = vpop.xlane.xlu0 %2484
    %v2486 = vsel %vm317, %v2482, 0.0
    %2487 = vadd.xlane.f32.xlu0 %v2486
    %v2488 = vpop.xlane.xlu0 %2487
    %v2489 = vrcp.pop %v2485
    %v2490 = vmul.f32 %v2480, %v2489
    %v2491 = vrcp.pop %v2488
    %v2492 = vmul.f32 %v2482, %v2491
    %2493 = vrot.lane.b32.xlu0 %v1808, 112
    %v2494 = vpop.permute.xlu0 %2493
    %2495 = vrot.lane.b32.xlu0 %v1813, 112
    %v2496 = vpop.permute.xlu0 %2495
    %v2500 = vsel %vm317, %v2490, 0
    %v2503 = vsel %vm317, %v2492, 0
    %2505 = vmatprep.subr.mxu0 0.0
    %2506 = vmatpush1.msra.mxu0 %v2494
    %2507 = vmatprep.subr.mxu0 0.0
    %2508 = vmatpush1.msra.mxu0 %v2496
    %2509 = vmatprep.subr.mxu0 0.0
    %2510 = vmatpush1.msra.mxu0 0.0
    %2511 = vmatprep.subr.mxu0 0.0
    %2512 = vmatpush1.msra.mxu0 0.0
    %2513 = vmatprep.subr.mxu0 0.0
    %2514 = vmatpush1.msra.mxu0 0.0
    %2515 = vmatprep.subr.mxu0 0.0
    %2516 = vmatpush1.msra.mxu0 0.0
    %2517 = vmatprep.subr.mxu0 0.0
    %2518 = vmatpush1.msra.mxu0 0.0
    %2519 = vmatprep.subr.mxu0 0.0
    %2520 = vmatpush1.msra.mxu0 0.0
    %2521 = vmatprep.subr.mxu0 0.0
    %2522 = vmatpush1.msra.mxu0 0.0
    %2523 = vmatprep.subr.mxu0 0.0
    %2524 = vmatpush1.msra.mxu0 0.0
    %2525 = vmatprep.subr.mxu0 0.0
    %2526 = vmatpush1.msra.mxu0 0.0
    %2527 = vmatprep.subr.mxu0 0.0
    %2528 = vmatpush1.msra.mxu0 0.0
    %2529 = vmatprep.subr.mxu0 0.0
    %2530 = vmatpush1.msra.mxu0 0.0
    %2531 = vmatprep.subr.mxu0 0.0
    %2532 = vmatpush1.msra.mxu0 0.0
    %2533 = vmatprep.subr.mxu0 0.0
    %2534 = vmatpush1.msra.mxu0 0.0
    %2535 = vmatprep.subr.mxu0 0.0
    %2536 = vmatpush1.msra.mxu0 0.0
    %2537 = vmatprep.subr.mxu0 0.0
    %2538 = vmatpush1.msra.mxu0 0.0
    %2539 = vmatprep.subr.mxu0 0.0
    %2540 = vmatpush1.msra.mxu0 0.0
    %2541 = vmatprep.subr.mxu0 0.0
    %2542 = vmatpush1.msra.mxu0 0.0
    %2543 = vmatprep.subr.mxu0 0.0
    %2544 = vmatpush1.msra.mxu0 0.0
    %2545 = vmatprep.subr.mxu0 0.0
    %2546 = vmatpush1.msra.mxu0 0.0
    %2547 = vmatprep.subr.mxu0 0.0
    %2548 = vmatpush1.msra.mxu0 0.0
    %2549 = vmatprep.subr.mxu0 0.0
    %2550 = vmatpush1.msra.mxu0 0.0
    %2551 = vmatprep.subr.mxu0 0.0
    %2552 = vmatpush1.msra.mxu0 0.0
    %2553 = vmatprep.subr.mxu0 0.0
    %2554 = vmatpush1.msra.mxu0 0.0
    %2555 = vmatprep.subr.mxu0 0.0
    %2556 = vmatpush1.msra.mxu0 0.0
    %2557 = vmatprep.subr.mxu0 0.0
    %2558 = vmatpush1.msra.mxu0 0.0
    %2559 = vmatprep.subr.mxu0 0.0
    %2560 = vmatpush1.msra.mxu0 0.0
    %2561 = vmatprep.subr.mxu0 0.0
    %2562 = vmatpush1.msra.mxu0 0.0
    %2563 = vmatprep.subr.mxu0 0.0
    %2564 = vmatpush1.msra.mxu0 0.0
    %2565 = vmatprep.subr.mxu0 0.0
    %2566 = vmatpush1.msra.mxu0 0.0
    %2567 = vmatprep.subr.mxu0 0.0
    %2568 = vmatpush1.msra.mxu0 0.0
    %2569 = vmatprep.mubr.f32.mxu0 0.0
    %2570 = vmatmul.mubr.f32.gmra.mrb[0].mxu0 %v2500
    %v2571 = vpop.f32.mrb[0].mxu0
    %v2572 = vadd.f32 0.0, %v2571
    %v2573 = vpop.f32.mrb[0].mxu0
    %2574 = vmatprep.mubr.f32.mxu0 0.0
    %2575 = vmatmul.mubr.f32.gmra.mrb[0].mxu0 %v2503
    %v2576 = vpop.f32.mrb[0].mxu0
    %v2577 = vadd.f32 0.0, %v2576
    %v2578 = vpop.f32.mrb[0].mxu0
    %2579 = vdwg.mxu0
    %v2580 = vld [vmem:[%s3 + $0xb0] sm:$0xff]
    %v2582 = vsel %vm233, %v2572, 0
    %v2585 = vsel %vm233, %v2577, 0
    %2587 = vmatprep.subr.mxu0 0.0
    %2588 = vmatpush1.msra.mxu0 %v2580
    %2589 = vmatprep.subr.mxu0 0.0
    %2590 = vmatpush1.msra.mxu0 0.0
    %2591 = vmatprep.subr.mxu0 0.0
    %2592 = vmatpush1.msra.mxu0 0.0
    %2593 = vmatprep.subr.mxu0 0.0
    %2594 = vmatpush1.msra.mxu0 0.0
    %2595 = vmatprep.subr.mxu0 0.0
    %2596 = vmatpush1.msra.mxu0 0.0
    %2597 = vmatprep.subr.mxu0 0.0
    %2598 = vmatpush1.msra.mxu0 0.0
    %2599 = vmatprep.subr.mxu0 0.0
    %2600 = vmatpush1.msra.mxu0 0.0
    %2601 = vmatprep.subr.mxu0 0.0
    %2602 = vmatpush1.msra.mxu0 0.0
    %2603 = vmatprep.subr.mxu0 0.0
    %2604 = vmatpush1.msra.mxu0 0.0
    %2605 = vmatprep.subr.mxu0 0.0
    %2606 = vmatpush1.msra.mxu0 0.0
    %2607 = vmatprep.subr.mxu0 0.0
    %2608 = vmatpush1.msra.mxu0 0.0
    %2609 = vmatprep.subr.mxu0 0.0
    %2610 = vmatpush1.msra.mxu0 0.0
    %2611 = vmatprep.subr.mxu0 0.0
    %2612 = vmatpush1.msra.mxu0 0.0
    %2613 = vmatprep.subr.mxu0 0.0
    %2614 = vmatpush1.msra.mxu0 0.0
    %2615 = vmatprep.subr.mxu0 0.0
    %2616 = vmatpush1.msra.mxu0 0.0
    %2617 = vmatprep.subr.mxu0 0.0
    %2618 = vmatpush1.msra.mxu0 0.0
    %2619 = vmatprep.subr.mxu0 0.0
    %2620 = vmatpush1.msra.mxu0 0.0
    %2621 = vmatprep.subr.mxu0 0.0
    %2622 = vmatpush1.msra.mxu0 0.0
    %2623 = vmatprep.subr.mxu0 0.0
    %2624 = vmatpush1.msra.mxu0 0.0
    %2625 = vmatprep.subr.mxu0 0.0
    %2626 = vmatpush1.msra.mxu0 0.0
    %2627 = vmatprep.subr.mxu0 0.0
    %2628 = vmatpush1.msra.mxu0 0.0
    %2629 = vmatprep.subr.mxu0 0.0
    %2630 = vmatpush1.msra.mxu0 0.0
    %2631 = vmatprep.subr.mxu0 0.0
    %2632 = vmatpush1.msra.mxu0 0.0
    %2633 = vmatprep.subr.mxu0 0.0
    %2634 = vmatpush1.msra.mxu0 0.0
    %2635 = vmatprep.subr.mxu0 0.0
    %2636 = vmatpush1.msra.mxu0 0.0
    %2637 = vmatprep.subr.mxu0 0.0
    %2638 = vmatpush1.msra.mxu0 0.0
    %2639 = vmatprep.subr.mxu0 0.0
    %2640 = vmatpush1.msra.mxu0 0.0
    %2641 = vmatprep.subr.mxu0 0.0
    %2642 = vmatpush1.msra.mxu0 0.0
    %2643 = vmatprep.subr.mxu0 0.0
    %2644 = vmatpush1.msra.mxu0 0.0
    %2645 = vmatprep.subr.mxu0 0.0
    %2646 = vmatpush1.msra.mxu0 0.0
    %2647 = vmatprep.subr.mxu0 0.0
    %2648 = vmatpush1.msra.mxu0 0.0
    %2649 = vmatprep.subr.mxu0 0.0
    %2650 = vmatpush1.msra.mxu0 0.0
    %2651 = vmatprep.mubr.f32.mxu0 0.0
    %2652 = vmatmul.mubr.f32.gmra.mrb[0].mxu0 %v2582
    %v2653 = vpop.f32.mrb[0].mxu0
    %v2654 = vadd.f32 0.0, %v2653
    %v2655 = vpop.f32.mrb[0].mxu0
    %2656 = vmatprep.mubr.f32.mxu0 0.0
    %2657 = vmatmul.mubr.f32.gmra.mrb[0].mxu0 %v2585
    %v2658 = vpop.f32.mrb[0].mxu0
    %v2659 = vadd.f32 0.0, %v2658
    %v2660 = vpop.f32.mrb[0].mxu0
    %2661 = vdwg.mxu0
    %v2662 = vadd.f32 %v2378, %v2654
    %v2663 = vadd.f32 %v2379, %v2659
    %2664 = vrot.lane.b32.xlu0 %v1719, 104
    %v2665 = vpop.permute.xlu0 %2664
    %2666 = vrot.lane.b32.xlu0 %v1724, 104
    %v2667 = vpop.permute.xlu0 %2666
    %2668 = vrot.lane.b32.xlu0 %v1719, 72
    %v2669 = vpop.permute.xlu0 %2668
    %2670 = vrot.lane.b32.xlu0 %v1724, 72
    %v2671 = vpop.permute.xlu0 %2670
    %v2672 = vsel %vm233, %v2665, 0
    %v2674 = vsel %vm233, %v2667, 0
    %v2676 = vsel %vm233, %v2669, 0
    %v2678 = vsel %vm233, %v2671, 0
    %2680 = vmatprep.subr.mxu0 0.0
    %2681 = vmatpush1.xpose.msra.mxu0 %v2676
    %2682 = vmatprep.subr.mxu0 0.0
    %2683 = vmatpush1.xpose.msra.mxu0 %v2678
    %2684 = vmatprep.subr.mxu0 0.0
    %2685 = vmatpush1.xpose.msra.mxu0 0.0
    %2686 = vmatprep.subr.mxu0 0.0
    %2687 = vmatpush1.xpose.msra.mxu0 0.0
    %2688 = vmatprep.subr.mxu0 0.0
    %2689 = vmatpush1.xpose.msra.mxu0 0.0
    %2690 = vmatprep.subr.mxu0 0.0
    %2691 = vmatpush1.xpose.msra.mxu0 0.0
    %2692 = vmatprep.subr.mxu0 0.0
    %2693 = vmatpush1.xpose.msra.mxu0 0.0
    %2694 = vmatprep.subr.mxu0 0.0
    %2695 = vmatpush1.xpose.msra.mxu0 0.0
    %2696 = vmatprep.subr.mxu0 0.0
    %2697 = vmatpush1.xpose.msra.mxu0 0.0
    %2698 = vmatprep.subr.mxu0 0.0
    %2699 = vmatpush1.xpose.msra.mxu0 0.0
    %2700 = vmatprep.subr.mxu0 0.0
    %2701 = vmatpush1.xpose.msra.mxu0 0.0
    %2702 = vmatprep.subr.mxu0 0.0
    %2703 = vmatpush1.xpose.msra.mxu0 0.0
    %2704 = vmatprep.subr.mxu0 0.0
    %2705 = vmatpush1.xpose.msra.mxu0 0.0
    %2706 = vmatprep.subr.mxu0 0.0
    %2707 = vmatpush1.xpose.msra.mxu0 0.0
    %2708 = vmatprep.subr.mxu0 0.0
    %2709 = vmatpush1.xpose.msra.mxu0 0.0
    %2710 = vmatprep.subr.mxu0 0.0
    %2711 = vmatpush1.xpose.msra.mxu0 0.0
    %2712 = vmatprep.subr.mxu0 0.0
    %2713 = vmatpush1.xpose.msra.mxu0 0.0
    %2714 = vmatprep.subr.mxu0 0.0
    %2715 = vmatpush1.xpose.msra.mxu0 0.0
    %2716 = vmatprep.subr.mxu0 0.0
    %2717 = vmatpush1.xpose.msra.mxu0 0.0
    %2718 = vmatprep.subr.mxu0 0.0
    %2719 = vmatpush1.xpose.msra.mxu0 0.0
    %2720 = vmatprep.subr.mxu0 0.0
    %2721 = vmatpush1.xpose.msra.mxu0 0.0
    %2722 = vmatprep.subr.mxu0 0.0
    %2723 = vmatpush1.xpose.msra.mxu0 0.0
    %2724 = vmatprep.subr.mxu0 0.0
    %2725 = vmatpush1.xpose.msra.mxu0 0.0
    %2726 = vmatprep.subr.mxu0 0.0
    %2727 = vmatpush1.xpose.msra.mxu0 0.0
    %2728 = vmatprep.subr.mxu0 0.0
    %2729 = vmatpush1.xpose.msra.mxu0 0.0
    %2730 = vmatprep.subr.mxu0 0.0
    %2731 = vmatpush1.xpose.msra.mxu0 0.0
    %2732 = vmatprep.subr.mxu0 0.0
    %2733 = vmatpush1.xpose.msra.mxu0 0.0
    %2734 = vmatprep.subr.mxu0 0.0
    %2735 = vmatpush1.xpose.msra.mxu0 0.0
    %2736 = vmatprep.subr.mxu0 0.0
    %2737 = vmatpush1.xpose.msra.mxu0 0.0
    %2738 = vmatprep.subr.mxu0 0.0
    %2739 = vmatpush1.xpose.msra.mxu0 0.0
    %2740 = vmatprep.subr.mxu0 0.0
    %2741 = vmatpush1.xpose.msra.mxu0 0.0
    %2742 = vmatprep.subr.mxu0 0.0
    %2743 = vmatpush1.xpose.msra.mxu0 0.0
    %2744 = vmatprep.mubr.f32.mxu0 0.0
    %2745 = vmatmul.mubr.f32.gmra.mrb[0].mxu0 %v2672
    %v2746 = vpop.f32.mrb[0].mxu0
    %v2747 = vadd.f32 %v35, %v2746
    %v2748 = vpop.f32.mrb[0].mxu0
    %2749 = vmatprep.mubr.f32.mxu0 0.0
    %2750 = vmatmul.mubr.f32.gmra.mrb[0].mxu0 %v2674
    %v2751 = vpop.f32.mrb[0].mxu0
    %v2752 = vadd.f32 %v36, %v2751
    %v2753 = vpop.f32.mrb[0].mxu0
    %2754 = vdwg.mxu0
    %v2755 = vsel %vm317, %v2747, -inf
    %2756 = vmax.xlane.f32.xlu0 %v2755
    %v2757 = vpop.xlane.xlu0 %2756
    %v2758 = vsel %vm317, %v2752, -inf
    %2759 = vmax.xlane.f32.xlu0 %v2758
    %v2760 = vpop.xlane.xlu0 %2759
    %v2761 = vsub.f32 %v2747, %v2757
    %v2762 = vsub.f32 %v2752, %v2760
    %v2763 = vmul.f32 %v2761, 1.442695
    %v2764 = vpow.pop %v2763
    %v2765 = vmul.f32 %v2762, 1.442695
    %v2766 = vpow.pop %v2765
    %v2767 = vsel %vm317, %v2764, 0.0
    %2768 = vadd.xlane.f32.xlu0 %v2767
    %v2769 = vpop.xlane.xlu0 %2768
    %v2770 = vsel %vm317, %v2766, 0.0
    %2771 = vadd.xlane.f32.xlu0 %v2770
    %v2772 = vpop.xlane.xlu0 %2771
    %v2773 = vrcp.pop %v2769
    %v2774 = vmul.f32 %v2764, %v2773
    %v2775 = vrcp.pop %v2772
    %v2776 = vmul.f32 %v2766, %v2775
    %2777 = vrot.lane.b32.xlu0 %v1808, 104
    %v2778 = vpop.permute.xlu0 %2777
    %2779 = vrot.lane.b32.xlu0 %v1813, 104
    %v2780 = vpop.permute.xlu0 %2779
    %v2784 = vsel %vm317, %v2774, 0
    %v2787 = vsel %vm317, %v2776, 0
    %2789 = vmatprep.subr.mxu0 0.0
    %2790 = vmatpush1.msra.mxu0 %v2778
    %2791 = vmatprep.subr.mxu0 0.0
    %2792 = vmatpush1.msra.mxu0 %v2780
    %2793 = vmatprep.subr.mxu0 0.0
    %2794 = vmatpush1.msra.mxu0 0.0
    %2795 = vmatprep.subr.mxu0 0.0
    %2796 = vmatpush1.msra.mxu0 0.0
    %2797 = vmatprep.subr.mxu0 0.0
    %2798 = vmatpush1.msra.mxu0 0.0
    %2799 = vmatprep.subr.mxu0 0.0
    %2800 = vmatpush1.msra.mxu0 0.0
    %2801 = vmatprep.subr.mxu0 0.0
    %2802 = vmatpush1.msra.mxu0 0.0
    %2803 = vmatprep.subr.mxu0 0.0
    %2804 = vmatpush1.msra.mxu0 0.0
    %2805 = vmatprep.subr.mxu0 0.0
    %2806 = vmatpush1.msra.mxu0 0.0
    %2807 = vmatprep.subr.mxu0 0.0
    %2808 = vmatpush1.msra.mxu0 0.0
    %2809 = vmatprep.subr.mxu0 0.0
    %2810 = vmatpush1.msra.mxu0 0.0
    %2811 = vmatprep.subr.mxu0 0.0
    %2812 = vmatpush1.msra.mxu0 0.0
    %2813 = vmatprep.subr.mxu0 0.0
    %2814 = vmatpush1.msra.mxu0 0.0
    %2815 = vmatprep.subr.mxu0 0.0
    %2816 = vmatpush1.msra.mxu0 0.0
    %2817 = vmatprep.subr.mxu0 0.0
    %2818 = vmatpush1.msra.mxu0 0.0
    %2819 = vmatprep.subr.mxu0 0.0
    %2820 = vmatpush1.msra.mxu0 0.0
    %2821 = vmatprep.subr.mxu0 0.0
    %2822 = vmatpush1.msra.mxu0 0.0
    %2823 = vmatprep.subr.mxu0 0.0
    %2824 = vmatpush1.msra.mxu0 0.0
    %2825 = vmatprep.subr.mxu0 0.0
    %2826 = vmatpush1.msra.mxu0 0.0
    %2827 = vmatprep.subr.mxu0 0.0
    %2828 = vmatpush1.msra.mxu0 0.0
    %2829 = vmatprep.subr.mxu0 0.0
    %2830 = vmatpush1.msra.mxu0 0.0
    %2831 = vmatprep.subr.mxu0 0.0
    %2832 = vmatpush1.msra.mxu0 0.0
    %2833 = vmatprep.subr.mxu0 0.0
    %2834 = vmatpush1.msra.mxu0 0.0
    %2835 = vmatprep.subr.mxu0 0.0
    %2836 = vmatpush1.msra.mxu0 0.0
    %2837 = vmatprep.subr.mxu0 0.0
    %2838 = vmatpush1.msra.mxu0 0.0
    %2839 = vmatprep.subr.mxu0 0.0
    %2840 = vmatpush1.msra.mxu0 0.0
    %2841 = vmatprep.subr.mxu0 0.0
    %2842 = vmatpush1.msra.mxu0 0.0
    %2843 = vmatprep.subr.mxu0 0.0
    %2844 = vmatpush1.msra.mxu0 0.0
    %2845 = vmatprep.subr.mxu0 0.0
    %2846 = vmatpush1.msra.mxu0 0.0
    %2847 = vmatprep.subr.mxu0 0.0
    %2848 = vmatpush1.msra.mxu0 0.0
    %2849 = vmatprep.subr.mxu0 0.0
    %2850 = vmatpush1.msra.mxu0 0.0
    %2851 = vmatprep.subr.mxu0 0.0
    %2852 = vmatpush1.msra.mxu0 0.0
    %2853 = vmatprep.mubr.f32.mxu0 0.0
    %2854 = vmatmul.mubr.f32.gmra.mrb[0].mxu0 %v2784
    %v2855 = vpop.f32.mrb[0].mxu0
    %v2856 = vadd.f32 0.0, %v2855
    %v2857 = vpop.f32.mrb[0].mxu0
    %2858 = vmatprep.mubr.f32.mxu0 0.0
    %2859 = vmatmul.mubr.f32.gmra.mrb[0].mxu0 %v2787
    %v2860 = vpop.f32.mrb[0].mxu0
    %v2861 = vadd.f32 0.0, %v2860
    %v2862 = vpop.f32.mrb[0].mxu0
    %2863 = vdwg.mxu0
    %v2864 = vld [vmem:[%s3 + $0xb8] sm:$0xff]
    %v2866 = vsel %vm233, %v2856, 0
    %v2869 = vsel %vm233, %v2861, 0
    %2871 = vmatprep.subr.mxu0 0.0
    %2872 = vmatpush1.msra.mxu0 %v2864
    %2873 = vmatprep.subr.mxu0 0.0
    %2874 = vmatpush1.msra.mxu0 0.0
    %2875 = vmatprep.subr.mxu0 0.0
    %2876 = vmatpush1.msra.mxu0 0.0
    %2877 = vmatprep.subr.mxu0 0.0
    %2878 = vmatpush1.msra.mxu0 0.0
    %2879 = vmatprep.subr.mxu0 0.0
    %2880 = vmatpush1.msra.mxu0 0.0
    %2881 = vmatprep.subr.mxu0 0.0
    %2882 = vmatpush1.msra.mxu0 0.0
    %2883 = vmatprep.subr.mxu0 0.0
    %2884 = vmatpush1.msra.mxu0 0.0
    %2885 = vmatprep.subr.mxu0 0.0
    %2886 = vmatpush1.msra.mxu0 0.0
    %2887 = vmatprep.subr.mxu0 0.0
    %2888 = vmatpush1.msra.mxu0 0.0
    %2889 = vmatprep.subr.mxu0 0.0
    %2890 = vmatpush1.msra.mxu0 0.0
    %2891 = vmatprep.subr.mxu0 0.0
    %2892 = vmatpush1.msra.mxu0 0.0
    %2893 = vmatprep.subr.mxu0 0.0
    %2894 = vmatpush1.msra.mxu0 0.0
    %2895 = vmatprep.subr.mxu0 0.0
    %2896 = vmatpush1.msra.mxu0 0.0
    %2897 = vmatprep.subr.mxu0 0.0
    %2898 = vmatpush1.msra.mxu0 0.0
    %2899 = vmatprep.subr.mxu0 0.0
    %2900 = vmatpush1.msra.mxu0 0.0
    %2901 = vmatprep.subr.mxu0 0.0
    %2902 = vmatpush1.msra.mxu0 0.0
    %2903 = vmatprep.subr.mxu0 0.0
    %2904 = vmatpush1.msra.mxu0 0.0
    %2905 = vmatprep.subr.mxu0 0.0
    %2906 = vmatpush1.msra.mxu0 0.0
    %2907 = vmatprep.subr.mxu0 0.0
    %2908 = vmatpush1.msra.mxu0 0.0
    %2909 = vmatprep.subr.mxu0 0.0
    %2910 = vmatpush1.msra.mxu0 0.0
    %2911 = vmatprep.subr.mxu0 0.0
    %2912 = vmatpush1.msra.mxu0 0.0
    %2913 = vmatprep.subr.mxu0 0.0
    %2914 = vmatpush1.msra.mxu0 0.0
    %2915 = vmatprep.subr.mxu0 0.0
    %2916 = vmatpush1.msra.mxu0 0.0
    %2917 = vmatprep.subr.mxu0 0.0
    %2918 = vmatpush1.msra.mxu0 0.0
    %2919 = vmatprep.subr.mxu0 0.0
    %2920 = vmatpush1.msra.mxu0 0.0
    %2921 = vmatprep.subr.mxu0 0.0
    %2922 = vmatpush1.msra.mxu0 0.0
    %2923 = vmatprep.subr.mxu0 0.0
    %2924 = vmatpush1.msra.mxu0 0.0
    %2925 = vmatprep.subr.mxu0 0.0
    %2926 = vmatpush1.msra.mxu0 0.0
    %2927 = vmatprep.subr.mxu0 0.0
    %2928 = vmatpush1.msra.mxu0 0.0
    %2929 = vmatprep.subr.mxu0 0.0
    %2930 = vmatpush1.msra.mxu0 0.0
    %2931 = vmatprep.subr.mxu0 0.0
    %2932 = vmatpush1.msra.mxu0 0.0
    %2933 = vmatprep.subr.mxu0 0.0
    %2934 = vmatpush1.msra.mxu0 0.0
    %2935 = vmatprep.mubr.f32.mxu0 0.0
    %2936 = vmatmul.mubr.f32.gmra.mrb[0].mxu0 %v2866
    %v2937 = vpop.f32.mrb[0].mxu0
    %v2938 = vadd.f32 0.0, %v2937
    %v2939 = vpop.f32.mrb[0].mxu0
    %2940 = vmatprep.mubr.f32.mxu0 0.0
    %2941 = vmatmul.mubr.f32.gmra.mrb[0].mxu0 %v2869
    %v2942 = vpop.f32.mrb[0].mxu0
    %v2943 = vadd.f32 0.0, %v2942
    %v2944 = vpop.f32.mrb[0].mxu0
    %2945 = vdwg.mxu0
    %v2946 = vadd.f32 %v2662, %v2938
    %v2947 = vadd.f32 %v2663, %v2943
    %v2948 = vadd.f32 %v1625, %v2946
    %v2949 = vadd.f32 %v1626, %v2947
    %v2950 = vsel %vm56, %v2948, 0.0
    %2951 = vadd.xlane.f32.xlu0 %v2950
    %v2952 = vpop.xlane.xlu0 %2951
    %v2953 = vsel %vm56, %v2949, 0.0
    %2954 = vadd.xlane.f32.xlu0 %v2953
    %v2955 = vpop.xlane.xlu0 %2954
    %v2956 = vmul.f32 %v2952, %v1369
    %v2957 = vmul.f32 %v2955, %v1369
    %v2958 = vsub.f32 %v2948, %v2956
    %v2959 = vsub.f32 %v2949, %v2957
    %v2960 = vmul.f32 %v2958, %v2958
    %v2961 = vmul.f32 %v2959, %v2959
    %v2962 = vsel %vm56, %v2960, 0.0
    %2963 = vadd.xlane.f32.xlu0 %v2962
    %v2964 = vpop.xlane.xlu0 %2963
    %v2965 = vsel %vm56, %v2961, 0.0
    %2966 = vadd.xlane.f32.xlu0 %v2965
    %v2967 = vpop.xlane.xlu0 %2966
    %v2968 = vmul.f32 %v2964, %v1369
    %v2969 = vmul.f32 %v2967, %v1369
    %v2970 = vadd.f32 %v2968, 1e-05
    %v2971 = vadd.f32 %v2969, 1e-05
    %v2972 = vrsqrt.pop %v2970
    %v2973 = vrsqrt.pop %v2971
    %v2974 = vmul.f32 %v2958, %v2972
    %v2975 = vmul.f32 %v2959, %v2973
    %v2976 = vlaneseq
    %v2977 = vshrl.u32 %v2976, 7
    %v2978 = vsub.s32 0, %v2977
    %v2979 = vrot.slane %v1632, %v2978
    %v2980 = vmul.f32 %v2974, %v2979
    %v2981 = vmul.f32 %v2975, %v2979
    %v2982 = vlaneseq
    %v2983 = vshrl.u32 %v2982, 7
    %v2984 = vsub.s32 0, %v2983
    %v2985 = vrot.slane %v1633, %v2984
    %v2986 = vadd.f32 %v2980, %v2985
    %v2987 = vadd.f32 %v2981, %v2985
    %v2988 = vld [vmem:[%s2 + $0x60] sm:$0xff]
    %v2989 = vld [vmem:[%s2 + $0x68] sm:$0xff]
    %v2990 = vld [vmem:[%s2 + $0x70] sm:$0xff]
    %v2991 = vld [vmem:[%s2 + $0x78] sm:$0xff]
    %v2992 = vld [vmem:[%s3 + $0xc0] sm:$0xff]
    %v2993 = vld [vmem:[%s3 + $0xc8] sm:$0xff]
    %v2994 = vld [vmem:[%s3 + $0xd0] sm:$0xff]
    %v2995 = vld [vmem:[%s3 + $0xd8] sm:$0xff]
    %v2996 = vld [vmem:[%s3 + $0xe0] sm:$0xff]
    %v2997 = vld [vmem:[%s3 + $0xe8] sm:$0xff]
    %v2998 = vld [vmem:[%s3 + $0xf0] sm:$0xff]
    %v2999 = vld [vmem:[%s3 + $0xf8] sm:$0xff]
    %v3000 = vlaneseq
    %v3001 = vshrl.u32 %v3000, 7
    %v3002 = vsub.s32 0, %v3001
    %v3003 = vrot.slane %v1628, %v3002
    %v3005 = vsel %vm56, %v2986, 0
    %v3008 = vsel %vm56, %v2987, 0
    %3010 = vmatprep.subr.mxu0 0.0
    %3011 = vmatpush1.msra.mxu0 %v2988
    %3012 = vmatprep.subr.mxu0 0.0
    %3013 = vmatpush1.msra.mxu0 %v2989
    %3014 = vmatprep.subr.mxu0 0.0
    %3015 = vmatpush1.msra.mxu0 %v2990
    %3016 = vmatprep.subr.mxu0 0.0
    %3017 = vmatpush1.msra.mxu0 %v2991
    %3018 = vmatprep.subr.mxu0 0.0
    %3019 = vmatpush1.msra.mxu0 0.0
    %3020 = vmatprep.subr.mxu0 0.0
    %3021 = vmatpush1.msra.mxu0 0.0
    %3022 = vmatprep.subr.mxu0 0.0
    %3023 = vmatpush1.msra.mxu0 0.0
    %3024 = vmatprep.subr.mxu0 0.0
    %3025 = vmatpush1.msra.mxu0 0.0
    %3026 = vmatprep.subr.mxu0 0.0
    %3027 = vmatpush1.msra.mxu0 0.0
    %3028 = vmatprep.subr.mxu0 0.0
    %3029 = vmatpush1.msra.mxu0 0.0
    %3030 = vmatprep.subr.mxu0 0.0
    %3031 = vmatpush1.msra.mxu0 0.0
    %3032 = vmatprep.subr.mxu0 0.0
    %3033 = vmatpush1.msra.mxu0 0.0
    %3034 = vmatprep.subr.mxu0 0.0
    %3035 = vmatpush1.msra.mxu0 0.0
    %3036 = vmatprep.subr.mxu0 0.0
    %3037 = vmatpush1.msra.mxu0 0.0
    %3038 = vmatprep.subr.mxu0 0.0
    %3039 = vmatpush1.msra.mxu0 0.0
    %3040 = vmatprep.subr.mxu0 0.0
    %3041 = vmatpush1.msra.mxu0 0.0
    %3042 = vmatprep.subr.mxu0 0.0
    %3043 = vmatpush1.msra.mxu0 0.0
    %3044 = vmatprep.subr.mxu0 0.0
    %3045 = vmatpush1.msra.mxu0 0.0
    %3046 = vmatprep.subr.mxu0 0.0
    %3047 = vmatpush1.msra.mxu0 0.0
    %3048 = vmatprep.subr.mxu0 0.0
    %3049 = vmatpush1.msra.mxu0 0.0
    %3050 = vmatprep.subr.mxu0 0.0
    %3051 = vmatpush1.msra.mxu0 0.0
    %3052 = vmatprep.subr.mxu0 0.0
    %3053 = vmatpush1.msra.mxu0 0.0
    %3054 = vmatprep.subr.mxu0 0.0
    %3055 = vmatpush1.msra.mxu0 0.0
    %3056 = vmatprep.subr.mxu0 0.0
    %3057 = vmatpush1.msra.mxu0 0.0
    %3058 = vmatprep.subr.mxu0 0.0
    %3059 = vmatpush1.msra.mxu0 0.0
    %3060 = vmatprep.subr.mxu0 0.0
    %3061 = vmatpush1.msra.mxu0 0.0
    %3062 = vmatprep.subr.mxu0 0.0
    %3063 = vmatpush1.msra.mxu0 0.0
    %3064 = vmatprep.subr.mxu0 0.0
    %3065 = vmatpush1.msra.mxu0 0.0
    %3066 = vmatprep.subr.mxu0 0.0
    %3067 = vmatpush1.msra.mxu0 0.0
    %3068 = vmatprep.subr.mxu0 0.0
    %3069 = vmatpush1.msra.mxu0 0.0
    %3070 = vmatprep.subr.mxu0 0.0
    %3071 = vmatpush1.msra.mxu0 0.0
    %3072 = vmatprep.subr.mxu0 0.0
    %3073 = vmatpush1.msra.mxu0 0.0
    %3074 = vmatprep.mubr.f32.mxu0 0.0
    %3075 = vmatmul.mubr.f32.gmra.mrb[0].mxu0 %v3005
    %v3076 = vpop.f32.mrb[0].mxu0
    %v3077 = vadd.f32 %v3003, %v3076
    %v3078 = vpop.f32.mrb[0].mxu0
    %3079 = vmatprep.mubr.f32.mxu0 0.0
    %3080 = vmatmul.mubr.f32.gmra.mrb[0].mxu0 %v3008
    %v3081 = vpop.f32.mrb[0].mxu0
    %v3082 = vadd.f32 %v3003, %v3081
    %v3083 = vpop.f32.mrb[0].mxu0
    %3084 = vdwg.mxu0
    %v3085 = vmax.f32 %v3077, 0.0
    %v3086 = vmax.f32 %v3082, 0.0
    %v3087 = vlaneseq
    %v3088 = vshrl.u32 %v3087, 7
    %v3089 = vsub.s32 0, %v3088
    %v3090 = vrot.slane %v1631, %v3089
    %v3092 = vsel %vm1505, %v3085, 0
    %v3095 = vsel %vm1505, %v3086, 0
    %3097 = vmatprep.subr.mxu0 0.0
    %3098 = vmatpush1.msra.mxu0 %v2992
    %3099 = vmatprep.subr.mxu0 0.0
    %3100 = vmatpush1.msra.mxu0 %v2993
    %3101 = vmatprep.subr.mxu0 0.0
    %3102 = vmatpush1.msra.mxu0 %v2994
    %3103 = vmatprep.subr.mxu0 0.0
    %3104 = vmatpush1.msra.mxu0 %v2995
    %3105 = vmatprep.subr.mxu0 0.0
    %3106 = vmatpush1.msra.mxu0 %v2996
    %3107 = vmatprep.subr.mxu0 0.0
    %3108 = vmatpush1.msra.mxu0 %v2997
    %3109 = vmatprep.subr.mxu0 0.0
    %3110 = vmatpush1.msra.mxu0 %v2998
    %3111 = vmatprep.subr.mxu0 0.0
    %3112 = vmatpush1.msra.mxu0 %v2999
    %3113 = vmatprep.subr.mxu0 0.0
    %3114 = vmatpush1.msra.mxu0 0.0
    %3115 = vmatprep.subr.mxu0 0.0
    %3116 = vmatpush1.msra.mxu0 0.0
    %3117 = vmatprep.subr.mxu0 0.0
    %3118 = vmatpush1.msra.mxu0 0.0
    %3119 = vmatprep.subr.mxu0 0.0
    %3120 = vmatpush1.msra.mxu0 0.0
    %3121 = vmatprep.subr.mxu0 0.0
    %3122 = vmatpush1.msra.mxu0 0.0
    %3123 = vmatprep.subr.mxu0 0.0
    %3124 = vmatpush1.msra.mxu0 0.0
    %3125 = vmatprep.subr.mxu0 0.0
    %3126 = vmatpush1.msra.mxu0 0.0
    %3127 = vmatprep.subr.mxu0 0.0
    %3128 = vmatpush1.msra.mxu0 0.0
    %3129 = vmatprep.subr.mxu0 0.0
    %3130 = vmatpush1.msra.mxu0 0.0
    %3131 = vmatprep.subr.mxu0 0.0
    %3132 = vmatpush1.msra.mxu0 0.0
    %3133 = vmatprep.subr.mxu0 0.0
    %3134 = vmatpush1.msra.mxu0 0.0
    %3135 = vmatprep.subr.mxu0 0.0
    %3136 = vmatpush1.msra.mxu0 0.0
    %3137 = vmatprep.subr.mxu0 0.0
    %3138 = vmatpush1.msra.mxu0 0.0
    %3139 = vmatprep.subr.mxu0 0.0
    %3140 = vmatpush1.msra.mxu0 0.0
    %3141 = vmatprep.subr.mxu0 0.0
    %3142 = vmatpush1.msra.mxu0 0.0
    %3143 = vmatprep.subr.mxu0 0.0
    %3144 = vmatpush1.msra.mxu0 0.0
    %3145 = vmatprep.subr.mxu0 0.0
    %3146 = vmatpush1.msra.mxu0 0.0
    %3147 = vmatprep.subr.mxu0 0.0
    %3148 = vmatpush1.msra.mxu0 0.0
    %3149 = vmatprep.subr.mxu0 0.0
    %3150 = vmatpush1.msra.mxu0 0.0
    %3151 = vmatprep.subr.mxu0 0.0
    %3152 = vmatpush1.msra.mxu0 0.0
    %3153 = vmatprep.subr.mxu0 0.0
    %3154 = vmatpush1.msra.mxu0 0.0
    %3155 = vmatprep.subr.mxu0 0.0
    %3156 = vmatpush1.msra.mxu0 0.0
    %3157 = vmatprep.subr.mxu0 0.0
    %3158 = vmatpush1.msra.mxu0 0.0
    %3159 = vmatprep.subr.mxu0 0.0
    %3160 = vmatpush1.msra.mxu0 0.0
    %3161 = vmatprep.mubr.f32.mxu0 0.0
    %3162 = vmatmul.mubr.f32.gmra.mrb[0].mxu0 %v3092
    %v3163 = vpop.f32.mrb[0].mxu0
    %v3164 = vadd.f32 %v3090, %v3163
    %v3165 = vpop.f32.mrb[0].mxu0
    %3166 = vmatprep.mubr.f32.mxu0 0.0
    %3167 = vmatmul.mubr.f32.gmra.mrb[0].mxu0 %v3095
    %v3168 = vpop.f32.mrb[0].mxu0
    %v3169 = vadd.f32 %v3090, %v3168
    %v3170 = vpop.f32.mrb[0].mxu0
    %3171 = vdwg.mxu0
    %v3172 = vadd.f32 %v2986, %v3164
    %v3173 = vadd.f32 %v2987, %v3169
    %v3174 = vsel %vm56, %v3172, 0.0
    %3175 = vadd.xlane.f32.xlu0 %v3174
    %v3176 = vpop.xlane.xlu0 %3175
    %v3177 = vsel %vm56, %v3173, 0.0
    %3178 = vadd.xlane.f32.xlu0 %v3177
    %v3179 = vpop.xlane.xlu0 %3178
    %v3180 = vmul.f32 %v3176, %v1369
    %v3181 = vmul.f32 %v3179, %v1369
    %v3182 = vsub.f32 %v3172, %v3180
    %v3183 = vsub.f32 %v3173, %v3181
    %v3184 = vmul.f32 %v3182, %v3182
    %v3185 = vmul.f32 %v3183, %v3183
    %v3186 = vsel %vm56, %v3184, 0.0
    %3187 = vadd.xlane.f32.xlu0 %v3186
    %v3188 = vpop.xlane.xlu0 %3187
    %v3189 = vsel %vm56, %v3185, 0.0
    %3190 = vadd.xlane.f32.xlu0 %v3189
    %v3191 = vpop.xlane.xlu0 %3190
    %v3192 = vmul.f32 %v3188, %v1369
    %v3193 = vmul.f32 %v3191, %v1369
    %v3194 = vadd.f32 %v3192, 1e-05
    %v3195 = vadd.f32 %v3193, 1e-05
    %v3196 = vrsqrt.pop %v3194
    %v3197 = vrsqrt.pop %v3195
    %v3198 = vmul.f32 %v3182, %v3196
    %v3199 = vmul.f32 %v3183, %v3197
    %v3200 = vlaneseq
    %v3201 = vshrl.u32 %v3200, 7
    %v3202 = vsub.s32 0, %v3201
    %v3203 = vrot.slane %v1634, %v3202
    %v3204 = vmul.f32 %v3198, %v3203
    %v3205 = vmul.f32 %v3199, %v3203
    %v3206 = vlaneseq
    %v3207 = vshrl.u32 %v3206, 7
    %v3208 = vsub.s32 0, %v3207
    %v3209 = vrot.slane %v1635, %v3208
    %v3210 = vadd.f32 %v3204, %v3209
    %v3211 = vadd.f32 %v3205, %v3209
    %3212 = vst.msk [vmem:[#allocation2] sm:$0xff] %vm56, %v3210
    %3213 = vst.msk [vmem:[#allocation2 + $0x8] sm:$0xff] %vm56, %v3211
    // Predicated region
    $region22: #{transformer_encoder.1} parent=1 // pred_check
      _
    $region23: #{transformer_encoder.1} parent=1 // pred_check_branch
      %3215 = sbr.rel (0) target = $region25
    $region24: #{transformer_encoder.1} parent=1 // pred_region
      %s3217 = ssub.s32 256, 256
      %3218 = vsyncadd [#allocation3], %s3217
      %s3219 = sshll.u32 [#allocation2], 4
      %s3220 = int_to_ptr.vmem [resolvable:$true] %s3219
      %3225 = dma.vmem_to_hbm [thread:$0]  %s3220, 256, %s5, [#allocation3], 128, 128, 8
    $region25: #{transformer_encoder.1} parent=1 // pred_fallthru
      _
    // Predicated region
    $region26: #{transformer_encoder.1} parent=1 // pred_check
      _
    $region27: #{transformer_encoder.1} parent=1 // pred_check_branch
      %3227 = sbr.rel (0) target = $region29
    $region28: #{transformer_encoder.1} parent=1 // pred_region
      %3228 = dma.done [#allocation3], 256
    $region29: #{transformer_encoder.1} parent=1 // pred_fallthru
      _
    %3229 = vsyncpa [#allocation3], 1

</llo_original>
